<compile_context>
chip_gen: v7x
topology: tpu7x:2x2x1
jax: 0.10.0
libtpu: 0.0.40
codegen_flags: <defaults>
</compile_context>

<pallas_src>
import functools

import numpy as np
import jax
import jax.numpy as jnp
from jax import lax
from jax.experimental import pallas as pl
from jax.experimental.pallas import tpu as pltpu

_EPS = 1e-5   # BatchNorm2d / InstanceNorm2d default eps
_K = 5        # kernel size of conv_lr16x / conv_lr8x


# ----------------------------------------------------------------------------
# Fused Pallas kernel: SE -> up2x -> conv+IBN+ReLU -> up2x -> conv+IBN+ReLU
# ----------------------------------------------------------------------------
def _lr_branch_kernel(x_ref,
                      segs0_ref, sege0_ref, sew1_ref, sew2_ref,
                      uh1_ref, kw1_ref,
                      mask16_ref, g16_ref, aff16_ref, segs16_ref, sege16_ref,
                      pool16_ref, tile16_ref,
                      uh2_ref, kw2_ref,
                      mask8_ref, g8_ref, aff8_ref, segs8_ref, sege8_ref,
                      pool8_ref, tile8_ref,
                      o_ref):
    """Whole LR branch for one block of NB samples; intermediates stay on-chip.

    Activation layout everywhere: rows = (sample-in-block, H), lanes = W*C with
    lane index = w*C + c.  Heavy spatial matmuls run in bf16 on the MXU with
    f32 accumulation; per-sample statistics stay in f32.
    """
    f32 = jnp.float32
    bf16 = jnp.bfloat16
    dot = functools.partial(jnp.dot, preferred_element_type=f32)

    def conv_ibn_relu(a, mask_ref, g_ref, aff_ref, segs_ref, sege_ref,
                      pool_ref, tile_ref):
        k = mask_ref.shape[0]
        rows = a.shape[0]
        wc_out = g_ref.shape[1]
        c_out = tile_ref.shape[0] // 2
        # --- 5x5 conv row halo: zero-padded sublane slices (no per-tap MXU
        #     matmuls) + per-tap sample masks so taps never leak across the
        #     packed-batch boundary; lane-aligned im2col concat; ONE bf16
        #     matmul of contraction depth K*W*Cin. ---
        a_bf = a.astype(bf16)
        zpad = jnp.zeros((k // 2, a_bf.shape[1]), bf16)
        a_pad = jnp.concatenate([zpad, a_bf, zpad], axis=0)
        taps = [a_pad[i:i + rows, :] * mask_ref[i] for i in range(k)]
        patches = jnp.concatenate(taps, axis=1)                      # (rows, K*W*Cin)
        y = dot(patches, g_ref[...]) + aff_ref[0:1, :]               # conv + bias (f32 acc)
        # --- IBNorm: BN half = folded eval-mode affine (in aff); IN half =
        #     per-sample spatial stats in f32 via tiny factored pool/tile
        #     matmuls (no dense (W*C, W*C) matrices). ---
        ys = jnp.concatenate([y, y * y], axis=1)                     # (rows, 2*W*Cout)
        st_c = dot(dot(segs_ref[...], ys), pool_ref[...])            # (NB, 2*Cout) = [E[x] | E[x^2]]
        mean_c = st_c[:, :c_out]
        var_c = jnp.maximum(st_c[:, c_out:] - mean_c * mean_c, 0.0)  # clamp one-pass variance
        inv_c = lax.rsqrt(var_c + _EPS)
        inst = jnp.concatenate([inv_c, mean_c * inv_c], axis=1)      # (NB, 2*Cout)
        inst_t = dot(inst, tile_ref[...])                            # (NB, 2*W*Cout), lane-tiled
        scale = aff_ref[1:2, :] + aff_ref[3:4, :] * inst_t[:, :wc_out]
        shift = aff_ref[2:3, :] - aff_ref[3:4, :] * inst_t[:, wc_out:]
        ss = dot(sege_ref[...], jnp.concatenate([scale, shift], axis=1))   # expand to rows
        return jnp.maximum(y * ss[:, :wc_out] + ss[:, wc_out:], 0.0)       # ReLU

    x = x_ref[0].astype(f32)                                         # (NB*H0, W0*C4)

    # --- SEBlock: per-sample spatial mean folded into sew1, channel tiling
    #     folded into sew2; segment matmuls pool / broadcast per sample. ---
    pooled = dot(segs0_ref[...], x)                                  # (NB, W0*C4) row sums / sample
    h = jnp.maximum(dot(pooled, sew1_ref[...]), 0.0)                 # FC1 + ReLU
    gate = jax.nn.sigmoid(dot(h, sew2_ref[...]))                     # FC2 + sigmoid, lane-tiled
    x = x * dot(sege0_ref[...], gate)                                # broadcast gate back to rows

    # --- bilinear 2x upsample #1 (row matmul then lane matmul, bf16 MXU) ---
    x = dot(uh1_ref[...], x.astype(bf16))
    x = dot(x.astype(bf16), kw1_ref[...])                            # (NB*H1, W1*C4)
    # --- conv_lr16x (5x5, pad 2) + IBNorm + ReLU ---
    x = conv_ibn_relu(x, mask16_ref, g16_ref, aff16_ref,
                      segs16_ref, sege16_ref, pool16_ref, tile16_ref)  # (NB*H1, W1*C3)
    # --- bilinear 2x upsample #2 ---
    x = dot(uh2_ref[...], x.astype(bf16))
    x = dot(x.astype(bf16), kw2_ref[...])                            # (NB*H2, W2*C3)
    # --- conv_lr8x (5x5, pad 2) + IBNorm + ReLU ---
    x = conv_ibn_relu(x, mask8_ref, g8_ref, aff8_ref,
                      segs8_ref, sege8_ref, pool8_ref, tile8_ref)    # (NB*H2, W2*C2)

    # single lane-dense slab store per grid step (last dim = W_out*C_out lanes).
    o_ref[0] = x.astype(o_ref.dtype)


# ----------------------------------------------------------------------------
# Init-time, host-side parameter packing into matmul-friendly matrices
# ----------------------------------------------------------------------------
def _up_matrix(n):
    """(2n, n) interp matrix == F.interpolate(scale=2, bilinear, align_corners=False)."""
    u = np.zeros((2 * n, n), np.float32)
    for o in range(2 * n):
        src = max((o + 0.5) / 2.0 - 0.5, 0.0)      # PyTorch half-pixel, clamped at 0
        i0 = int(np.floor(src))
        frac = src - i0
        i1 = min(i0 + 1, n - 1)
        u[o, i0] += 1.0 - frac
        u[o, i1] += frac
    return u


def _tile_matrix(w, c):
    """(c, w*c): replicates a per-channel vector across the W positions of the lane axis."""
    return np.kron(np.ones((1, w), np.float32), np.eye(c, dtype=np.float32))


def _seg_sum(nb, h):
    """(nb, nb*h): per-sample row-sum for batch packed into the row dimension."""
    return np.kron(np.eye(nb, dtype=np.float32), np.ones((1, h), np.float32))


def _seg_expand(nb, h):
    """(nb*h, nb): broadcast a per-sample row back to that sample's H rows."""
    return np.kron(np.eye(nb, dtype=np.float32), np.ones((h, 1), np.float32))


def _halo_mask(nb, h, k=_K):
    """(k, nb*h, 1): 1 where the kh-shifted source row stays inside the same sample."""
    m = np.zeros((k, nb * h, 1), np.float32)
    p = k // 2
    for kh in range(k):
        for r in range(nb * h):
            src = r + kh - p
            if 0 <= src < nb * h and (src // h) == (r // h):
                m[kh, r, 0] = 1.0
    return m


def _pool_pair(w, c, hw):
    """(2*w*c, 2*c): block-diag per-channel spatial-mean (lane) pooling for [y | y^2]."""
    lp = _tile_matrix(w, c).T / float(hw)           # (w*c, c)
    z = np.zeros_like(lp)
    return np.block([[lp, z], [z, lp]]).astype(np.float32)


def _tile_pair(w, c):
    """(2*c, 2*w*c): block-diag lane tiling for the [inv | mean*inv] pair."""
    t = _tile_matrix(w, c)                          # (c, w*c)
    z = np.zeros_like(t)
    return np.block([[t, z], [z, t]]).astype(np.float32)


def _conv_lane_matrix(w_oihw, w_sp, k=_K):
    """(k*w_sp*cin, w_sp*cout): column + channel part of the KxK conv in (H, W*C) layout."""
    w_np = np.asarray(w_oihw, np.float32)          # (Cout, Cin, KH, KW) torch layout
    cout, cin = w_np.shape[0], w_np.shape[1]
    p = k // 2
    g = np.zeros((k, w_sp * cin, w_sp * cout), np.float32)
    for kh in range(k):
        for wo in range(w_sp):
            for kw in range(k):
                wi = wo + kw - p
                if 0 <= wi < w_sp:
                    g[kh, wi * cin:(wi + 1) * cin, wo * cout:(wo + 1) * cout] = \
                        w_np[:, :, kh, kw].T
    return g.reshape(k * w_sp * cin, w_sp * cout)


def _affine_rows(bias, bn, cbn, w_sp, cout):
    """(4, w_sp*cout): [tiled bias, masked folded-BN scale, masked folded-BN shift, inorm mask]."""
    scale = np.asarray(bn['gamma']) / np.sqrt(np.asarray(bn['rvar']) + _EPS)
    shift = np.asarray(bn['beta']) - np.asarray(bn['rmean']) * scale
    bn_scale = np.zeros((cout,), np.float32); bn_scale[:cbn] = scale
    bn_shift = np.zeros((cout,), np.float32); bn_shift[:cbn] = shift
    in_mask = np.zeros((cout,), np.float32); in_mask[cbn:] = 1.0
    t = _tile_matrix(w_sp, cout)
    rows = np.stack([np.asarray(bias, np.float32) @ t, bn_scale @ t, bn_shift @ t, in_mask @ t])
    return rows.astype(np.float32)


# bf16 for the heavy MXU operands; f32 for statistics / affine / segment matrices.
_BF16_KEYS = frozenset({'uh1', 'kw1', 'g16', 'mask16', 'uh2', 'kw2', 'g8', 'mask8'})

_WEIGHT_KEYS = ('seg_s0', 'seg_e0', 'se_w1', 'se_w2', 'uh1', 'kw1',
                'mask16', 'g16', 'aff16', 'seg_s16', 'seg_e16', 'pool16', 'tile16',
                'uh2', 'kw2',
                'mask8', 'g8', 'aff8', 'seg_s8', 'seg_e8', 'pool8', 'tile8')


def pack_lr_branch_params(raw, h0, w0, block_batch=1):
    """Pre-pack LRBranch parameters (once, at init) for the fused kernel.

    block_batch = samples packed into the row dimension of one grid step.
    """
    c4 = raw['se_w1'].shape[0]
    c3 = raw['w16'].shape[0]
    c2 = raw['w8'].shape[0]
    nb = int(block_batch)
    h1, w1 = 2 * h0, 2 * w0        # spatial size at conv_lr16x
    h2, w2 = 2 * h1, 2 * w1        # spatial size at conv_lr8x
    eye = lambda c: np.eye(c, dtype=np.float32)

    packed_np = {
        # SEBlock: per-sample spatial mean folded into fc1, lane tiling into fc2.
        'seg_s0': _seg_sum(nb, h0),
        'seg_e0': _seg_expand(nb, h0),
        'se_w1': (_tile_matrix(w0, c4).T / float(h0 * w0)) @ np.asarray(raw['se_w1'], np.float32),
        'se_w2': np.asarray(raw['se_w2'], np.float32) @ _tile_matrix(w0, c4),
        # upsample #1 (row interp block-diag per sample; lane interp = kron(U_w^T, I_C)).
        'uh1': np.kron(eye(nb), _up_matrix(h0)),
        'kw1': np.kron(_up_matrix(w0).T, eye(c4)),
        # conv_lr16x
        'mask16': _halo_mask(nb, h1),
        'g16': _conv_lane_matrix(raw['w16'], w1),
        'aff16': _affine_rows(raw['b16'], raw['bn16'], raw['cbn16'], w1, c3),
        'seg_s16': _seg_sum(nb, h1),
        'seg_e16': _seg_expand(nb, h1),
        'pool16': _pool_pair(w1, c3, h1 * w1),
        'tile16': _tile_pair(w1, c3),
        # upsample #2
        'uh2': np.kron(eye(nb), _up_matrix(h1)),
        'kw2': np.kron(_up_matrix(w1).T, eye(c3)),
        # conv_lr8x
        'mask8': _halo_mask(nb, h2),
        'g8': _conv_lane_matrix(raw['w8'], w2),
        'aff8': _affine_rows(raw['b8'], raw['bn8'], raw['cbn8'], w2, c2),
        'seg_s8': _seg_sum(nb, h2),
        'seg_e8': _seg_expand(nb, h2),
        'pool8': _pool_pair(w2, c2, h2 * w2),
        'tile8': _tile_pair(w2, c2),
    }
    packed = {k: jnp.asarray(v, jnp.bfloat16 if k in _BF16_KEYS else jnp.float32)
              for k, v in packed_np.items()}
    packed['meta'] = dict(h0=h0, w0=w0, c4=c4, c3=c3, c2=c2, nb=nb,
                          h_out=h2, w_out=w2, c_out=c2)
    return packed


# ----------------------------------------------------------------------------
# pallas_call wrapper
# ----------------------------------------------------------------------------
def lr_branch_pallas(packed, enc32x):
    meta = packed['meta']
    n, c4, h0, w0 = enc32x.shape
    nb = meta['nb']
    assert n % nb == 0, (n, nb)
    g = n // nb
    c3, c2 = meta['c3'], meta['c2']
    h1, w1 = 2 * h0, 2 * w0
    h2, w2 = 2 * h1, 2 * w1

    # NCHW -> lane-dense (G, NB*H0, W0*C4): rows = (sample-in-group, h), lane = w*C + c.
    x = (jnp.transpose(enc32x, (0, 2, 3, 1))
         .reshape(g, nb * h0, w0 * c4).astype(jnp.float32))
    weights = [packed[k] for k in _WEIGHT_KEYS]

    def _const_spec(arr):
        zeros = (0,) * arr.ndim
        return pl.BlockSpec(arr.shape, lambda i, _z=zeros: _z)

    # Advisory cost estimate (per-step matmul flops x grid steps).
    def mm(m, k_, n_):
        return 2 * m * k_ * n_
    r0, l0 = nb * h0, w0 * c4
    r1, l1, o1 = nb * h1, w1 * c4, w1 * c3
    r2, l2, o2 = nb * h2, w2 * c3, w2 * c2
    c4r = packed['se_w1'].shape[1]
    fstep = (mm(nb, r0, l0) + mm(nb, l0, c4r) + mm(nb, c4r, l0) + mm(r0, nb, l0)
             + mm(r1, r0, l0) + mm(r1, l0, l1)
             + mm(r1, _K * l1, o1) + mm(nb, r1, 2 * o1) + mm(nb, 2 * o1, 2 * c3)
             + mm(nb, 2 * c3, 2 * o1) + mm(r1, nb, 2 * o1)
             + mm(r2, r1, o1) + mm(r2, o1, l2)
             + mm(r2, _K * l2, o2) + mm(nb, r2, 2 * o2) + mm(nb, 2 * o2, 2 * c2)
             + mm(nb, 2 * c2, 2 * o2) + mm(r2, nb, 2 * o2))
    cost = pl.CostEstimate(
        flops=int(g * fstep),
        transcendentals=int(g * (nb * l0 + nb * (c3 + c2))),
        bytes_accessed=int(x.size * 4
                           + sum(int(w.size) * w.dtype.itemsize for w in weights)
                           + n * h2 * w2 * c2 * 4))

    out = pl.pallas_call(
        _lr_branch_kernel,
        out_shape=jax.ShapeDtypeStruct((g, nb * h2, w2 * c2), jnp.float32),
        grid=(g,),
        in_specs=[pl.BlockSpec((1, nb * h0, w0 * c4), lambda i: (i, 0, 0))]
                 + [_const_spec(w) for w in weights],
        out_specs=pl.BlockSpec((1, nb * h2, w2 * c2), lambda i: (i, 0, 0)),
        compiler_params=pltpu.CompilerParams(dimension_semantics=("parallel",)),
        cost_estimate=cost,
    )(x, *weights)

    # lane-dense (G, NB*H2, W2*C2) -> NCHW (tiny reshape/transpose glue).
    return out.reshape(n, h2, w2, c2).transpose(0, 3, 1, 2)


def lr_branch_forward(packed, backbone, img):
    enc_features = backbone.forward(img)
    enc2x, enc4x, enc32x = enc_features[0], enc_features[1], enc_features[4]
    lr8x = lr_branch_pallas(packed, enc32x)
    return lr8x, enc2x, enc4x


# ----------------------------------------------------------------------------
# Synthetic deterministic backbone (plain JAX; the backbone is injected into
# LRBranch in the original code, it is not part of the branch itself).
# ----------------------------------------------------------------------------
class SyntheticBackbone:
    # TODO(synk): stands in for the injected MobileNetV2 backbone.
    enc_channels = (8, 8, 16, 16, 32)
    strides = (2, 4, 8, 16, 32)

    def __init__(self, key, in_ch=3):
        ks = jax.random.split(key, len(self.enc_channels))
        self.proj = [jax.random.normal(ks[i], (in_ch, c), jnp.float32)
                     for i, c in enumerate(self.enc_channels)]

    def forward(self, img):  # img: NCHW
        feats = []
        for w, s in zip(self.proj, self.strides):
            n, c, h, wd = img.shape
            pooled = img.reshape(n, c, h // s, s, wd // s, s).mean(axis=(3, 5))
            feats.append(jnp.einsum('nchw,cd->ndhw', pooled, w))
        return feats


# ----------------------------------------------------------------------------
# Raw (PyTorch-layout) parameters + plain-JAX reference for validation
# ----------------------------------------------------------------------------
def init_lr_branch_raw(key, enc_channels):
    c2, c3, c4 = enc_channels[2], enc_channels[3], enc_channels[4]
    ks = jax.random.split(key, 8)

    def bn(k, c):
        k1, k2, k3, k4 = jax.random.split(k, 4)
        return {'gamma': 1.0 + 0.1 * jax.random.normal(k1, (c,), jnp.float32),
                'beta': 0.1 * jax.random.normal(k2, (c,), jnp.float32),
                'rmean': 0.1 * jax.random.normal(k3, (c,), jnp.float32),
                'rvar': jnp.exp(0.1 * jax.random.normal(k4, (c,), jnp.float32))}

    return {
        # SEBlock(c4, c4, reduction=4): Linear weights stored as (in, out), no bias.
        'se_w1': 0.1 * jax.random.normal(ks[0], (c4, c4 // 4), jnp.float32),
        'se_w2': 0.1 * jax.random.normal(ks[1], (c4 // 4, c4), jnp.float32),
        # conv_lr16x: Conv2d(c4, c3, 5, padding=2), weights in (Cout, Cin, KH, KW).
        'w16': 0.1 * jax.random.normal(ks[2], (c3, c4, _K, _K), jnp.float32),
        'b16': 0.1 * jax.random.normal(ks[3], (c3,), jnp.float32),
        'bn16': bn(ks[4], c3 // 2),
        'cbn16': c3 // 2,
        # conv_lr8x: Conv2d(c3, c2, 5, padding=2).
        'w8': 0.1 * jax.random.normal(ks[5], (c2, c3, _K, _K), jnp.float32),
        'b8': 0.1 * jax.random.normal(ks[6], (c2,), jnp.float32),
        'bn8': bn(ks[7], c2 // 2),
        'cbn8': c2 // 2,
    }


def _up_axis_ref(t, axis):
    n = t.shape[axis]
    o = jnp.arange(2 * n, dtype=jnp.float32)
    src = jnp.maximum((o + 0.5) / 2.0 - 0.5, 0.0)
    i0 = jnp.floor(src).astype(jnp.int32)
    frac = src - i0.astype(jnp.float32)
    i1 = jnp.minimum(i0 + 1, n - 1)
    lo = jnp.take(t, i0, axis=axis)
    hi = jnp.take(t, i1, axis=axis)
    shape = [1] * t.ndim
    shape[axis] = 2 * n
    f = frac.reshape(shape)
    return lo * (1.0 - f) + hi * f


def _upsample2x_ref(x):  # NHWC
    return _up_axis_ref(_up_axis_ref(x, 1), 2)


def _conv_ibn_relu_ref(x, w_oihw, bias, bn, cbn):
    w_hwio = jnp.transpose(w_oihw, (2, 3, 1, 0))
    y = lax.conv_general_dilated(x, w_hwio, window_strides=(1, 1),
                                 padding=((_K // 2, _K // 2), (_K // 2, _K // 2)),
                                 dimension_numbers=('NHWC', 'HWIO', 'NHWC'))
    y = y + bias
    yb, yi = y[..., :cbn], y[..., cbn:]
    scale = bn['gamma'] / jnp.sqrt(bn['rvar'] + _EPS)
    yb = yb * scale + (bn['beta'] - bn['rmean'] * scale)
    m = jnp.mean(yi, axis=(1, 2), keepdims=True)
    v = jnp.mean(jnp.square(yi - m), axis=(1, 2), keepdims=True)
    yi = (yi - m) * lax.rsqrt(v + _EPS)
    return jax.nn.relu(jnp.concatenate([yb, yi], axis=-1))


def lr_branch_reference(raw, enc32x):
    x = jnp.transpose(enc32x, (0, 2, 3, 1)).astype(jnp.float32)
    pooled = jnp.mean(x, axis=(1, 2))
    h = jax.nn.relu(pooled @ raw['se_w1'])
    gate = jax.nn.sigmoid(h @ raw['se_w2'])
    x = x * gate[:, None, None, :]
    x = _upsample2x_ref(x)
    x = _conv_ibn_relu_ref(x, raw['w16'], raw['b16'], raw['bn16'], raw['cbn16'])
    x = _upsample2x_ref(x)
    x = _conv_ibn_relu_ref(x, raw['w8'], raw['b8'], raw['bn8'], raw['cbn8'])
    return jnp.transpose(x, (0, 3, 1, 2))


# ----------------------------------------------------------------------------
if __name__ == "__main__":
    key = jax.random.PRNGKey(0)
    k_img, k_bb, k_params = jax.random.split(key, 3)

    backbone = SyntheticBackbone(k_bb)
    raw = init_lr_branch_raw(k_params, backbone.enc_channels)

    # Input image, NCHW like PyTorch: (batch=2, 3 channels, 64x64) -> enc32x is (2, 32, 2, 2).
    img = jax.random.normal(k_img, (2, 3, 64, 64), jnp.float32)
    n = img.shape[0]
    h0 = img.shape[2] // backbone.strides[-1]
    w0 = img.shape[3] // backbone.strides[-1]
    # block_batch = n packs the whole batch into the row dimension of a single
    # grid step (best for single-TC v5e/v6e); on v7x use block_batch = n // 2
    # to keep a 2-wide "parallel" grid across its two TensorCores.
    packed = pack_lr_branch_params(raw, h0, w0, block_batch=n)

    lr8x, enc2x, enc4x = lr_branch_forward(packed, backbone, img)
    jax.block_until_ready((lr8x, enc2x, enc4x))

    assert lr8x.shape == (2, backbone.enc_channels[2], 8, 8), lr8x.shape
    assert enc2x.shape == (2, backbone.enc_channels[0], 32, 32), enc2x.shape
    assert enc4x.shape == (2, backbone.enc_channels[1], 16, 16), enc4x.shape
    assert bool(jnp.all(jnp.isfinite(lr8x)))

    # Numerics check against a plain-JAX float32 reference of the same branch.
    # The kernel runs its conv / upsample matmuls with bf16 MXU operands
    # (f32 accumulation), so allow bf16-level max deviation, and additionally
    # bound the mean error to catch systematic regressions the max would hide.
    enc32x = backbone.forward(img)[4]
    ref = lr_branch_reference(raw, enc32x)
    err_max = float(jnp.max(jnp.abs(lr8x - ref)))
    err_mean = float(jnp.mean(jnp.abs(lr8x - ref)))
    assert err_max < 1e-1, f"kernel deviates from reference: max|diff|={err_max}"
    assert err_mean < 2e-2, f"kernel deviates from reference: mean|diff|={err_mean}"

    print("KERNEL_OK")
</pallas_src>

<mosaic_0001>
module attributes {stable_mosaic.version = 11 : i64} {
  func.func @_lr_branch_kernel(%arg0: i32, %arg1: memref<1x4x64xf32, #tpu.memory_space<vmem>>, %arg2: memref<2x4xf32, #tpu.memory_space<vmem>>, %arg3: memref<4x2xf32, #tpu.memory_space<vmem>>, %arg4: memref<64x8xf32, #tpu.memory_space<vmem>>, %arg5: memref<8x64xf32, #tpu.memory_space<vmem>>, %arg6: memref<8x4xbf16, #tpu.memory_space<vmem>>, %arg7: memref<64x128xbf16, #tpu.memory_space<vmem>>, %arg8: memref<5x8x1xbf16, #tpu.memory_space<vmem>>, %arg9: memref<640x64xbf16, #tpu.memory_space<vmem>>, %arg10: memref<4x64xf32, #tpu.memory_space<vmem>>, %arg11: memref<2x8xf32, #tpu.memory_space<vmem>>, %arg12: memref<8x2xf32, #tpu.memory_space<vmem>>, %arg13: memref<128x32xf32, #tpu.memory_space<vmem>>, %arg14: memref<32x128xf32, #tpu.memory_space<vmem>>, %arg15: memref<16x8xbf16, #tpu.memory_space<vmem>>, %arg16: memref<64x128xbf16, #tpu.memory_space<vmem>>, %arg17: memref<5x16x1xbf16, #tpu.memory_space<vmem>>, %arg18: memref<640x128xbf16, #tpu.memory_space<vmem>>, %arg19: memref<4x128xf32, #tpu.memory_space<vmem>>, %arg20: memref<2x16xf32, #tpu.memory_space<vmem>>, %arg21: memref<16x2xf32, #tpu.memory_space<vmem>>, %arg22: memref<256x32xf32, #tpu.memory_space<vmem>>, %arg23: memref<32x256xf32, #tpu.memory_space<vmem>>, %arg24: memref<1x16x128xf32, #tpu.memory_space<vmem>>) attributes {dimension_semantics = [#tpu.dimension_semantics<parallel>], iteration_bounds = array<i64: 1>, scalar_prefetch = 0 : i64, scratch_operands = 0 : i64, tpu.core_type = #tpu.core_type<tc>, window_params = [{transform_indices = @transform_0, window_bounds = array<i64: 1, 4, 64>}, {pipeline_mode = #tpu.pipeline_mode<synchronous>, transform_indices = @transform_1, window_bounds = array<i64: 2, 4>}, {pipeline_mode = #tpu.pipeline_mode<synchronous>, transform_indices = @transform_2, window_bounds = array<i64: 4, 2>}, {pipeline_mode = #tpu.pipeline_mode<synchronous>, transform_indices = @transform_3, window_bounds = array<i64: 64, 8>}, {pipeline_mode = #tpu.pipeline_mode<synchronous>, transform_indices = @transform_4, window_bounds = array<i64: 8, 64>}, {pipeline_mode = #tpu.pipeline_mode<synchronous>, transform_indices = @transform_5, window_bounds = array<i64: 8, 4>}, {pipeline_mode = #tpu.pipeline_mode<synchronous>, transform_indices = @transform_6, window_bounds = array<i64: 64, 128>}, {pipeline_mode = #tpu.pipeline_mode<synchronous>, transform_indices = @transform_7, window_bounds = array<i64: 5, 8, 1>}, {pipeline_mode = #tpu.pipeline_mode<synchronous>, transform_indices = @transform_8, window_bounds = array<i64: 640, 64>}, {pipeline_mode = #tpu.pipeline_mode<synchronous>, transform_indices = @transform_9, window_bounds = array<i64: 4, 64>}, {pipeline_mode = #tpu.pipeline_mode<synchronous>, transform_indices = @transform_10, window_bounds = array<i64: 2, 8>}, {pipeline_mode = #tpu.pipeline_mode<synchronous>, transform_indices = @transform_11, window_bounds = array<i64: 8, 2>}, {pipeline_mode = #tpu.pipeline_mode<synchronous>, transform_indices = @transform_12, window_bounds = array<i64: 128, 32>}, {pipeline_mode = #tpu.pipeline_mode<synchronous>, transform_indices = @transform_13, window_bounds = array<i64: 32, 128>}, {pipeline_mode = #tpu.pipeline_mode<synchronous>, transform_indices = @transform_14, window_bounds = array<i64: 16, 8>}, {pipeline_mode = #tpu.pipeline_mode<synchronous>, transform_indices = @transform_15, window_bounds = array<i64: 64, 128>}, {pipeline_mode = #tpu.pipeline_mode<synchronous>, transform_indices = @transform_16, window_bounds = array<i64: 5, 16, 1>}, {pipeline_mode = #tpu.pipeline_mode<synchronous>, transform_indices = @transform_17, window_bounds = array<i64: 640, 128>}, {pipeline_mode = #tpu.pipeline_mode<synchronous>, transform_indices = @transform_18, window_bounds = array<i64: 4, 128>}, {pipeline_mode = #tpu.pipeline_mode<synchronous>, transform_indices = @transform_19, window_bounds = array<i64: 2, 16>}, {pipeline_mode = #tpu.pipeline_mode<synchronous>, transform_indices = @transform_20, window_bounds = array<i64: 16, 2>}, {pipeline_mode = #tpu.pipeline_mode<synchronous>, transform_indices = @transform_21, window_bounds = array<i64: 256, 32>}, {pipeline_mode = #tpu.pipeline_mode<synchronous>, transform_indices = @transform_22, window_bounds = array<i64: 32, 256>}, {transform_indices = @transform_23, window_bounds = array<i64: 1, 16, 128>}]} {
    %c0 = arith.constant 0 : index
    %c0_0 = arith.constant 0 : index
    %c0_1 = arith.constant 0 : index
    %0 = vector.load %arg1[%c0, %c0_0, %c0_1] : memref<1x4x64xf32, #tpu.memory_space<vmem>>, vector<1x4x64xf32>
    %1 = vector.shape_cast %0 : vector<1x4x64xf32> to vector<4x64xf32>
    %c0_2 = arith.constant 0 : index
    %c0_3 = arith.constant 0 : index
    %2 = vector.load %arg2[%c0_2, %c0_3] : memref<2x4xf32, #tpu.memory_space<vmem>>, vector<2x4xf32>
    %cst = arith.constant dense<0.000000e+00> : vector<2x64xf32>
    %3 = tpu.matmul %2, %1, %cst {dimension_numbers = #tpu.dot_dimension_numbers<[1], [0], [0], [1], [0, 0, 1, 1], [], []>} : vector<2x4xf32>, vector<4x64xf32>, vector<2x64xf32> -> vector<2x64xf32>
    %c0_4 = arith.constant 0 : index
    %c0_5 = arith.constant 0 : index
    %4 = vector.load %arg4[%c0_4, %c0_5] : memref<64x8xf32, #tpu.memory_space<vmem>>, vector<64x8xf32>
    %cst_6 = arith.constant dense<0.000000e+00> : vector<2x8xf32>
    %5 = tpu.matmul %3, %4, %cst_6 {dimension_numbers = #tpu.dot_dimension_numbers<[1], [0], [0], [1], [0, 0, 1, 1], [], []>} : vector<2x64xf32>, vector<64x8xf32>, vector<2x8xf32> -> vector<2x8xf32>
    %cst_7 = arith.constant 0.000000e+00 : f32
    %6 = vector.broadcast %cst_7 : f32 to vector<2x8xf32>
    %7 = arith.maximumf %5, %6 : vector<2x8xf32>
    %c0_8 = arith.constant 0 : index
    %c0_9 = arith.constant 0 : index
    %8 = vector.load %arg5[%c0_8, %c0_9] : memref<8x64xf32, #tpu.memory_space<vmem>>, vector<8x64xf32>
    %cst_10 = arith.constant dense<0.000000e+00> : vector<2x64xf32>
    %9 = tpu.matmul %7, %8, %cst_10 {dimension_numbers = #tpu.dot_dimension_numbers<[1], [0], [0], [1], [0, 0, 1, 1], [], []>} : vector<2x8xf32>, vector<8x64xf32>, vector<2x64xf32> -> vector<2x64xf32>
    %10 = arith.negf %9 : vector<2x64xf32>
    %11 = math.exp %10 : vector<2x64xf32>
    %cst_11 = arith.constant 1.000000e+00 : f32
    %12 = vector.broadcast %cst_11 : f32 to vector<2x64xf32>
    %13 = arith.addf %12, %11 : vector<2x64xf32>
    %14 = arith.divf %12, %13 : vector<2x64xf32>
    %c0_12 = arith.constant 0 : index
    %c0_13 = arith.constant 0 : index
    %15 = vector.load %arg3[%c0_12, %c0_13] : memref<4x2xf32, #tpu.memory_space<vmem>>, vector<4x2xf32>
    %cst_14 = arith.constant dense<0.000000e+00> : vector<4x64xf32>
    %16 = tpu.matmul %15, %14, %cst_14 {dimension_numbers = #tpu.dot_dimension_numbers<[1], [0], [0], [1], [0, 0, 1, 1], [], []>} : vector<4x2xf32>, vector<2x64xf32>, vector<4x64xf32> -> vector<4x64xf32>
    %17 = arith.mulf %1, %16 : vector<4x64xf32>
    %c0_15 = arith.constant 0 : index
    %c0_16 = arith.constant 0 : index
    %18 = vector.load %arg6[%c0_15, %c0_16] : memref<8x4xbf16, #tpu.memory_space<vmem>>, vector<8x4xbf16>
    %19 = arith.truncf %17 : vector<4x64xf32> to vector<4x64xbf16>
    %cst_17 = arith.constant dense<0.000000e+00> : vector<8x64xf32>
    %20 = tpu.matmul %18, %19, %cst_17 {dimension_numbers = #tpu.dot_dimension_numbers<[1], [0], [0], [1], [0, 0, 1, 1], [], []>} : vector<8x4xbf16>, vector<4x64xbf16>, vector<8x64xf32> -> vector<8x64xf32>
    %21 = arith.truncf %20 : vector<8x64xf32> to vector<8x64xbf16>
    %c0_18 = arith.constant 0 : index
    %c0_19 = arith.constant 0 : index
    %22 = vector.load %arg7[%c0_18, %c0_19] : memref<64x128xbf16, #tpu.memory_space<vmem>>, vector<64x128xbf16>
    %cst_20 = arith.constant dense<0.000000e+00> : vector<8x128xf32>
    %23 = tpu.matmul %21, %22, %cst_20 {dimension_numbers = #tpu.dot_dimension_numbers<[1], [0], [0], [1], [0, 0, 1, 1], [], []>} : vector<8x64xbf16>, vector<64x128xbf16>, vector<8x128xf32> -> vector<8x128xf32>
    %24 = arith.truncf %23 : vector<8x128xf32> to vector<8x128xbf16>
    %cst_21 = arith.constant 0.000000e+00 : bf16
    %25 = vector.broadcast %cst_21 : bf16 to vector<2x128xbf16>
    %26 = tpu.concatenate %25, %24, %25 in 0 : vector<2x128xbf16>, vector<8x128xbf16>, vector<2x128xbf16> -> vector<12x128xbf16>
    %27 = vector.extract_strided_slice %26 {offsets = [0, 0], sizes = [8, 128], strides = [1, 1]} : vector<12x128xbf16> to vector<8x128xbf16>
    %c0_22 = arith.constant 0 : index
    %c0_23 = arith.constant 0 : index
    %c0_24 = arith.constant 0 : index
    %28 = vector.load %arg8[%c0_22, %c0_23, %c0_24] : memref<5x8x1xbf16, #tpu.memory_space<vmem>>, vector<1x8x1xbf16>
    %29 = vector.shape_cast %28 : vector<1x8x1xbf16> to vector<8x1xbf16>
    %30 = vector.broadcast %29 : vector<8x1xbf16> to vector<8x128xbf16>
    %31 = arith.mulf %27, %30 : vector<8x128xbf16>
    %32 = vector.extract_strided_slice %26 {offsets = [1, 0], sizes = [8, 128], strides = [1, 1]} : vector<12x128xbf16> to vector<8x128xbf16>
    %c1 = arith.constant 1 : index
    %c0_25 = arith.constant 0 : index
    %c0_26 = arith.constant 0 : index
    %33 = vector.load %arg8[%c1, %c0_25, %c0_26] : memref<5x8x1xbf16, #tpu.memory_space<vmem>>, vector<1x8x1xbf16>
    %34 = vector.shape_cast %33 : vector<1x8x1xbf16> to vector<8x1xbf16>
    %35 = vector.broadcast %34 : vector<8x1xbf16> to vector<8x128xbf16>
    %36 = arith.mulf %32, %35 : vector<8x128xbf16>
    %37 = vector.extract_strided_slice %26 {offsets = [2, 0], sizes = [8, 128], strides = [1, 1]} : vector<12x128xbf16> to vector<8x128xbf16>
    %c2 = arith.constant 2 : index
    %c0_27 = arith.constant 0 : index
    %c0_28 = arith.constant 0 : index
    %38 = vector.load %arg8[%c2, %c0_27, %c0_28] : memref<5x8x1xbf16, #tpu.memory_space<vmem>>, vector<1x8x1xbf16>
    %39 = vector.shape_cast %38 : vector<1x8x1xbf16> to vector<8x1xbf16>
    %40 = vector.broadcast %39 : vector<8x1xbf16> to vector<8x128xbf16>
    %41 = arith.mulf %37, %40 : vector<8x128xbf16>
    %42 = vector.extract_strided_slice %26 {offsets = [3, 0], sizes = [8, 128], strides = [1, 1]} : vector<12x128xbf16> to vector<8x128xbf16>
    %c3 = arith.constant 3 : index
    %c0_29 = arith.constant 0 : index
    %c0_30 = arith.constant 0 : index
    %43 = vector.load %arg8[%c3, %c0_29, %c0_30] : memref<5x8x1xbf16, #tpu.memory_space<vmem>>, vector<1x8x1xbf16>
    %44 = vector.shape_cast %43 : vector<1x8x1xbf16> to vector<8x1xbf16>
    %45 = vector.broadcast %44 : vector<8x1xbf16> to vector<8x128xbf16>
    %46 = arith.mulf %42, %45 : vector<8x128xbf16>
    %47 = vector.extract_strided_slice %26 {offsets = [4, 0], sizes = [8, 128], strides = [1, 1]} : vector<12x128xbf16> to vector<8x128xbf16>
    %c4 = arith.constant 4 : index
    %c0_31 = arith.constant 0 : index
    %c0_32 = arith.constant 0 : index
    %48 = vector.load %arg8[%c4, %c0_31, %c0_32] : memref<5x8x1xbf16, #tpu.memory_space<vmem>>, vector<1x8x1xbf16>
    %49 = vector.shape_cast %48 : vector<1x8x1xbf16> to vector<8x1xbf16>
    %50 = vector.broadcast %49 : vector<8x1xbf16> to vector<8x128xbf16>
    %51 = arith.mulf %47, %50 : vector<8x128xbf16>
    %52 = tpu.concatenate %31, %36, %41, %46, %51 in 1 : vector<8x128xbf16>, vector<8x128xbf16>, vector<8x128xbf16>, vector<8x128xbf16>, vector<8x128xbf16> -> vector<8x640xbf16>
    %c0_33 = arith.constant 0 : index
    %c0_34 = arith.constant 0 : index
    %53 = vector.load %arg9[%c0_33, %c0_34] : memref<640x64xbf16, #tpu.memory_space<vmem>>, vector<640x64xbf16>
    %cst_35 = arith.constant dense<0.000000e+00> : vector<8x64xf32>
    %54 = tpu.matmul %52, %53, %cst_35 {dimension_numbers = #tpu.dot_dimension_numbers<[1], [0], [0], [1], [0, 0, 1, 1], [], []>} : vector<8x640xbf16>, vector<640x64xbf16>, vector<8x64xf32> -> vector<8x64xf32>
    %c0_36 = arith.constant 0 : index
    %c0_37 = arith.constant 0 : index
    %55 = vector.load %arg10[%c0_36, %c0_37] : memref<4x64xf32, #tpu.memory_space<vmem>>, vector<1x64xf32>
    %56 = vector.broadcast %55 : vector<1x64xf32> to vector<8x64xf32>
    %57 = arith.addf %54, %56 : vector<8x64xf32>
    %58 = arith.mulf %57, %57 : vector<8x64xf32>
    %59 = tpu.concatenate %57, %58 in 1 : vector<8x64xf32>, vector<8x64xf32> -> vector<8x128xf32>
    %c0_38 = arith.constant 0 : index
    %c0_39 = arith.constant 0 : index
    %60 = vector.load %arg11[%c0_38, %c0_39] : memref<2x8xf32, #tpu.memory_space<vmem>>, vector<2x8xf32>
    %cst_40 = arith.constant dense<0.000000e+00> : vector<2x128xf32>
    %61 = tpu.matmul %60, %59, %cst_40 {dimension_numbers = #tpu.dot_dimension_numbers<[1], [0], [0], [1], [0, 0, 1, 1], [], []>} : vector<2x8xf32>, vector<8x128xf32>, vector<2x128xf32> -> vector<2x128xf32>
    %c0_41 = arith.constant 0 : index
    %c0_42 = arith.constant 0 : index
    %62 = vector.load %arg13[%c0_41, %c0_42] : memref<128x32xf32, #tpu.memory_space<vmem>>, vector<128x32xf32>
    %cst_43 = arith.constant dense<0.000000e+00> : vector<2x32xf32>
    %63 = tpu.matmul %61, %62, %cst_43 {dimension_numbers = #tpu.dot_dimension_numbers<[1], [0], [0], [1], [0, 0, 1, 1], [], []>} : vector<2x128xf32>, vector<128x32xf32>, vector<2x32xf32> -> vector<2x32xf32>
    %64 = vector.extract_strided_slice %63 {offsets = [0, 0], sizes = [2, 16], strides = [1, 1]} : vector<2x32xf32> to vector<2x16xf32>
    %65 = vector.extract_strided_slice %63 {offsets = [0, 16], sizes = [2, 16], strides = [1, 1]} : vector<2x32xf32> to vector<2x16xf32>
    %66 = arith.mulf %64, %64 : vector<2x16xf32>
    %67 = arith.subf %65, %66 : vector<2x16xf32>
    %cst_44 = arith.constant 0.000000e+00 : f32
    %68 = vector.broadcast %cst_44 : f32 to vector<2x16xf32>
    %69 = arith.maximumf %67, %68 : vector<2x16xf32>
    %cst_45 = arith.constant 9.99999974E-6 : f32
    %70 = vector.broadcast %cst_45 : f32 to vector<2x16xf32>
    %71 = arith.addf %69, %70 : vector<2x16xf32>
    %72 = math.rsqrt %71 : vector<2x16xf32>
    %73 = arith.mulf %64, %72 : vector<2x16xf32>
    %74 = tpu.concatenate %72, %73 in 1 : vector<2x16xf32>, vector<2x16xf32> -> vector<2x32xf32>
    %c0_46 = arith.constant 0 : index
    %c0_47 = arith.constant 0 : index
    %75 = vector.load %arg14[%c0_46, %c0_47] : memref<32x128xf32, #tpu.memory_space<vmem>>, vector<32x128xf32>
    %cst_48 = arith.constant dense<0.000000e+00> : vector<2x128xf32>
    %76 = tpu.matmul %74, %75, %cst_48 {dimension_numbers = #tpu.dot_dimension_numbers<[1], [0], [0], [1], [0, 0, 1, 1], [], []>} : vector<2x32xf32>, vector<32x128xf32>, vector<2x128xf32> -> vector<2x128xf32>
    %c1_49 = arith.constant 1 : index
    %c0_50 = arith.constant 0 : index
    %77 = vector.load %arg10[%c1_49, %c0_50] : memref<4x64xf32, #tpu.memory_space<vmem>>, vector<1x64xf32>
    %c3_51 = arith.constant 3 : index
    %c0_52 = arith.constant 0 : index
    %78 = vector.load %arg10[%c3_51, %c0_52] : memref<4x64xf32, #tpu.memory_space<vmem>>, vector<1x64xf32>
    %79 = vector.extract_strided_slice %76 {offsets = [0, 0], sizes = [2, 64], strides = [1, 1]} : vector<2x128xf32> to vector<2x64xf32>
    %80 = vector.broadcast %78 : vector<1x64xf32> to vector<2x64xf32>
    %81 = arith.mulf %80, %79 : vector<2x64xf32>
    %82 = vector.broadcast %77 : vector<1x64xf32> to vector<2x64xf32>
    %83 = arith.addf %82, %81 : vector<2x64xf32>
    %c2_53 = arith.constant 2 : index
    %c0_54 = arith.constant 0 : index
    %84 = vector.load %arg10[%c2_53, %c0_54] : memref<4x64xf32, #tpu.memory_space<vmem>>, vector<1x64xf32>
    %c3_55 = arith.constant 3 : index
    %c0_56 = arith.constant 0 : index
    %85 = vector.load %arg10[%c3_55, %c0_56] : memref<4x64xf32, #tpu.memory_space<vmem>>, vector<1x64xf32>
    %86 = vector.extract_strided_slice %76 {offsets = [0, 64], sizes = [2, 64], strides = [1, 1]} : vector<2x128xf32> to vector<2x64xf32>
    %87 = vector.broadcast %85 : vector<1x64xf32> to vector<2x64xf32>
    %88 = arith.mulf %87, %86 : vector<2x64xf32>
    %89 = vector.broadcast %84 : vector<1x64xf32> to vector<2x64xf32>
    %90 = arith.subf %89, %88 : vector<2x64xf32>
    %c0_57 = arith.constant 0 : index
    %c0_58 = arith.constant 0 : index
    %91 = vector.load %arg12[%c0_57, %c0_58] : memref<8x2xf32, #tpu.memory_space<vmem>>, vector<8x2xf32>
    %92 = tpu.concatenate %83, %90 in 1 : vector<2x64xf32>, vector<2x64xf32> -> vector<2x128xf32>
    %cst_59 = arith.constant dense<0.000000e+00> : vector<8x128xf32>
    %93 = tpu.matmul %91, %92, %cst_59 {dimension_numbers = #tpu.dot_dimension_numbers<[1], [0], [0], [1], [0, 0, 1, 1], [], []>} : vector<8x2xf32>, vector<2x128xf32>, vector<8x128xf32> -> vector<8x128xf32>
    %94 = vector.extract_strided_slice %93 {offsets = [0, 0], sizes = [8, 64], strides = [1, 1]} : vector<8x128xf32> to vector<8x64xf32>
    %95 = arith.mulf %57, %94 : vector<8x64xf32>
    %96 = vector.extract_strided_slice %93 {offsets = [0, 64], sizes = [8, 64], strides = [1, 1]} : vector<8x128xf32> to vector<8x64xf32>
    %97 = arith.addf %95, %96 : vector<8x64xf32>
    %cst_60 = arith.constant 0.000000e+00 : f32
    %98 = vector.broadcast %cst_60 : f32 to vector<8x64xf32>
    %99 = arith.maximumf %97, %98 : vector<8x64xf32>
    %c0_61 = arith.constant 0 : index
    %c0_62 = arith.constant 0 : index
    %100 = vector.load %arg15[%c0_61, %c0_62] : memref<16x8xbf16, #tpu.memory_space<vmem>>, vector<16x8xbf16>
    %101 = arith.truncf %99 : vector<8x64xf32> to vector<8x64xbf16>
    %cst_63 = arith.constant dense<0.000000e+00> : vector<16x64xf32>
    %102 = tpu.matmul %100, %101, %cst_63 {dimension_numbers = #tpu.dot_dimension_numbers<[1], [0], [0], [1], [0, 0, 1, 1], [], []>} : vector<16x8xbf16>, vector<8x64xbf16>, vector<16x64xf32> -> vector<16x64xf32>
    %103 = arith.truncf %102 : vector<16x64xf32> to vector<16x64xbf16>
    %c0_64 = arith.constant 0 : index
    %c0_65 = arith.constant 0 : index
    %104 = vector.load %arg16[%c0_64, %c0_65] : memref<64x128xbf16, #tpu.memory_space<vmem>>, vector<64x128xbf16>
    %cst_66 = arith.constant dense<0.000000e+00> : vector<16x128xf32>
    %105 = tpu.matmul %103, %104, %cst_66 {dimension_numbers = #tpu.dot_dimension_numbers<[1], [0], [0], [1], [0, 0, 1, 1], [], []>} : vector<16x64xbf16>, vector<64x128xbf16>, vector<16x128xf32> -> vector<16x128xf32>
    %106 = arith.truncf %105 : vector<16x128xf32> to vector<16x128xbf16>
    %cst_67 = arith.constant 0.000000e+00 : bf16
    %107 = vector.broadcast %cst_67 : bf16 to vector<2x128xbf16>
    %108 = tpu.concatenate %107, %106, %107 in 0 : vector<2x128xbf16>, vector<16x128xbf16>, vector<2x128xbf16> -> vector<20x128xbf16>
    %109 = vector.extract_strided_slice %108 {offsets = [0, 0], sizes = [16, 128], strides = [1, 1]} : vector<20x128xbf16> to vector<16x128xbf16>
    %c0_68 = arith.constant 0 : index
    %c0_69 = arith.constant 0 : index
    %c0_70 = arith.constant 0 : index
    %110 = vector.load %arg17[%c0_68, %c0_69, %c0_70] : memref<5x16x1xbf16, #tpu.memory_space<vmem>>, vector<1x16x1xbf16>
    %111 = vector.shape_cast %110 : vector<1x16x1xbf16> to vector<16x1xbf16>
    %112 = vector.broadcast %111 : vector<16x1xbf16> to vector<16x128xbf16>
    %113 = arith.mulf %109, %112 : vector<16x128xbf16>
    %114 = vector.extract_strided_slice %108 {offsets = [1, 0], sizes = [16, 128], strides = [1, 1]} : vector<20x128xbf16> to vector<16x128xbf16>
    %c1_71 = arith.constant 1 : index
    %c0_72 = arith.constant 0 : index
    %c0_73 = arith.constant 0 : index
    %115 = vector.load %arg17[%c1_71, %c0_72, %c0_73] : memref<5x16x1xbf16, #tpu.memory_space<vmem>>, vector<1x16x1xbf16>
    %116 = vector.shape_cast %115 : vector<1x16x1xbf16> to vector<16x1xbf16>
    %117 = vector.broadcast %116 : vector<16x1xbf16> to vector<16x128xbf16>
    %118 = arith.mulf %114, %117 : vector<16x128xbf16>
    %119 = vector.extract_strided_slice %108 {offsets = [2, 0], sizes = [16, 128], strides = [1, 1]} : vector<20x128xbf16> to vector<16x128xbf16>
    %c2_74 = arith.constant 2 : index
    %c0_75 = arith.constant 0 : index
    %c0_76 = arith.constant 0 : index
    %120 = vector.load %arg17[%c2_74, %c0_75, %c0_76] : memref<5x16x1xbf16, #tpu.memory_space<vmem>>, vector<1x16x1xbf16>
    %121 = vector.shape_cast %120 : vector<1x16x1xbf16> to vector<16x1xbf16>
    %122 = vector.broadcast %121 : vector<16x1xbf16> to vector<16x128xbf16>
    %123 = arith.mulf %119, %122 : vector<16x128xbf16>
    %124 = vector.extract_strided_slice %108 {offsets = [3, 0], sizes = [16, 128], strides = [1, 1]} : vector<20x128xbf16> to vector<16x128xbf16>
    %c3_77 = arith.constant 3 : index
    %c0_78 = arith.constant 0 : index
    %c0_79 = arith.constant 0 : index
    %125 = vector.load %arg17[%c3_77, %c0_78, %c0_79] : memref<5x16x1xbf16, #tpu.memory_space<vmem>>, vector<1x16x1xbf16>
    %126 = vector.shape_cast %125 : vector<1x16x1xbf16> to vector<16x1xbf16>
    %127 = vector.broadcast %126 : vector<16x1xbf16> to vector<16x128xbf16>
    %128 = arith.mulf %124, %127 : vector<16x128xbf16>
    %129 = vector.extract_strided_slice %108 {offsets = [4, 0], sizes = [16, 128], strides = [1, 1]} : vector<20x128xbf16> to vector<16x128xbf16>
    %c4_80 = arith.constant 4 : index
    %c0_81 = arith.constant 0 : index
    %c0_82 = arith.constant 0 : index
    %130 = vector.load %arg17[%c4_80, %c0_81, %c0_82] : memref<5x16x1xbf16, #tpu.memory_space<vmem>>, vector<1x16x1xbf16>
    %131 = vector.shape_cast %130 : vector<1x16x1xbf16> to vector<16x1xbf16>
    %132 = vector.broadcast %131 : vector<16x1xbf16> to vector<16x128xbf16>
    %133 = arith.mulf %129, %132 : vector<16x128xbf16>
    %134 = tpu.concatenate %113, %118, %123, %128, %133 in 1 : vector<16x128xbf16>, vector<16x128xbf16>, vector<16x128xbf16>, vector<16x128xbf16>, vector<16x128xbf16> -> vector<16x640xbf16>
    %c0_83 = arith.constant 0 : index
    %c0_84 = arith.constant 0 : index
    %135 = vector.load %arg18[%c0_83, %c0_84] : memref<640x128xbf16, #tpu.memory_space<vmem>>, vector<640x128xbf16>
    %cst_85 = arith.constant dense<0.000000e+00> : vector<16x128xf32>
    %136 = tpu.matmul %134, %135, %cst_85 {dimension_numbers = #tpu.dot_dimension_numbers<[1], [0], [0], [1], [0, 0, 1, 1], [], []>} : vector<16x640xbf16>, vector<640x128xbf16>, vector<16x128xf32> -> vector<16x128xf32>
    %c0_86 = arith.constant 0 : index
    %c0_87 = arith.constant 0 : index
    %137 = vector.load %arg19[%c0_86, %c0_87] : memref<4x128xf32, #tpu.memory_space<vmem>>, vector<1x128xf32>
    %138 = vector.broadcast %137 : vector<1x128xf32> to vector<16x128xf32>
    %139 = arith.addf %136, %138 : vector<16x128xf32>
    %140 = arith.mulf %139, %139 : vector<16x128xf32>
    %141 = tpu.concatenate %139, %140 in 1 : vector<16x128xf32>, vector<16x128xf32> -> vector<16x256xf32>
    %c0_88 = arith.constant 0 : index
    %c0_89 = arith.constant 0 : index
    %142 = vector.load %arg20[%c0_88, %c0_89] : memref<2x16xf32, #tpu.memory_space<vmem>>, vector<2x16xf32>
    %cst_90 = arith.constant dense<0.000000e+00> : vector<2x256xf32>
    %143 = tpu.matmul %142, %141, %cst_90 {dimension_numbers = #tpu.dot_dimension_numbers<[1], [0], [0], [1], [0, 0, 1, 1], [], []>} : vector<2x16xf32>, vector<16x256xf32>, vector<2x256xf32> -> vector<2x256xf32>
    %c0_91 = arith.constant 0 : index
    %c0_92 = arith.constant 0 : index
    %144 = vector.load %arg22[%c0_91, %c0_92] : memref<256x32xf32, #tpu.memory_space<vmem>>, vector<256x32xf32>
    %cst_93 = arith.constant dense<0.000000e+00> : vector<2x32xf32>
    %145 = tpu.matmul %143, %144, %cst_93 {dimension_numbers = #tpu.dot_dimension_numbers<[1], [0], [0], [1], [0, 0, 1, 1], [], []>} : vector<2x256xf32>, vector<256x32xf32>, vector<2x32xf32> -> vector<2x32xf32>
    %146 = vector.extract_strided_slice %145 {offsets = [0, 0], sizes = [2, 16], strides = [1, 1]} : vector<2x32xf32> to vector<2x16xf32>
    %147 = vector.extract_strided_slice %145 {offsets = [0, 16], sizes = [2, 16], strides = [1, 1]} : vector<2x32xf32> to vector<2x16xf32>
    %148 = arith.mulf %146, %146 : vector<2x16xf32>
    %149 = arith.subf %147, %148 : vector<2x16xf32>
    %cst_94 = arith.constant 0.000000e+00 : f32
    %150 = vector.broadcast %cst_94 : f32 to vector<2x16xf32>
    %151 = arith.maximumf %149, %150 : vector<2x16xf32>
    %cst_95 = arith.constant 9.99999974E-6 : f32
    %152 = vector.broadcast %cst_95 : f32 to vector<2x16xf32>
    %153 = arith.addf %151, %152 : vector<2x16xf32>
    %154 = math.rsqrt %153 : vector<2x16xf32>
    %155 = arith.mulf %146, %154 : vector<2x16xf32>
    %156 = tpu.concatenate %154, %155 in 1 : vector<2x16xf32>, vector<2x16xf32> -> vector<2x32xf32>
    %c0_96 = arith.constant 0 : index
    %c0_97 = arith.constant 0 : index
    %157 = vector.load %arg23[%c0_96, %c0_97] : memref<32x256xf32, #tpu.memory_space<vmem>>, vector<32x256xf32>
    %cst_98 = arith.constant dense<0.000000e+00> : vector<2x256xf32>
    %158 = tpu.matmul %156, %157, %cst_98 {dimension_numbers = #tpu.dot_dimension_numbers<[1], [0], [0], [1], [0, 0, 1, 1], [], []>} : vector<2x32xf32>, vector<32x256xf32>, vector<2x256xf32> -> vector<2x256xf32>
    %c1_99 = arith.constant 1 : index
    %c0_100 = arith.constant 0 : index
    %159 = vector.load %arg19[%c1_99, %c0_100] : memref<4x128xf32, #tpu.memory_space<vmem>>, vector<1x128xf32>
    %c3_101 = arith.constant 3 : index
    %c0_102 = arith.constant 0 : index
    %160 = vector.load %arg19[%c3_101, %c0_102] : memref<4x128xf32, #tpu.memory_space<vmem>>, vector<1x128xf32>
    %161 = vector.extract_strided_slice %158 {offsets = [0, 0], sizes = [2, 128], strides = [1, 1]} : vector<2x256xf32> to vector<2x128xf32>
    %162 = vector.broadcast %160 : vector<1x128xf32> to vector<2x128xf32>
    %163 = arith.mulf %162, %161 : vector<2x128xf32>
    %164 = vector.broadcast %159 : vector<1x128xf32> to vector<2x128xf32>
    %165 = arith.addf %164, %163 : vector<2x128xf32>
    %c2_103 = arith.constant 2 : index
    %c0_104 = arith.constant 0 : index
    %166 = vector.load %arg19[%c2_103, %c0_104] : memref<4x128xf32, #tpu.memory_space<vmem>>, vector<1x128xf32>
    %c3_105 = arith.constant 3 : index
    %c0_106 = arith.constant 0 : index
    %167 = vector.load %arg19[%c3_105, %c0_106] : memref<4x128xf32, #tpu.memory_space<vmem>>, vector<1x128xf32>
    %168 = vector.extract_strided_slice %158 {offsets = [0, 128], sizes = [2, 128], strides = [1, 1]} : vector<2x256xf32> to vector<2x128xf32>
    %169 = vector.broadcast %167 : vector<1x128xf32> to vector<2x128xf32>
    %170 = arith.mulf %169, %168 : vector<2x128xf32>
    %171 = vector.broadcast %166 : vector<1x128xf32> to vector<2x128xf32>
    %172 = arith.subf %171, %170 : vector<2x128xf32>
    %c0_107 = arith.constant 0 : index
    %c0_108 = arith.constant 0 : index
    %173 = vector.load %arg21[%c0_107, %c0_108] : memref<16x2xf32, #tpu.memory_space<vmem>>, vector<16x2xf32>
    %174 = tpu.concatenate %165, %172 in 1 : vector<2x128xf32>, vector<2x128xf32> -> vector<2x256xf32>
    %cst_109 = arith.constant dense<0.000000e+00> : vector<16x256xf32>
    %175 = tpu.matmul %173, %174, %cst_109 {dimension_numbers = #tpu.dot_dimension_numbers<[1], [0], [0], [1], [0, 0, 1, 1], [], []>} : vector<16x2xf32>, vector<2x256xf32>, vector<16x256xf32> -> vector<16x256xf32>
    %176 = vector.extract_strided_slice %175 {offsets = [0, 0], sizes = [16, 128], strides = [1, 1]} : vector<16x256xf32> to vector<16x128xf32>
    %177 = arith.mulf %139, %176 : vector<16x128xf32>
    %178 = vector.extract_strided_slice %175 {offsets = [0, 128], sizes = [16, 128], strides = [1, 1]} : vector<16x256xf32> to vector<16x128xf32>
    %179 = arith.addf %177, %178 : vector<16x128xf32>
    %cst_110 = arith.constant 0.000000e+00 : f32
    %180 = vector.broadcast %cst_110 : f32 to vector<16x128xf32>
    %181 = arith.maximumf %179, %180 : vector<16x128xf32>
    %c0_111 = arith.constant 0 : index
    %c0_112 = arith.constant 0 : index
    %c0_113 = arith.constant 0 : index
    %182 = vector.load %arg24[%c0_111, %c0_112, %c0_113] : memref<1x16x128xf32, #tpu.memory_space<vmem>>, vector<1x16x128xf32>
    %183 = vector.shape_cast %182 : vector<1x16x128xf32> to vector<16x128xf32>
    %184 = vector.shape_cast %181 : vector<16x128xf32> to vector<1x16x128xf32>
    tpu.vector_store %arg24[%c0_111, %c0_112, %c0_113], %184 {strides = array<i32>} : memref<1x16x128xf32, #tpu.memory_space<vmem>>, vector<1x16x128xf32>,
    return
  }
  func.func @transform_0(%arg0: i32) -> (i32, i32, i32) {
    %c0_i32 = arith.constant 0 : i32
    %c0_i32_0 = arith.constant 0 : i32
    %c0_i32_1 = arith.constant 0 : i32
    return %arg0, %c0_i32, %c0_i32_0 : i32, i32, i32
  }
  func.func @transform_1(%arg0: i32) -> (i32, i32) {
    %c0_i32 = arith.constant 0 : i32
    %c0_i32_0 = arith.constant 0 : i32
    %c0_i32_1 = arith.constant 0 : i32
    return %c0_i32, %c0_i32_0 : i32, i32
  }
  func.func @transform_2(%arg0: i32) -> (i32, i32) {
    %c0_i32 = arith.constant 0 : i32
    %c0_i32_0 = arith.constant 0 : i32
    %c0_i32_1 = arith.constant 0 : i32
    return %c0_i32, %c0_i32_0 : i32, i32
  }
  func.func @transform_3(%arg0: i32) -> (i32, i32) {
    %c0_i32 = arith.constant 0 : i32
    %c0_i32_0 = arith.constant 0 : i32
    %c0_i32_1 = arith.constant 0 : i32
    return %c0_i32, %c0_i32_0 : i32, i32
  }
  func.func @transform_4(%arg0: i32) -> (i32, i32) {
    %c0_i32 = arith.constant 0 : i32
    %c0_i32_0 = arith.constant 0 : i32
    %c0_i32_1 = arith.constant 0 : i32
    return %c0_i32, %c0_i32_0 : i32, i32
  }
  func.func @transform_5(%arg0: i32) -> (i32, i32) {
    %c0_i32 = arith.constant 0 : i32
    %c0_i32_0 = arith.constant 0 : i32
    %c0_i32_1 = arith.constant 0 : i32
    return %c0_i32, %c0_i32_0 : i32, i32
  }
  func.func @transform_6(%arg0: i32) -> (i32, i32) {
    %c0_i32 = arith.constant 0 : i32
    %c0_i32_0 = arith.constant 0 : i32
    %c0_i32_1 = arith.constant 0 : i32
    return %c0_i32, %c0_i32_0 : i32, i32
  }
  func.func @transform_7(%arg0: i32) -> (i32, i32, i32) {
    %c0_i32 = arith.constant 0 : i32
    %c0_i32_0 = arith.constant 0 : i32
    %c0_i32_1 = arith.constant 0 : i32
    %c0_i32_2 = arith.constant 0 : i32
    return %c0_i32, %c0_i32_0, %c0_i32_1 : i32, i32, i32
  }
  func.func @transform_8(%arg0: i32) -> (i32, i32) {
    %c0_i32 = arith.constant 0 : i32
    %c0_i32_0 = arith.constant 0 : i32
    %c0_i32_1 = arith.constant 0 : i32
    return %c0_i32, %c0_i32_0 : i32, i32
  }
  func.func @transform_9(%arg0: i32) -> (i32, i32) {
    %c0_i32 = arith.constant 0 : i32
    %c0_i32_0 = arith.constant 0 : i32
    %c0_i32_1 = arith.constant 0 : i32
    return %c0_i32, %c0_i32_0 : i32, i32
  }
  func.func @transform_10(%arg0: i32) -> (i32, i32) {
    %c0_i32 = arith.constant 0 : i32
    %c0_i32_0 = arith.constant 0 : i32
    %c0_i32_1 = arith.constant 0 : i32
    return %c0_i32, %c0_i32_0 : i32, i32
  }
  func.func @transform_11(%arg0: i32) -> (i32, i32) {
    %c0_i32 = arith.constant 0 : i32
    %c0_i32_0 = arith.constant 0 : i32
    %c0_i32_1 = arith.constant 0 : i32
    return %c0_i32, %c0_i32_0 : i32, i32
  }
  func.func @transform_12(%arg0: i32) -> (i32, i32) {
    %c0_i32 = arith.constant 0 : i32
    %c0_i32_0 = arith.constant 0 : i32
    %c0_i32_1 = arith.constant 0 : i32
    return %c0_i32, %c0_i32_0 : i32, i32
  }
  func.func @transform_13(%arg0: i32) -> (i32, i32) {
    %c0_i32 = arith.constant 0 : i32
    %c0_i32_0 = arith.constant 0 : i32
    %c0_i32_1 = arith.constant 0 : i32
    return %c0_i32, %c0_i32_0 : i32, i32
  }
  func.func @transform_14(%arg0: i32) -> (i32, i32) {
    %c0_i32 = arith.constant 0 : i32
    %c0_i32_0 = arith.constant 0 : i32
    %c0_i32_1 = arith.constant 0 : i32
    return %c0_i32, %c0_i32_0 : i32, i32
  }
  func.func @transform_15(%arg0: i32) -> (i32, i32) {
    %c0_i32 = arith.constant 0 : i32
    %c0_i32_0 = arith.constant 0 : i32
    %c0_i32_1 = arith.constant 0 : i32
    return %c0_i32, %c0_i32_0 : i32, i32
  }
  func.func @transform_16(%arg0: i32) -> (i32, i32, i32) {
    %c0_i32 = arith.constant 0 : i32
    %c0_i32_0 = arith.constant 0 : i32
    %c0_i32_1 = arith.constant 0 : i32
    %c0_i32_2 = arith.constant 0 : i32
    return %c0_i32, %c0_i32_0, %c0_i32_1 : i32, i32, i32
  }
  func.func @transform_17(%arg0: i32) -> (i32, i32) {
    %c0_i32 = arith.constant 0 : i32
    %c0_i32_0 = arith.constant 0 : i32
    %c0_i32_1 = arith.constant 0 : i32
    return %c0_i32, %c0_i32_0 : i32, i32
  }
  func.func @transform_18(%arg0: i32) -> (i32, i32) {
    %c0_i32 = arith.constant 0 : i32
    %c0_i32_0 = arith.constant 0 : i32
    %c0_i32_1 = arith.constant 0 : i32
    return %c0_i32, %c0_i32_0 : i32, i32
  }
  func.func @transform_19(%arg0: i32) -> (i32, i32) {
    %c0_i32 = arith.constant 0 : i32
    %c0_i32_0 = arith.constant 0 : i32
    %c0_i32_1 = arith.constant 0 : i32
    return %c0_i32, %c0_i32_0 : i32, i32
  }
  func.func @transform_20(%arg0: i32) -> (i32, i32) {
    %c0_i32 = arith.constant 0 : i32
    %c0_i32_0 = arith.constant 0 : i32
    %c0_i32_1 = arith.constant 0 : i32
    return %c0_i32, %c0_i32_0 : i32, i32
  }
  func.func @transform_21(%arg0: i32) -> (i32, i32) {
    %c0_i32 = arith.constant 0 : i32
    %c0_i32_0 = arith.constant 0 : i32
    %c0_i32_1 = arith.constant 0 : i32
    return %c0_i32, %c0_i32_0 : i32, i32
  }
  func.func @transform_22(%arg0: i32) -> (i32, i32) {
    %c0_i32 = arith.constant 0 : i32
    %c0_i32_0 = arith.constant 0 : i32
    %c0_i32_1 = arith.constant 0 : i32
    return %c0_i32, %c0_i32_0 : i32, i32
  }
  func.func @transform_23(%arg0: i32) -> (i32, i32, i32) {
    %c0_i32 = arith.constant 0 : i32
    %c0_i32_0 = arith.constant 0 : i32
    %c0_i32_1 = arith.constant 0 : i32
    return %arg0, %c0_i32, %c0_i32_0 : i32, i32, i32
  }
}

</mosaic_0001>

<llo_original>
// kernel: tpu_custom_call.1
$region0: #{tpu_custom_call.1}
  #allocation0 [shape = 'u32[]', space=smem, size = 0x4, offset = 0x4, fixed_abs, tag = 'smem constant byte address 0x4 - core index']
  #allocation1 [shape = 'u32[144,128]{1,0:T(1,128)}', space=vmem, size = 0x12000, scoped, tag = 'internal scratch']
  %s0 = inlined_call_operand.vmem [shape: f32[1,4,64], index: 0, kind: input, shape index: {}]
  %s1 = inlined_call_operand.vmem [shape: f32[2,4], index: 1, kind: input, shape index: {}]
  %s2 = inlined_call_operand.vmem [shape: f32[4,2], index: 2, kind: input, shape index: {}]
  %s3 = inlined_call_operand.vmem [shape: f32[64,8], index: 3, kind: input, shape index: {}]
  %s4 = inlined_call_operand.vmem [shape: f32[8,64], index: 4, kind: input, shape index: {}]
  %s5 = inlined_call_operand.vmem [shape: bf16[8,4], index: 5, kind: input, shape index: {}]
  %s6 = inlined_call_operand.vmem [shape: bf16[64,128], index: 6, kind: input, shape index: {}]
  %s7 = inlined_call_operand.vmem [shape: bf16[5,8,1], index: 7, kind: input, shape index: {}]
  %s8 = inlined_call_operand.vmem [shape: bf16[640,64], index: 8, kind: input, shape index: {}]
  %s9 = inlined_call_operand.vmem [shape: f32[4,64], index: 9, kind: input, shape index: {}]
  %s10 = inlined_call_operand.vmem [shape: f32[2,8], index: 10, kind: input, shape index: {}]
  %s11 = inlined_call_operand.vmem [shape: f32[8,2], index: 11, kind: input, shape index: {}]
  %s12 = inlined_call_operand.vmem [shape: f32[128,32], index: 12, kind: input, shape index: {}]
  %s13 = inlined_call_operand.vmem [shape: f32[32,128], index: 13, kind: input, shape index: {}]
  %s14 = inlined_call_operand.vmem [shape: bf16[16,8], index: 14, kind: input, shape index: {}]
  %s15 = inlined_call_operand.vmem [shape: bf16[64,128], index: 15, kind: input, shape index: {}]
  %s16 = inlined_call_operand.vmem [shape: bf16[5,16,1], index: 16, kind: input, shape index: {}]
  %s17 = inlined_call_operand.vmem [shape: bf16[640,128], index: 17, kind: input, shape index: {}]
  %s18 = inlined_call_operand.vmem [shape: f32[4,128], index: 18, kind: input, shape index: {}]
  %s19 = inlined_call_operand.vmem [shape: f32[2,16], index: 19, kind: input, shape index: {}]
  %s20 = inlined_call_operand.vmem [shape: f32[16,2], index: 20, kind: input, shape index: {}]
  %s21 = inlined_call_operand.vmem [shape: f32[256,32], index: 21, kind: input, shape index: {}]
  %s22 = inlined_call_operand.vmem [shape: f32[32,256], index: 22, kind: input, shape index: {}]
  %s23 = inlined_call_operand.hbm [shape: f32[1,16,128], index: 23, kind: output, shape index: {}]
  %s24 = sld [smem:[#allocation0]]
  $region102: #{tpu_custom_call.1} parent=0
    _
  %s26 = ssub.s32 1, %s24
  %s27 = scalar_select 0, %s26, %s24
  $region1: #{tpu_custom_call.1} parent=0
    #allocation2 [shape = 'u8[8192]{0}', space=vmem, size = 0x2000, scoped, tag = 'output window, operand 0, single buffered']
    #allocation3 [shape = 's32[1]{0}', space=sflag, size = 0x4, scoped, tag = 'scoped memory for tpu_custom_call.1']
    %28 = vsyncpa [#allocation3], 0
    // Predicated region
    $region2: #{tpu_custom_call.1} parent=1 // pred_check
      _
    $region3: #{tpu_custom_call.1} parent=1 // pred_check_branch
      %30 = sbr.rel (0) target = $region5
    $region4: #{tpu_custom_call.1} parent=1 // pred_region
      _
    $region5: #{tpu_custom_call.1} parent=1 // pred_fallthru
      _
    // Predicated region
    $region6: #{tpu_custom_call.1} parent=1 // pred_check
      _
    $region7: #{tpu_custom_call.1} parent=1 // pred_check_branch
      %32 = sbr.rel (0) target = $region9
    $region8: #{tpu_custom_call.1} parent=1 // pred_region
      _
    $region9: #{tpu_custom_call.1} parent=1 // pred_fallthru
      _
    // Predicated region
    $region10: #{tpu_custom_call.1} parent=1 // pred_check
      _
    $region11: #{tpu_custom_call.1} parent=1 // pred_check_branch
      %34 = sbr.rel (0) target = $region13
    $region12: #{tpu_custom_call.1} parent=1 // pred_region
      _
    $region13: #{tpu_custom_call.1} parent=1 // pred_fallthru
      _
    // Predicated region
    $region14: #{tpu_custom_call.1} parent=1 // pred_check
      _
    $region15: #{tpu_custom_call.1} parent=1 // pred_check_branch
      %36 = sbr.rel (0) target = $region17
    $region16: #{tpu_custom_call.1} parent=1 // pred_region
      _
    $region17: #{tpu_custom_call.1} parent=1 // pred_fallthru
      _
    // Predicated region
    $region18: #{tpu_custom_call.1} parent=1 // pred_check
      _
    $region19: #{tpu_custom_call.1} parent=1 // pred_check_branch
      %38 = sbr.rel (0) target = $region21
    $region20: #{tpu_custom_call.1} parent=1 // pred_region
      _
    $region21: #{tpu_custom_call.1} parent=1 // pred_fallthru
      _
    // Predicated region
    $region22: #{tpu_custom_call.1} parent=1 // pred_check
      _
    $region23: #{tpu_custom_call.1} parent=1 // pred_check_branch
      %40 = sbr.rel (0) target = $region25
    $region24: #{tpu_custom_call.1} parent=1 // pred_region
      _
    $region25: #{tpu_custom_call.1} parent=1 // pred_fallthru
      _
    // Predicated region
    $region26: #{tpu_custom_call.1} parent=1 // pred_check
      _
    $region27: #{tpu_custom_call.1} parent=1 // pred_check_branch
      %42 = sbr.rel (0) target = $region29
    $region28: #{tpu_custom_call.1} parent=1 // pred_region
      _
    $region29: #{tpu_custom_call.1} parent=1 // pred_fallthru
      _
    // Predicated region
    $region30: #{tpu_custom_call.1} parent=1 // pred_check
      _
    $region31: #{tpu_custom_call.1} parent=1 // pred_check_branch
      %44 = sbr.rel (0) target = $region33
    $region32: #{tpu_custom_call.1} parent=1 // pred_region
      _
    $region33: #{tpu_custom_call.1} parent=1 // pred_fallthru
      _
    // Predicated region
    $region34: #{tpu_custom_call.1} parent=1 // pred_check
      _
    $region35: #{tpu_custom_call.1} parent=1 // pred_check_branch
      %46 = sbr.rel (0) target = $region37
    $region36: #{tpu_custom_call.1} parent=1 // pred_region
      _
    $region37: #{tpu_custom_call.1} parent=1 // pred_fallthru
      _
    // Predicated region
    $region38: #{tpu_custom_call.1} parent=1 // pred_check
      _
    $region39: #{tpu_custom_call.1} parent=1 // pred_check_branch
      %48 = sbr.rel (0) target = $region41
    $region40: #{tpu_custom_call.1} parent=1 // pred_region
      _
    $region41: #{tpu_custom_call.1} parent=1 // pred_fallthru
      _
    // Predicated region
    $region42: #{tpu_custom_call.1} parent=1 // pred_check
      _
    $region43: #{tpu_custom_call.1} parent=1 // pred_check_branch
      %50 = sbr.rel (0) target = $region45
    $region44: #{tpu_custom_call.1} parent=1 // pred_region
      _
    $region45: #{tpu_custom_call.1} parent=1 // pred_fallthru
      _
    // Predicated region
    $region46: #{tpu_custom_call.1} parent=1 // pred_check
      _
    $region47: #{tpu_custom_call.1} parent=1 // pred_check_branch
      %52 = sbr.rel (0) target = $region49
    $region48: #{tpu_custom_call.1} parent=1 // pred_region
      _
    $region49: #{tpu_custom_call.1} parent=1 // pred_fallthru
      _
    // Predicated region
    $region50: #{tpu_custom_call.1} parent=1 // pred_check
      _
    $region51: #{tpu_custom_call.1} parent=1 // pred_check_branch
      %54 = sbr.rel (0) target = $region53
    $region52: #{tpu_custom_call.1} parent=1 // pred_region
      _
    $region53: #{tpu_custom_call.1} parent=1 // pred_fallthru
      _
    // Predicated region
    $region54: #{tpu_custom_call.1} parent=1 // pred_check
      _
    $region55: #{tpu_custom_call.1} parent=1 // pred_check_branch
      %56 = sbr.rel (0) target = $region57
    $region56: #{tpu_custom_call.1} parent=1 // pred_region
      _
    $region57: #{tpu_custom_call.1} parent=1 // pred_fallthru
      _
    // Predicated region
    $region58: #{tpu_custom_call.1} parent=1 // pred_check
      _
    $region59: #{tpu_custom_call.1} parent=1 // pred_check_branch
      %58 = sbr.rel (0) target = $region61
    $region60: #{tpu_custom_call.1} parent=1 // pred_region
      _
    $region61: #{tpu_custom_call.1} parent=1 // pred_fallthru
      _
    // Predicated region
    $region62: #{tpu_custom_call.1} parent=1 // pred_check
      _
    $region63: #{tpu_custom_call.1} parent=1 // pred_check_branch
      %60 = sbr.rel (0) target = $region65
    $region64: #{tpu_custom_call.1} parent=1 // pred_region
      _
    $region65: #{tpu_custom_call.1} parent=1 // pred_fallthru
      _
    // Predicated region
    $region66: #{tpu_custom_call.1} parent=1 // pred_check
      _
    $region67: #{tpu_custom_call.1} parent=1 // pred_check_branch
      %62 = sbr.rel (0) target = $region69
    $region68: #{tpu_custom_call.1} parent=1 // pred_region
      _
    $region69: #{tpu_custom_call.1} parent=1 // pred_fallthru
      _
    // Predicated region
    $region70: #{tpu_custom_call.1} parent=1 // pred_check
      _
    $region71: #{tpu_custom_call.1} parent=1 // pred_check_branch
      %64 = sbr.rel (0) target = $region73
    $region72: #{tpu_custom_call.1} parent=1 // pred_region
      _
    $region73: #{tpu_custom_call.1} parent=1 // pred_fallthru
      _
    // Predicated region
    $region74: #{tpu_custom_call.1} parent=1 // pred_check
      _
    $region75: #{tpu_custom_call.1} parent=1 // pred_check_branch
      %66 = sbr.rel (0) target = $region77
    $region76: #{tpu_custom_call.1} parent=1 // pred_region
      _
    $region77: #{tpu_custom_call.1} parent=1 // pred_fallthru
      _
    // Predicated region
    $region78: #{tpu_custom_call.1} parent=1 // pred_check
      _
    $region79: #{tpu_custom_call.1} parent=1 // pred_check_branch
      %68 = sbr.rel (0) target = $region81
    $region80: #{tpu_custom_call.1} parent=1 // pred_region
      _
    $region81: #{tpu_custom_call.1} parent=1 // pred_fallthru
      _
    // Predicated region
    $region82: #{tpu_custom_call.1} parent=1 // pred_check
      _
    $region83: #{tpu_custom_call.1} parent=1 // pred_check_branch
      %70 = sbr.rel (0) target = $region85
    $region84: #{tpu_custom_call.1} parent=1 // pred_region
      _
    $region85: #{tpu_custom_call.1} parent=1 // pred_fallthru
      _
    // Predicated region
    $region86: #{tpu_custom_call.1} parent=1 // pred_check
      _
    $region87: #{tpu_custom_call.1} parent=1 // pred_check_branch
      %72 = sbr.rel (0) target = $region89
    $region88: #{tpu_custom_call.1} parent=1 // pred_region
      _
    $region89: #{tpu_custom_call.1} parent=1 // pred_fallthru
      _
    // Predicated region
    $region90: #{tpu_custom_call.1} parent=1 // pred_check
      _
    $region91: #{tpu_custom_call.1} parent=1 // pred_check_branch
      %74 = sbr.rel (0) target = $region93
    $region92: #{tpu_custom_call.1} parent=1 // pred_region
      _
    $region93: #{tpu_custom_call.1} parent=1 // pred_fallthru
      _
    %v76 = vld [vmem:[%s0] sm:$0xf]
    %v77 = vld [vmem:[%s1] sm:$0x3]
    %vm78 = vcmask 31744
    %v80 = vsel %vm78, %v77, 0
    %vm82 = vcmask 1043456
    %v84 = vsel %vm82, %v76, 0
    %86 = vmatprep.subr.mxu0 0.0
    %87 = vmatpush1.msra.mxu0 %v84
    %88 = vmatprep.subr.mxu0 0.0
    %89 = vmatpush1.msra.mxu0 0.0
    %90 = vmatprep.subr.mxu0 0.0
    %91 = vmatpush1.msra.mxu0 0.0
    %92 = vmatprep.subr.mxu0 0.0
    %93 = vmatpush1.msra.mxu0 0.0
    %94 = vmatprep.subr.mxu0 0.0
    %95 = vmatpush1.msra.mxu0 0.0
    %96 = vmatprep.subr.mxu0 0.0
    %97 = vmatpush1.msra.mxu0 0.0
    %98 = vmatprep.subr.mxu0 0.0
    %99 = vmatpush1.msra.mxu0 0.0
    %100 = vmatprep.subr.mxu0 0.0
    %101 = vmatpush1.msra.mxu0 0.0
    %102 = vmatprep.subr.mxu0 0.0
    %103 = vmatpush1.msra.mxu0 0.0
    %104 = vmatprep.subr.mxu0 0.0
    %105 = vmatpush1.msra.mxu0 0.0
    %106 = vmatprep.subr.mxu0 0.0
    %107 = vmatpush1.msra.mxu0 0.0
    %108 = vmatprep.subr.mxu0 0.0
    %109 = vmatpush1.msra.mxu0 0.0
    %110 = vmatprep.subr.mxu0 0.0
    %111 = vmatpush1.msra.mxu0 0.0
    %112 = vmatprep.subr.mxu0 0.0
    %113 = vmatpush1.msra.mxu0 0.0
    %114 = vmatprep.subr.mxu0 0.0
    %115 = vmatpush1.msra.mxu0 0.0
    %116 = vmatprep.subr.mxu0 0.0
    %117 = vmatpush1.msra.mxu0 0.0
    %118 = vmatprep.subr.mxu0 0.0
    %119 = vmatpush1.msra.mxu0 0.0
    %120 = vmatprep.subr.mxu0 0.0
    %121 = vmatpush1.msra.mxu0 0.0
    %122 = vmatprep.subr.mxu0 0.0
    %123 = vmatpush1.msra.mxu0 0.0
    %124 = vmatprep.subr.mxu0 0.0
    %125 = vmatpush1.msra.mxu0 0.0
    %126 = vmatprep.subr.mxu0 0.0
    %127 = vmatpush1.msra.mxu0 0.0
    %128 = vmatprep.subr.mxu0 0.0
    %129 = vmatpush1.msra.mxu0 0.0
    %130 = vmatprep.subr.mxu0 0.0
    %131 = vmatpush1.msra.mxu0 0.0
    %132 = vmatprep.subr.mxu0 0.0
    %133 = vmatpush1.msra.mxu0 0.0
    %134 = vmatprep.subr.mxu0 0.0
    %135 = vmatpush1.msra.mxu0 0.0
    %136 = vmatprep.subr.mxu0 0.0
    %137 = vmatpush1.msra.mxu0 0.0
    %138 = vmatprep.subr.mxu0 0.0
    %139 = vmatpush1.msra.mxu0 0.0
    %140 = vmatprep.subr.mxu0 0.0
    %141 = vmatpush1.msra.mxu0 0.0
    %142 = vmatprep.subr.mxu0 0.0
    %143 = vmatpush1.msra.mxu0 0.0
    %144 = vmatprep.subr.mxu0 0.0
    %145 = vmatpush1.msra.mxu0 0.0
    %146 = vmatprep.subr.mxu0 0.0
    %147 = vmatpush1.msra.mxu0 0.0
    %148 = vmatprep.subr.mxu0 0.0
    %149 = vmatpush1.msra.mxu0 0.0
    %150 = vmatprep.mubr.f32.mxu0 0.0
    %151 = vmatmul.mubr.f32.gmra.mrb[0].mxu0 %v80
    %v152 = vpop.f32.mrb[0].mxu0
    %v153 = vadd.f32 0.0, %v152
    %v154 = vpop.f32.mrb[0].mxu0
    %155 = vdwg.mxu0
    %v156 = vld [vmem:[%s3] sm:$0xff]
    %v157 = vld [vmem:[%s3 + $0x8] sm:$0xff]
    %v158 = vld [vmem:[%s3 + $0x10] sm:$0xff]
    %v159 = vld [vmem:[%s3 + $0x18] sm:$0xff]
    %v160 = vld [vmem:[%s3 + $0x20] sm:$0xff]
    %v161 = vld [vmem:[%s3 + $0x28] sm:$0xff]
    %v162 = vld [vmem:[%s3 + $0x30] sm:$0xff]
    %v163 = vld [vmem:[%s3 + $0x38] sm:$0xff]
    %vm164 = vcmask 523264
    %v166 = vsel %vm164, %v153, 0
    %168 = vmatprep.subr.mxu0 0.0
    %169 = vmatpush1.msra.mxu0 %v156
    %170 = vmatprep.subr.mxu0 0.0
    %171 = vmatpush1.msra.mxu0 %v157
    %172 = vmatprep.subr.mxu0 0.0
    %173 = vmatpush1.msra.mxu0 %v158
    %174 = vmatprep.subr.mxu0 0.0
    %175 = vmatpush1.msra.mxu0 %v159
    %176 = vmatprep.subr.mxu0 0.0
    %177 = vmatpush1.msra.mxu0 %v160
    %178 = vmatprep.subr.mxu0 0.0
    %179 = vmatpush1.msra.mxu0 %v161
    %180 = vmatprep.subr.mxu0 0.0
    %181 = vmatpush1.msra.mxu0 %v162
    %182 = vmatprep.subr.mxu0 0.0
    %183 = vmatpush1.msra.mxu0 %v163
    %184 = vmatprep.subr.mxu0 0.0
    %185 = vmatpush1.msra.mxu0 0.0
    %186 = vmatprep.subr.mxu0 0.0
    %187 = vmatpush1.msra.mxu0 0.0
    %188 = vmatprep.subr.mxu0 0.0
    %189 = vmatpush1.msra.mxu0 0.0
    %190 = vmatprep.subr.mxu0 0.0
    %191 = vmatpush1.msra.mxu0 0.0
    %192 = vmatprep.subr.mxu0 0.0
    %193 = vmatpush1.msra.mxu0 0.0
    %194 = vmatprep.subr.mxu0 0.0
    %195 = vmatpush1.msra.mxu0 0.0
    %196 = vmatprep.subr.mxu0 0.0
    %197 = vmatpush1.msra.mxu0 0.0
    %198 = vmatprep.subr.mxu0 0.0
    %199 = vmatpush1.msra.mxu0 0.0
    %200 = vmatprep.subr.mxu0 0.0
    %201 = vmatpush1.msra.mxu0 0.0
    %202 = vmatprep.subr.mxu0 0.0
    %203 = vmatpush1.msra.mxu0 0.0
    %204 = vmatprep.subr.mxu0 0.0
    %205 = vmatpush1.msra.mxu0 0.0
    %206 = vmatprep.subr.mxu0 0.0
    %207 = vmatpush1.msra.mxu0 0.0
    %208 = vmatprep.subr.mxu0 0.0
    %209 = vmatpush1.msra.mxu0 0.0
    %210 = vmatprep.subr.mxu0 0.0
    %211 = vmatpush1.msra.mxu0 0.0
    %212 = vmatprep.subr.mxu0 0.0
    %213 = vmatpush1.msra.mxu0 0.0
    %214 = vmatprep.subr.mxu0 0.0
    %215 = vmatpush1.msra.mxu0 0.0
    %216 = vmatprep.subr.mxu0 0.0
    %217 = vmatpush1.msra.mxu0 0.0
    %218 = vmatprep.subr.mxu0 0.0
    %219 = vmatpush1.msra.mxu0 0.0
    %220 = vmatprep.subr.mxu0 0.0
    %221 = vmatpush1.msra.mxu0 0.0
    %222 = vmatprep.subr.mxu0 0.0
    %223 = vmatpush1.msra.mxu0 0.0
    %224 = vmatprep.subr.mxu0 0.0
    %225 = vmatpush1.msra.mxu0 0.0
    %226 = vmatprep.subr.mxu0 0.0
    %227 = vmatpush1.msra.mxu0 0.0
    %228 = vmatprep.subr.mxu0 0.0
    %229 = vmatpush1.msra.mxu0 0.0
    %230 = vmatprep.subr.mxu0 0.0
    %231 = vmatpush1.msra.mxu0 0.0
    %232 = vmatprep.mubr.f32.mxu0 0.0
    %233 = vmatmul.mubr.f32.gmra.mrb[0].mxu0 %v166
    %v234 = vpop.f32.mrb[0].mxu0
    %v235 = vadd.f32 0.0, %v234
    %v236 = vpop.f32.mrb[0].mxu0
    %237 = vdwg.mxu0
    %v238 = vmax.f32 %v235, 0.0
    %v239 = vld [vmem:[%s4] sm:$0xff]
    %vm240 = vcmask 64512
    %v242 = vsel %vm240, %v238, 0
    %244 = vmatprep.subr.mxu0 0.0
    %245 = vmatpush1.msra.mxu0 %v239
    %246 = vmatprep.subr.mxu0 0.0
    %247 = vmatpush1.msra.mxu0 0.0
    %248 = vmatprep.subr.mxu0 0.0
    %249 = vmatpush1.msra.mxu0 0.0
    %250 = vmatprep.subr.mxu0 0.0
    %251 = vmatpush1.msra.mxu0 0.0
    %252 = vmatprep.subr.mxu0 0.0
    %253 = vmatpush1.msra.mxu0 0.0
    %254 = vmatprep.subr.mxu0 0.0
    %255 = vmatpush1.msra.mxu0 0.0
    %256 = vmatprep.subr.mxu0 0.0
    %257 = vmatpush1.msra.mxu0 0.0
    %258 = vmatprep.subr.mxu0 0.0
    %259 = vmatpush1.msra.mxu0 0.0
    %260 = vmatprep.subr.mxu0 0.0
    %261 = vmatpush1.msra.mxu0 0.0
    %262 = vmatprep.subr.mxu0 0.0
    %263 = vmatpush1.msra.mxu0 0.0
    %264 = vmatprep.subr.mxu0 0.0
    %265 = vmatpush1.msra.mxu0 0.0
    %266 = vmatprep.subr.mxu0 0.0
    %267 = vmatpush1.msra.mxu0 0.0
    %268 = vmatprep.subr.mxu0 0.0
    %269 = vmatpush1.msra.mxu0 0.0
    %270 = vmatprep.subr.mxu0 0.0
    %271 = vmatpush1.msra.mxu0 0.0
    %272 = vmatprep.subr.mxu0 0.0
    %273 = vmatpush1.msra.mxu0 0.0
    %274 = vmatprep.subr.mxu0 0.0
    %275 = vmatpush1.msra.mxu0 0.0
    %276 = vmatprep.subr.mxu0 0.0
    %277 = vmatpush1.msra.mxu0 0.0
    %278 = vmatprep.subr.mxu0 0.0
    %279 = vmatpush1.msra.mxu0 0.0
    %280 = vmatprep.subr.mxu0 0.0
    %281 = vmatpush1.msra.mxu0 0.0
    %282 = vmatprep.subr.mxu0 0.0
    %283 = vmatpush1.msra.mxu0 0.0
    %284 = vmatprep.subr.mxu0 0.0
    %285 = vmatpush1.msra.mxu0 0.0
    %286 = vmatprep.subr.mxu0 0.0
    %287 = vmatpush1.msra.mxu0 0.0
    %288 = vmatprep.subr.mxu0 0.0
    %289 = vmatpush1.msra.mxu0 0.0
    %290 = vmatprep.subr.mxu0 0.0
    %291 = vmatpush1.msra.mxu0 0.0
    %292 = vmatprep.subr.mxu0 0.0
    %293 = vmatpush1.msra.mxu0 0.0
    %294 = vmatprep.subr.mxu0 0.0
    %295 = vmatpush1.msra.mxu0 0.0
    %296 = vmatprep.subr.mxu0 0.0
    %297 = vmatpush1.msra.mxu0 0.0
    %298 = vmatprep.subr.mxu0 0.0
    %299 = vmatpush1.msra.mxu0 0.0
    %300 = vmatprep.subr.mxu0 0.0
    %301 = vmatpush1.msra.mxu0 0.0
    %302 = vmatprep.subr.mxu0 0.0
    %303 = vmatpush1.msra.mxu0 0.0
    %304 = vmatprep.subr.mxu0 0.0
    %305 = vmatpush1.msra.mxu0 0.0
    %306 = vmatprep.subr.mxu0 0.0
    %307 = vmatpush1.msra.mxu0 0.0
    %308 = vmatprep.mubr.f32.mxu0 0.0
    %309 = vmatmul.mubr.f32.gmra.mrb[0].mxu0 %v242
    %v310 = vpop.f32.mrb[0].mxu0
    %v311 = vadd.f32 0.0, %v310
    %v312 = vpop.f32.mrb[0].mxu0
    %313 = vdwg.mxu0
    %v314 = vxor.u32 %v311, 2147483648
    %v315 = vmul.f32 %v314, 1.442695
    %v316 = vpow.pop %v315
    %v317 = vadd.f32 %v316, 1.0
    %v318 = vrcp.pop %v317
    %v319 = vmul.f32 1.0, %v318
    %v320 = vld [vmem:[%s2] sm:$0xf]
    %vm321 = vcmask 15360
    %v323 = vsel %vm321, %v320, 0
    %vm325 = vcmask 1041408
    %v327 = vsel %vm325, %v319, 0
    %329 = vmatprep.subr.mxu0 0.0
    %330 = vmatpush1.msra.mxu0 %v327
    %331 = vmatprep.subr.mxu0 0.0
    %332 = vmatpush1.msra.mxu0 0.0
    %333 = vmatprep.subr.mxu0 0.0
    %334 = vmatpush1.msra.mxu0 0.0
    %335 = vmatprep.subr.mxu0 0.0
    %336 = vmatpush1.msra.mxu0 0.0
    %337 = vmatprep.subr.mxu0 0.0
    %338 = vmatpush1.msra.mxu0 0.0
    %339 = vmatprep.subr.mxu0 0.0
    %340 = vmatpush1.msra.mxu0 0.0
    %341 = vmatprep.subr.mxu0 0.0
    %342 = vmatpush1.msra.mxu0 0.0
    %343 = vmatprep.subr.mxu0 0.0
    %344 = vmatpush1.msra.mxu0 0.0
    %345 = vmatprep.subr.mxu0 0.0
    %346 = vmatpush1.msra.mxu0 0.0
    %347 = vmatprep.subr.mxu0 0.0
    %348 = vmatpush1.msra.mxu0 0.0
    %349 = vmatprep.subr.mxu0 0.0
    %350 = vmatpush1.msra.mxu0 0.0
    %351 = vmatprep.subr.mxu0 0.0
    %352 = vmatpush1.msra.mxu0 0.0
    %353 = vmatprep.subr.mxu0 0.0
    %354 = vmatpush1.msra.mxu0 0.0
    %355 = vmatprep.subr.mxu0 0.0
    %356 = vmatpush1.msra.mxu0 0.0
    %357 = vmatprep.subr.mxu0 0.0
    %358 = vmatpush1.msra.mxu0 0.0
    %359 = vmatprep.subr.mxu0 0.0
    %360 = vmatpush1.msra.mxu0 0.0
    %361 = vmatprep.subr.mxu0 0.0
    %362 = vmatpush1.msra.mxu0 0.0
    %363 = vmatprep.subr.mxu0 0.0
    %364 = vmatpush1.msra.mxu0 0.0
    %365 = vmatprep.subr.mxu0 0.0
    %366 = vmatpush1.msra.mxu0 0.0
    %367 = vmatprep.subr.mxu0 0.0
    %368 = vmatpush1.msra.mxu0 0.0
    %369 = vmatprep.subr.mxu0 0.0
    %370 = vmatpush1.msra.mxu0 0.0
    %371 = vmatprep.subr.mxu0 0.0
    %372 = vmatpush1.msra.mxu0 0.0
    %373 = vmatprep.subr.mxu0 0.0
    %374 = vmatpush1.msra.mxu0 0.0
    %375 = vmatprep.subr.mxu0 0.0
    %376 = vmatpush1.msra.mxu0 0.0
    %377 = vmatprep.subr.mxu0 0.0
    %378 = vmatpush1.msra.mxu0 0.0
    %379 = vmatprep.subr.mxu0 0.0
    %380 = vmatpush1.msra.mxu0 0.0
    %381 = vmatprep.subr.mxu0 0.0
    %382 = vmatpush1.msra.mxu0 0.0
    %383 = vmatprep.subr.mxu0 0.0
    %384 = vmatpush1.msra.mxu0 0.0
    %385 = vmatprep.subr.mxu0 0.0
    %386 = vmatpush1.msra.mxu0 0.0
    %387 = vmatprep.subr.mxu0 0.0
    %388 = vmatpush1.msra.mxu0 0.0
    %389 = vmatprep.subr.mxu0 0.0
    %390 = vmatpush1.msra.mxu0 0.0
    %391 = vmatprep.subr.mxu0 0.0
    %392 = vmatpush1.msra.mxu0 0.0
    %393 = vmatprep.mubr.f32.mxu0 0.0
    %394 = vmatmul.mubr.f32.gmra.mrb[0].mxu0 %v323
    %v395 = vpop.f32.mrb[0].mxu0
    %v396 = vadd.f32 0.0, %v395
    %v397 = vpop.f32.mrb[0].mxu0
    %398 = vdwg.mxu0
    %v399 = vmul.f32 %v76, %v396
    %v400 = vld [vmem:[%s5] sm:$0xf]
    %v401 = vpack.c.bf16 %v399, %v399
    %v403 = vsel %vm78, %v400, 0
    %v406 = vsel %vm325, %v401, 0
    %408 = vmatprep.subr.bf16.mxu0 0
    %409 = vmatpush1.bf16.msra.mxu0 %v406
    %410 = vmatprep.subr.bf16.mxu0 0
    %411 = vmatpush1.bf16.msra.mxu0 0
    %412 = vmatprep.subr.bf16.mxu0 0
    %413 = vmatpush1.bf16.msra.mxu0 0
    %414 = vmatprep.subr.bf16.mxu0 0
    %415 = vmatpush1.bf16.msra.mxu0 0
    %416 = vmatprep.subr.bf16.mxu0 0
    %417 = vmatpush1.bf16.msra.mxu0 0
    %418 = vmatprep.subr.bf16.mxu0 0
    %419 = vmatpush1.bf16.msra.mxu0 0
    %420 = vmatprep.subr.bf16.mxu0 0
    %421 = vmatpush1.bf16.msra.mxu0 0
    %422 = vmatprep.subr.bf16.mxu0 0
    %423 = vmatpush1.bf16.msra.mxu0 0
    %424 = vmatprep.subr.bf16.mxu0 0
    %425 = vmatpush1.bf16.msra.mxu0 0
    %426 = vmatprep.subr.bf16.mxu0 0
    %427 = vmatpush1.bf16.msra.mxu0 0
    %428 = vmatprep.subr.bf16.mxu0 0
    %429 = vmatpush1.bf16.msra.mxu0 0
    %430 = vmatprep.subr.bf16.mxu0 0
    %431 = vmatpush1.bf16.msra.mxu0 0
    %432 = vmatprep.subr.bf16.mxu0 0
    %433 = vmatpush1.bf16.msra.mxu0 0
    %434 = vmatprep.subr.bf16.mxu0 0
    %435 = vmatpush1.bf16.msra.mxu0 0
    %436 = vmatprep.subr.bf16.mxu0 0
    %437 = vmatpush1.bf16.msra.mxu0 0
    %438 = vmatprep.subr.bf16.mxu0 0
    %439 = vmatpush1.bf16.msra.mxu0 0
    %440 = vmatprep.mubr.bf16.mxu0 0
    %441 = vmatmul.mubr.bf16.gmra.mrb[0].mxu0 %v403
    %v442 = vpop.f32.mrb[0].mxu0
    %v443 = vadd.f32 0.0, %v442
    %v444 = vpop.f32.mrb[0].mxu0
    %v445 = vpop.f32.mrb[0].mxu0
    %v446 = vpop.f32.mrb[0].mxu0
    %447 = vdwg.mxu0
    %v448 = vpack.c.bf16 %v443, %v443
    %v449 = vld [vmem:[%s6] sm:$0xf]
    %v450 = vld [vmem:[%s6 + $0x4] sm:$0xf]
    %v451 = vld [vmem:[%s6 + $0x8] sm:$0xf]
    %v452 = vld [vmem:[%s6 + $0xc] sm:$0xf]
    %v453 = vld [vmem:[%s6 + $0x10] sm:$0xf]
    %v454 = vld [vmem:[%s6 + $0x14] sm:$0xf]
    %v455 = vld [vmem:[%s6 + $0x18] sm:$0xf]
    %v456 = vld [vmem:[%s6 + $0x1c] sm:$0xf]
    %v465 = vunpack.c.l.b16 %v449
    %v466 = vunpack.c.l.b16 %v450
    %v467 = vunpack.c.l.b16 %v451
    %v468 = vunpack.c.l.b16 %v452
    %v469 = vunpack.c.l.b16 %v453
    %v470 = vunpack.c.l.b16 %v454
    %v471 = vunpack.c.l.b16 %v455
    %v472 = vunpack.c.l.b16 %v456
    %v473 = vpack.c.b16 %v466, %v465
    %v474 = vpack.c.b16 %v468, %v467
    %v475 = vpack.c.b16 %v470, %v469
    %v476 = vpack.c.b16 %v472, %v471
    %v482 = vsel %vm164, %v448, 0
    %484 = vmatprep.subr.bf16.mxu0 0
    %485 = vmatpush1.bf16.msra.mxu0 %v473
    %486 = vmatprep.subr.bf16.mxu0 0
    %487 = vmatpush1.bf16.msra.mxu0 %v474
    %488 = vmatprep.subr.bf16.mxu0 0
    %489 = vmatpush1.bf16.msra.mxu0 %v475
    %490 = vmatprep.subr.bf16.mxu0 0
    %491 = vmatpush1.bf16.msra.mxu0 %v476
    %492 = vmatprep.subr.bf16.mxu0 0
    %493 = vmatpush1.bf16.msra.mxu0 0
    %494 = vmatprep.subr.bf16.mxu0 0
    %495 = vmatpush1.bf16.msra.mxu0 0
    %496 = vmatprep.subr.bf16.mxu0 0
    %497 = vmatpush1.bf16.msra.mxu0 0
    %498 = vmatprep.subr.bf16.mxu0 0
    %499 = vmatpush1.bf16.msra.mxu0 0
    %500 = vmatprep.subr.bf16.mxu0 0
    %501 = vmatpush1.bf16.msra.mxu0 0
    %502 = vmatprep.subr.bf16.mxu0 0
    %503 = vmatpush1.bf16.msra.mxu0 0
    %504 = vmatprep.subr.bf16.mxu0 0
    %505 = vmatpush1.bf16.msra.mxu0 0
    %506 = vmatprep.subr.bf16.mxu0 0
    %507 = vmatpush1.bf16.msra.mxu0 0
    %508 = vmatprep.subr.bf16.mxu0 0
    %509 = vmatpush1.bf16.msra.mxu0 0
    %510 = vmatprep.subr.bf16.mxu0 0
    %511 = vmatpush1.bf16.msra.mxu0 0
    %512 = vmatprep.subr.bf16.mxu0 0
    %513 = vmatpush1.bf16.msra.mxu0 0
    %514 = vmatprep.subr.bf16.mxu0 0
    %515 = vmatpush1.bf16.msra.mxu0 0
    %516 = vmatprep.mubr.bf16.mxu0 0
    %517 = vmatmul.mubr.bf16.gmra.mrb[0].mxu0 %v482
    %v518 = vpop.f32.mrb[0].mxu0
    %v519 = vadd.f32 0.0, %v518
    %v520 = vpop.f32.mrb[0].mxu0
    %v521 = vpop.f32.mrb[0].mxu0
    %v522 = vpop.f32.mrb[0].mxu0
    %523 = vdwg.mxu0
    %v524 = vpack.c.bf16 %v519, %v519
    %v526 = vrot.slane %v524, 7
    %vm527 = vcmask 1040384
    %v530 = vsel %vm527, 0, %v526
    %vm531 = vcmask 1044480
    %v532 = vsel %vm531, %v530, 0
    %v534 = vld [vmem:[%s7] sm:$0xf]
    %536 = vset.pattern.permute.xlu0 0
    %537 = vperm.xlu0 %536, %v534
    %v538 = vpop.permute.xlu0 %537
    %v541 = vunpack.c.l.s4 839922192
    %v542 = vunpack.c.0.s8 %v541
    %v543 = vlaneseq
    %v544 = vshrl.u32 %v543, 7
    %v545 = vsub.s32 %v542, %v544
    %v546 = vrot.slane %v538, %v545
    %v547 = vmul.bf16 %v532, %v546
    %s548 = scalar_lea.vmem %s7, 4
    %v549 = vld [vmem:[%s548] sm:$0xf]
    %551 = vset.pattern.permute.xlu0 0
    %552 = vperm.xlu0 %551, %v549
    %v553 = vpop.permute.xlu0 %552
    %v556 = vunpack.c.l.s4 839922192
    %v557 = vunpack.c.0.s8 %v556
    %v558 = vlaneseq
    %v559 = vshrl.u32 %v558, 7
    %v560 = vsub.s32 %v557, %v559
    %v561 = vrot.slane %v553, %v560
    %v563 = vunpack.c.l.b16 %v561
    %v564 = vpack.c.b16 %v563, %v563
    %v566 = vshrl.u32 %v564, 16
    %v568 = vrot.slane %v566, 7
    %v569 = vshll.u32 %v564, 16
    %v571 = vor.u32 %v568, %v569
    %v573 = vmul.bf16 %v532, %v571
    %s574 = scalar_lea.vmem %s7, 8
    %v575 = vld [vmem:[%s574] sm:$0xf]
    %577 = vset.pattern.permute.xlu0 0
    %578 = vperm.xlu0 %577, %v575
    %v579 = vpop.permute.xlu0 %578
    %v582 = vunpack.c.l.s4 839922192
    %v583 = vunpack.c.0.s8 %v582
    %v584 = vlaneseq
    %v585 = vshrl.u32 %v584, 7
    %v586 = vsub.s32 %v583, %v585
    %v587 = vrot.slane %v579, %v586
    %v589 = vunpack.c.l.b16 %v587
    %v590 = vpack.c.b16 %v589, %v589
    %v591 = vrot.slane %v590, 7
    %v593 = vmul.bf16 %v532, %v591
    %s594 = scalar_lea.vmem %s7, 12
    %v595 = vld [vmem:[%s594] sm:$0xf]
    %597 = vset.pattern.permute.xlu0 0
    %598 = vperm.xlu0 %597, %v595
    %v599 = vpop.permute.xlu0 %598
    %v602 = vunpack.c.l.s4 839922192
    %v603 = vunpack.c.0.s8 %v602
    %v604 = vlaneseq
    %v605 = vshrl.u32 %v604, 7
    %v606 = vsub.s32 %v603, %v605
    %v607 = vrot.slane %v599, %v606
    %v609 = vunpack.c.l.b16 %v607
    %v610 = vpack.c.b16 %v609, %v609
    %v612 = vshrl.u32 %v610, 16
    %v614 = vrot.slane %v612, 6
    %v615 = vshll.u32 %v610, 16
    %v617 = vrot.slane %v615, 7
    %v618 = vor.u32 %v614, %v617
    %v620 = vmul.bf16 %v532, %v618
    %s621 = scalar_lea.vmem %s7, 16
    %v622 = vld [vmem:[%s621] sm:$0xf]
    %624 = vset.pattern.permute.xlu0 0
    %625 = vperm.xlu0 %624, %v622
    %v626 = vpop.permute.xlu0 %625
    %v629 = vunpack.c.l.s4 839922192
    %v630 = vunpack.c.0.s8 %v629
    %v631 = vlaneseq
    %v632 = vshrl.u32 %v631, 7
    %v633 = vsub.s32 %v630, %v632
    %v634 = vrot.slane %v626, %v633
    %v636 = vunpack.c.l.b16 %v634
    %v637 = vpack.c.b16 %v636, %v636
    %v638 = vrot.slane %v637, 6
    %v640 = vmul.bf16 %v532, %v638
    %v642 = vshrl.u32 %v573, 16
    %v644 = vshll.u32 %v573, 16
    %v646 = vrot.slane %v644, 1
    %v647 = vor.u32 %v642, %v646
    %v650 = vrot.slane %v593, 1
    %v653 = vshrl.u32 %v620, 16
    %v655 = vrot.slane %v653, 1
    %v656 = vshll.u32 %v620, 16
    %v658 = vrot.slane %v656, 2
    %v659 = vor.u32 %v655, %v658
    %v662 = vrot.slane %v640, 2
    %v664 = vld [vmem:[%s8] sm:$0xf]
    %v665 = vld [vmem:[%s8 + $0x4] sm:$0xf]
    %v666 = vld [vmem:[%s8 + $0x8] sm:$0xf]
    %v667 = vld [vmem:[%s8 + $0xc] sm:$0xf]
    %v668 = vld [vmem:[%s8 + $0x10] sm:$0xf]
    %v669 = vld [vmem:[%s8 + $0x14] sm:$0xf]
    %v670 = vld [vmem:[%s8 + $0x18] sm:$0xf]
    %v671 = vld [vmem:[%s8 + $0x1c] sm:$0xf]
    %v672 = vld [vmem:[%s8 + $0x20] sm:$0xf]
    %v673 = vld [vmem:[%s8 + $0x24] sm:$0xf]
    %v674 = vld [vmem:[%s8 + $0x28] sm:$0xf]
    %v675 = vld [vmem:[%s8 + $0x2c] sm:$0xf]
    %v676 = vld [vmem:[%s8 + $0x30] sm:$0xf]
    %v677 = vld [vmem:[%s8 + $0x34] sm:$0xf]
    %v678 = vld [vmem:[%s8 + $0x38] sm:$0xf]
    %v679 = vld [vmem:[%s8 + $0x3c] sm:$0xf]
    %v680 = vld [vmem:[%s8 + $0x40] sm:$0xf]
    %v681 = vld [vmem:[%s8 + $0x44] sm:$0xf]
    %v682 = vld [vmem:[%s8 + $0x48] sm:$0xf]
    %v683 = vld [vmem:[%s8 + $0x4c] sm:$0xf]
    %v684 = vld [vmem:[%s8 + $0x50] sm:$0xf]
    %v685 = vld [vmem:[%s8 + $0x54] sm:$0xf]
    %v686 = vld [vmem:[%s8 + $0x58] sm:$0xf]
    %v687 = vld [vmem:[%s8 + $0x5c] sm:$0xf]
    %v688 = vld [vmem:[%s8 + $0x60] sm:$0xf]
    %v689 = vld [vmem:[%s8 + $0x64] sm:$0xf]
    %v690 = vld [vmem:[%s8 + $0x68] sm:$0xf]
    %v691 = vld [vmem:[%s8 + $0x6c] sm:$0xf]
    %v692 = vld [vmem:[%s8 + $0x70] sm:$0xf]
    %v693 = vld [vmem:[%s8 + $0x74] sm:$0xf]
    %v694 = vld [vmem:[%s8 + $0x78] sm:$0xf]
    %v695 = vld [vmem:[%s8 + $0x7c] sm:$0xf]
    %v696 = vld [vmem:[%s8 + $0x80] sm:$0xf]
    %v697 = vld [vmem:[%s8 + $0x84] sm:$0xf]
    %v698 = vld [vmem:[%s8 + $0x88] sm:$0xf]
    %v699 = vld [vmem:[%s8 + $0x8c] sm:$0xf]
    %v700 = vld [vmem:[%s8 + $0x90] sm:$0xf]
    %v701 = vld [vmem:[%s8 + $0x94] sm:$0xf]
    %v702 = vld [vmem:[%s8 + $0x98] sm:$0xf]
    %v703 = vld [vmem:[%s8 + $0x9c] sm:$0xf]
    %v704 = vld [vmem:[%s8 + $0xa0] sm:$0xf]
    %v705 = vld [vmem:[%s8 + $0xa4] sm:$0xf]
    %v706 = vld [vmem:[%s8 + $0xa8] sm:$0xf]
    %v707 = vld [vmem:[%s8 + $0xac] sm:$0xf]
    %v708 = vld [vmem:[%s8 + $0xb0] sm:$0xf]
    %v709 = vld [vmem:[%s8 + $0xb4] sm:$0xf]
    %v710 = vld [vmem:[%s8 + $0xb8] sm:$0xf]
    %v711 = vld [vmem:[%s8 + $0xbc] sm:$0xf]
    %v712 = vld [vmem:[%s8 + $0xc0] sm:$0xf]
    %v713 = vld [vmem:[%s8 + $0xc4] sm:$0xf]
    %v714 = vld [vmem:[%s8 + $0xc8] sm:$0xf]
    %v715 = vld [vmem:[%s8 + $0xcc] sm:$0xf]
    %v716 = vld [vmem:[%s8 + $0xd0] sm:$0xf]
    %v717 = vld [vmem:[%s8 + $0xd4] sm:$0xf]
    %v718 = vld [vmem:[%s8 + $0xd8] sm:$0xf]
    %v719 = vld [vmem:[%s8 + $0xdc] sm:$0xf]
    %v720 = vld [vmem:[%s8 + $0xe0] sm:$0xf]
    %v721 = vld [vmem:[%s8 + $0xe4] sm:$0xf]
    %v722 = vld [vmem:[%s8 + $0xe8] sm:$0xf]
    %v723 = vld [vmem:[%s8 + $0xec] sm:$0xf]
    %v724 = vld [vmem:[%s8 + $0xf0] sm:$0xf]
    %v725 = vld [vmem:[%s8 + $0xf4] sm:$0xf]
    %v726 = vld [vmem:[%s8 + $0xf8] sm:$0xf]
    %v727 = vld [vmem:[%s8 + $0xfc] sm:$0xf]
    %v728 = vld [vmem:[%s8 + $0x100] sm:$0xf]
    %v729 = vld [vmem:[%s8 + $0x104] sm:$0xf]
    %v730 = vld [vmem:[%s8 + $0x108] sm:$0xf]
    %v731 = vld [vmem:[%s8 + $0x10c] sm:$0xf]
    %v732 = vld [vmem:[%s8 + $0x110] sm:$0xf]
    %v733 = vld [vmem:[%s8 + $0x114] sm:$0xf]
    %v734 = vld [vmem:[%s8 + $0x118] sm:$0xf]
    %v735 = vld [vmem:[%s8 + $0x11c] sm:$0xf]
    %v736 = vld [vmem:[%s8 + $0x120] sm:$0xf]
    %v737 = vld [vmem:[%s8 + $0x124] sm:$0xf]
    %v738 = vld [vmem:[%s8 + $0x128] sm:$0xf]
    %v739 = vld [vmem:[%s8 + $0x12c] sm:$0xf]
    %v740 = vld [vmem:[%s8 + $0x130] sm:$0xf]
    %v741 = vld [vmem:[%s8 + $0x134] sm:$0xf]
    %v742 = vld [vmem:[%s8 + $0x138] sm:$0xf]
    %v743 = vld [vmem:[%s8 + $0x13c] sm:$0xf]
    %v744 = vld [vmem:[%s9] sm:$0x1]
    %v745 = vlaneseq
    %v746 = vshrl.u32 %v745, 7
    %v747 = vsub.s32 0, %v746
    %v748 = vrot.slane %v744, %v747
    %v829 = vunpack.c.l.b16 %v664
    %v830 = vunpack.c.l.b16 %v665
    %v831 = vunpack.c.l.b16 %v666
    %v832 = vunpack.c.l.b16 %v667
    %v833 = vunpack.c.l.b16 %v668
    %v834 = vunpack.c.l.b16 %v669
    %v835 = vunpack.c.l.b16 %v670
    %v836 = vunpack.c.l.b16 %v671
    %v837 = vunpack.c.l.b16 %v672
    %v838 = vunpack.c.l.b16 %v673
    %v839 = vunpack.c.l.b16 %v674
    %v840 = vunpack.c.l.b16 %v675
    %v841 = vunpack.c.l.b16 %v676
    %v842 = vunpack.c.l.b16 %v677
    %v843 = vunpack.c.l.b16 %v678
    %v844 = vunpack.c.l.b16 %v679
    %v845 = vunpack.c.l.b16 %v680
    %v846 = vunpack.c.l.b16 %v681
    %v847 = vunpack.c.l.b16 %v682
    %v848 = vunpack.c.l.b16 %v683
    %v849 = vunpack.c.l.b16 %v684
    %v850 = vunpack.c.l.b16 %v685
    %v851 = vunpack.c.l.b16 %v686
    %v852 = vunpack.c.l.b16 %v687
    %v853 = vunpack.c.l.b16 %v688
    %v854 = vunpack.c.l.b16 %v689
    %v855 = vunpack.c.l.b16 %v690
    %v856 = vunpack.c.l.b16 %v691
    %v857 = vunpack.c.l.b16 %v692
    %v858 = vunpack.c.l.b16 %v693
    %v859 = vunpack.c.l.b16 %v694
    %v860 = vunpack.c.l.b16 %v695
    %v861 = vunpack.c.l.b16 %v696
    %v862 = vunpack.c.l.b16 %v697
    %v863 = vunpack.c.l.b16 %v698
    %v864 = vunpack.c.l.b16 %v699
    %v865 = vunpack.c.l.b16 %v700
    %v866 = vunpack.c.l.b16 %v701
    %v867 = vunpack.c.l.b16 %v702
    %v868 = vunpack.c.l.b16 %v703
    %v869 = vunpack.c.l.b16 %v704
    %v870 = vunpack.c.l.b16 %v705
    %v871 = vunpack.c.l.b16 %v706
    %v872 = vunpack.c.l.b16 %v707
    %v873 = vunpack.c.l.b16 %v708
    %v874 = vunpack.c.l.b16 %v709
    %v875 = vunpack.c.l.b16 %v710
    %v876 = vunpack.c.l.b16 %v711
    %v877 = vunpack.c.l.b16 %v712
    %v878 = vunpack.c.l.b16 %v713
    %v879 = vunpack.c.l.b16 %v714
    %v880 = vunpack.c.l.b16 %v715
    %v881 = vunpack.c.l.b16 %v716
    %v882 = vunpack.c.l.b16 %v717
    %v883 = vunpack.c.l.b16 %v718
    %v884 = vunpack.c.l.b16 %v719
    %v885 = vunpack.c.l.b16 %v720
    %v886 = vunpack.c.l.b16 %v721
    %v887 = vunpack.c.l.b16 %v722
    %v888 = vunpack.c.l.b16 %v723
    %v889 = vunpack.c.l.b16 %v724
    %v890 = vunpack.c.l.b16 %v725
    %v891 = vunpack.c.l.b16 %v726
    %v892 = vunpack.c.l.b16 %v727
    %v893 = vunpack.c.l.b16 %v728
    %v894 = vunpack.c.l.b16 %v729
    %v895 = vunpack.c.l.b16 %v730
    %v896 = vunpack.c.l.b16 %v731
    %v897 = vunpack.c.l.b16 %v732
    %v898 = vunpack.c.l.b16 %v733
    %v899 = vunpack.c.l.b16 %v734
    %v900 = vunpack.c.l.b16 %v735
    %v901 = vunpack.c.l.b16 %v736
    %v902 = vunpack.c.l.b16 %v737
    %v903 = vunpack.c.l.b16 %v738
    %v904 = vunpack.c.l.b16 %v739
    %v905 = vunpack.c.l.b16 %v740
    %v906 = vunpack.c.l.b16 %v741
    %v907 = vunpack.c.l.b16 %v742
    %v908 = vunpack.c.l.b16 %v743
    %v909 = vpack.c.b16 %v830, %v829
    %v910 = vpack.c.b16 %v832, %v831
    %v911 = vpack.c.b16 %v834, %v833
    %v912 = vpack.c.b16 %v836, %v835
    %v913 = vpack.c.b16 %v838, %v837
    %v914 = vpack.c.b16 %v840, %v839
    %v915 = vpack.c.b16 %v842, %v841
    %v916 = vpack.c.b16 %v844, %v843
    %v917 = vpack.c.b16 %v846, %v845
    %v918 = vpack.c.b16 %v848, %v847
    %v919 = vpack.c.b16 %v850, %v849
    %v920 = vpack.c.b16 %v852, %v851
    %v921 = vpack.c.b16 %v854, %v853
    %v922 = vpack.c.b16 %v856, %v855
    %v923 = vpack.c.b16 %v858, %v857
    %v924 = vpack.c.b16 %v860, %v859
    %v925 = vpack.c.b16 %v862, %v861
    %v926 = vpack.c.b16 %v864, %v863
    %v927 = vpack.c.b16 %v866, %v865
    %v928 = vpack.c.b16 %v868, %v867
    %v929 = vpack.c.b16 %v870, %v869
    %v930 = vpack.c.b16 %v872, %v871
    %v931 = vpack.c.b16 %v874, %v873
    %v932 = vpack.c.b16 %v876, %v875
    %v933 = vpack.c.b16 %v878, %v877
    %v934 = vpack.c.b16 %v880, %v879
    %v935 = vpack.c.b16 %v882, %v881
    %v936 = vpack.c.b16 %v884, %v883
    %v937 = vpack.c.b16 %v886, %v885
    %v938 = vpack.c.b16 %v888, %v887
    %v939 = vpack.c.b16 %v890, %v889
    %v940 = vpack.c.b16 %v892, %v891
    %v941 = vpack.c.b16 %v894, %v893
    %v942 = vpack.c.b16 %v896, %v895
    %v943 = vpack.c.b16 %v898, %v897
    %v944 = vpack.c.b16 %v900, %v899
    %v945 = vpack.c.b16 %v902, %v901
    %v946 = vpack.c.b16 %v904, %v903
    %v947 = vpack.c.b16 %v906, %v905
    %v948 = vpack.c.b16 %v908, %v907
    %989 = vmatprep.subr.bf16.mxu0 0
    %990 = vmatpush1.bf16.msra.mxu0 %v909
    %991 = vmatprep.subr.bf16.mxu0 0
    %992 = vmatpush1.bf16.msra.mxu0 %v910
    %993 = vmatprep.subr.bf16.mxu0 0
    %994 = vmatpush1.bf16.msra.mxu0 %v911
    %995 = vmatprep.subr.bf16.mxu0 0
    %996 = vmatpush1.bf16.msra.mxu0 %v912
    %997 = vmatprep.subr.bf16.mxu0 0
    %998 = vmatpush1.bf16.msra.mxu0 %v913
    %999 = vmatprep.subr.bf16.mxu0 0
    %1000 = vmatpush1.bf16.msra.mxu0 %v914
    %1001 = vmatprep.subr.bf16.mxu0 0
    %1002 = vmatpush1.bf16.msra.mxu0 %v915
    %1003 = vmatprep.subr.bf16.mxu0 0
    %1004 = vmatpush1.bf16.msra.mxu0 %v916
    %1005 = vmatprep.subr.bf16.mxu0 0
    %1006 = vmatpush1.bf16.msra.mxu0 %v917
    %1007 = vmatprep.subr.bf16.mxu0 0
    %1008 = vmatpush1.bf16.msra.mxu0 %v918
    %1009 = vmatprep.subr.bf16.mxu0 0
    %1010 = vmatpush1.bf16.msra.mxu0 %v919
    %1011 = vmatprep.subr.bf16.mxu0 0
    %1012 = vmatpush1.bf16.msra.mxu0 %v920
    %1013 = vmatprep.subr.bf16.mxu0 0
    %1014 = vmatpush1.bf16.msra.mxu0 %v921
    %1015 = vmatprep.subr.bf16.mxu0 0
    %1016 = vmatpush1.bf16.msra.mxu0 %v922
    %1017 = vmatprep.subr.bf16.mxu0 0
    %1018 = vmatpush1.bf16.msra.mxu0 %v923
    %1019 = vmatprep.subr.bf16.mxu0 0
    %1020 = vmatpush1.bf16.msra.mxu0 %v924
    %1021 = vmatprep.mubr.bf16.mxu0 %v647
    %1022 = vmatmul.mubr.bf16.gmra.mrb[0].mxu0 %v547
    %v1023 = vpop.f32.mrb[0].mxu0
    %v1024 = vadd.f32 %v748, %v1023
    %v1025 = vpop.f32.mrb[0].mxu0
    %v1026 = vpop.f32.mrb[0].mxu0
    %v1027 = vpop.f32.mrb[0].mxu0
    %1028 = vdwg.mxu0
    %1029 = vmatprep.subr.bf16.mxu0 0
    %1030 = vmatpush1.bf16.msra.mxu0 %v925
    %1031 = vmatprep.subr.bf16.mxu0 0
    %1032 = vmatpush1.bf16.msra.mxu0 %v926
    %1033 = vmatprep.subr.bf16.mxu0 0
    %1034 = vmatpush1.bf16.msra.mxu0 %v927
    %1035 = vmatprep.subr.bf16.mxu0 0
    %1036 = vmatpush1.bf16.msra.mxu0 %v928
    %1037 = vmatprep.subr.bf16.mxu0 0
    %1038 = vmatpush1.bf16.msra.mxu0 %v929
    %1039 = vmatprep.subr.bf16.mxu0 0
    %1040 = vmatpush1.bf16.msra.mxu0 %v930
    %1041 = vmatprep.subr.bf16.mxu0 0
    %1042 = vmatpush1.bf16.msra.mxu0 %v931
    %1043 = vmatprep.subr.bf16.mxu0 0
    %1044 = vmatpush1.bf16.msra.mxu0 %v932
    %1045 = vmatprep.subr.bf16.mxu0 0
    %1046 = vmatpush1.bf16.msra.mxu0 %v933
    %1047 = vmatprep.subr.bf16.mxu0 0
    %1048 = vmatpush1.bf16.msra.mxu0 %v934
    %1049 = vmatprep.subr.bf16.mxu0 0
    %1050 = vmatpush1.bf16.msra.mxu0 %v935
    %1051 = vmatprep.subr.bf16.mxu0 0
    %1052 = vmatpush1.bf16.msra.mxu0 %v936
    %1053 = vmatprep.subr.bf16.mxu0 0
    %1054 = vmatpush1.bf16.msra.mxu0 %v937
    %1055 = vmatprep.subr.bf16.mxu0 0
    %1056 = vmatpush1.bf16.msra.mxu0 %v938
    %1057 = vmatprep.subr.bf16.mxu0 0
    %1058 = vmatpush1.bf16.msra.mxu0 %v939
    %1059 = vmatprep.subr.bf16.mxu0 0
    %1060 = vmatpush1.bf16.msra.mxu0 %v940
    %1061 = vmatprep.mubr.bf16.mxu0 %v659
    %1062 = vmatmul.mubr.bf16.gmra.mrb[0].mxu0 %v650
    %v1063 = vpop.f32.mrb[0].mxu0
    %v1064 = vadd.f32 %v1024, %v1063
    %v1065 = vpop.f32.mrb[0].mxu0
    %v1066 = vpop.f32.mrb[0].mxu0
    %v1067 = vpop.f32.mrb[0].mxu0
    %1068 = vdwg.mxu0
    %1069 = vmatprep.subr.bf16.mxu0 0
    %1070 = vmatpush1.bf16.msra.mxu0 %v941
    %1071 = vmatprep.subr.bf16.mxu0 0
    %1072 = vmatpush1.bf16.msra.mxu0 %v942
    %1073 = vmatprep.subr.bf16.mxu0 0
    %1074 = vmatpush1.bf16.msra.mxu0 %v943
    %1075 = vmatprep.subr.bf16.mxu0 0
    %1076 = vmatpush1.bf16.msra.mxu0 %v944
    %1077 = vmatprep.subr.bf16.mxu0 0
    %1078 = vmatpush1.bf16.msra.mxu0 %v945
    %1079 = vmatprep.subr.bf16.mxu0 0
    %1080 = vmatpush1.bf16.msra.mxu0 %v946
    %1081 = vmatprep.subr.bf16.mxu0 0
    %1082 = vmatpush1.bf16.msra.mxu0 %v947
    %1083 = vmatprep.subr.bf16.mxu0 0
    %1084 = vmatpush1.bf16.msra.mxu0 %v948
    %1085 = vmatprep.subr.bf16.mxu0 0
    %1086 = vmatpush1.bf16.msra.mxu0 0
    %1087 = vmatprep.subr.bf16.mxu0 0
    %1088 = vmatpush1.bf16.msra.mxu0 0
    %1089 = vmatprep.subr.bf16.mxu0 0
    %1090 = vmatpush1.bf16.msra.mxu0 0
    %1091 = vmatprep.subr.bf16.mxu0 0
    %1092 = vmatpush1.bf16.msra.mxu0 0
    %1093 = vmatprep.subr.bf16.mxu0 0
    %1094 = vmatpush1.bf16.msra.mxu0 0
    %1095 = vmatprep.subr.bf16.mxu0 0
    %1096 = vmatpush1.bf16.msra.mxu0 0
    %1097 = vmatprep.subr.bf16.mxu0 0
    %1098 = vmatpush1.bf16.msra.mxu0 0
    %1099 = vmatprep.subr.bf16.mxu0 0
    %1100 = vmatpush1.bf16.msra.mxu0 0
    %1101 = vmatprep.mubr.bf16.mxu0 0
    %1102 = vmatmul.mubr.bf16.gmra.mrb[0].mxu0 %v662
    %v1103 = vpop.f32.mrb[0].mxu0
    %v1104 = vadd.f32 %v1064, %v1103
    %v1105 = vpop.f32.mrb[0].mxu0
    %v1106 = vpop.f32.mrb[0].mxu0
    %v1107 = vpop.f32.mrb[0].mxu0
    %1108 = vdwg.mxu0
    %v1109 = vmul.f32 %v1104, %v1104
    %1111 = vrot.lane.b32.xlu0 %v1109, 64
    %v1112 = vpop.permute.xlu0 %1111
    %v1114 = vsel %vm164, %v1104, %v1112
    %v1115 = vld [vmem:[%s10] sm:$0x3]
    %v1117 = vsel %vm240, %v1115, 0
    %1119 = vmatprep.subr.mxu0 0.0
    %1120 = vmatpush1.msra.mxu0 %v1114
    %1121 = vmatprep.subr.mxu0 0.0
    %1122 = vmatpush1.msra.mxu0 0.0
    %1123 = vmatprep.subr.mxu0 0.0
    %1124 = vmatpush1.msra.mxu0 0.0
    %1125 = vmatprep.subr.mxu0 0.0
    %1126 = vmatpush1.msra.mxu0 0.0
    %1127 = vmatprep.subr.mxu0 0.0
    %1128 = vmatpush1.msra.mxu0 0.0
    %1129 = vmatprep.subr.mxu0 0.0
    %1130 = vmatpush1.msra.mxu0 0.0
    %1131 = vmatprep.subr.mxu0 0.0
    %1132 = vmatpush1.msra.mxu0 0.0
    %1133 = vmatprep.subr.mxu0 0.0
    %1134 = vmatpush1.msra.mxu0 0.0
    %1135 = vmatprep.subr.mxu0 0.0
    %1136 = vmatpush1.msra.mxu0 0.0
    %1137 = vmatprep.subr.mxu0 0.0
    %1138 = vmatpush1.msra.mxu0 0.0
    %1139 = vmatprep.subr.mxu0 0.0
    %1140 = vmatpush1.msra.mxu0 0.0
    %1141 = vmatprep.subr.mxu0 0.0
    %1142 = vmatpush1.msra.mxu0 0.0
    %1143 = vmatprep.subr.mxu0 0.0
    %1144 = vmatpush1.msra.mxu0 0.0
    %1145 = vmatprep.subr.mxu0 0.0
    %1146 = vmatpush1.msra.mxu0 0.0
    %1147 = vmatprep.subr.mxu0 0.0
    %1148 = vmatpush1.msra.mxu0 0.0
    %1149 = vmatprep.subr.mxu0 0.0
    %1150 = vmatpush1.msra.mxu0 0.0
    %1151 = vmatprep.subr.mxu0 0.0
    %1152 = vmatpush1.msra.mxu0 0.0
    %1153 = vmatprep.subr.mxu0 0.0
    %1154 = vmatpush1.msra.mxu0 0.0
    %1155 = vmatprep.subr.mxu0 0.0
    %1156 = vmatpush1.msra.mxu0 0.0
    %1157 = vmatprep.subr.mxu0 0.0
    %1158 = vmatpush1.msra.mxu0 0.0
    %1159 = vmatprep.subr.mxu0 0.0
    %1160 = vmatpush1.msra.mxu0 0.0
    %1161 = vmatprep.subr.mxu0 0.0
    %1162 = vmatpush1.msra.mxu0 0.0
    %1163 = vmatprep.subr.mxu0 0.0
    %1164 = vmatpush1.msra.mxu0 0.0
    %1165 = vmatprep.subr.mxu0 0.0
    %1166 = vmatpush1.msra.mxu0 0.0
    %1167 = vmatprep.subr.mxu0 0.0
    %1168 = vmatpush1.msra.mxu0 0.0
    %1169 = vmatprep.subr.mxu0 0.0
    %1170 = vmatpush1.msra.mxu0 0.0
    %1171 = vmatprep.subr.mxu0 0.0
    %1172 = vmatpush1.msra.mxu0 0.0
    %1173 = vmatprep.subr.mxu0 0.0
    %1174 = vmatpush1.msra.mxu0 0.0
    %1175 = vmatprep.subr.mxu0 0.0
    %1176 = vmatpush1.msra.mxu0 0.0
    %1177 = vmatprep.subr.mxu0 0.0
    %1178 = vmatpush1.msra.mxu0 0.0
    %1179 = vmatprep.subr.mxu0 0.0
    %1180 = vmatpush1.msra.mxu0 0.0
    %1181 = vmatprep.subr.mxu0 0.0
    %1182 = vmatpush1.msra.mxu0 0.0
    %1183 = vmatprep.mubr.f32.mxu0 0.0
    %1184 = vmatmul.mubr.f32.gmra.mrb[0].mxu0 %v1117
    %v1185 = vpop.f32.mrb[0].mxu0
    %v1186 = vadd.f32 0.0, %v1185
    %v1187 = vpop.f32.mrb[0].mxu0
    %1188 = vdwg.mxu0
    %v1189 = vld [vmem:[%s12] sm:$0xff]
    %v1190 = vld [vmem:[%s12 + $0x8] sm:$0xff]
    %v1191 = vld [vmem:[%s12 + $0x10] sm:$0xff]
    %v1192 = vld [vmem:[%s12 + $0x18] sm:$0xff]
    %v1193 = vld [vmem:[%s12 + $0x20] sm:$0xff]
    %v1194 = vld [vmem:[%s12 + $0x28] sm:$0xff]
    %v1195 = vld [vmem:[%s12 + $0x30] sm:$0xff]
    %v1196 = vld [vmem:[%s12 + $0x38] sm:$0xff]
    %v1197 = vld [vmem:[%s12 + $0x40] sm:$0xff]
    %v1198 = vld [vmem:[%s12 + $0x48] sm:$0xff]
    %v1199 = vld [vmem:[%s12 + $0x50] sm:$0xff]
    %v1200 = vld [vmem:[%s12 + $0x58] sm:$0xff]
    %v1201 = vld [vmem:[%s12 + $0x60] sm:$0xff]
    %v1202 = vld [vmem:[%s12 + $0x68] sm:$0xff]
    %v1203 = vld [vmem:[%s12 + $0x70] sm:$0xff]
    %v1204 = vld [vmem:[%s12 + $0x78] sm:$0xff]
    %1205 = vmatprep.subr.mxu0 0.0
    %1206 = vmatpush1.msra.mxu0 %v1189
    %1207 = vmatprep.subr.mxu0 0.0
    %1208 = vmatpush1.msra.mxu0 %v1190
    %1209 = vmatprep.subr.mxu0 0.0
    %1210 = vmatpush1.msra.mxu0 %v1191
    %1211 = vmatprep.subr.mxu0 0.0
    %1212 = vmatpush1.msra.mxu0 %v1192
    %1213 = vmatprep.subr.mxu0 0.0
    %1214 = vmatpush1.msra.mxu0 %v1193
    %1215 = vmatprep.subr.mxu0 0.0
    %1216 = vmatpush1.msra.mxu0 %v1194
    %1217 = vmatprep.subr.mxu0 0.0
    %1218 = vmatpush1.msra.mxu0 %v1195
    %1219 = vmatprep.subr.mxu0 0.0
    %1220 = vmatpush1.msra.mxu0 %v1196
    %1221 = vmatprep.subr.mxu0 0.0
    %1222 = vmatpush1.msra.mxu0 %v1197
    %1223 = vmatprep.subr.mxu0 0.0
    %1224 = vmatpush1.msra.mxu0 %v1198
    %1225 = vmatprep.subr.mxu0 0.0
    %1226 = vmatpush1.msra.mxu0 %v1199
    %1227 = vmatprep.subr.mxu0 0.0
    %1228 = vmatpush1.msra.mxu0 %v1200
    %1229 = vmatprep.subr.mxu0 0.0
    %1230 = vmatpush1.msra.mxu0 %v1201
    %1231 = vmatprep.subr.mxu0 0.0
    %1232 = vmatpush1.msra.mxu0 %v1202
    %1233 = vmatprep.subr.mxu0 0.0
    %1234 = vmatpush1.msra.mxu0 %v1203
    %1235 = vmatprep.subr.mxu0 0.0
    %1236 = vmatpush1.msra.mxu0 %v1204
    %1237 = vmatprep.subr.mxu0 0.0
    %1238 = vmatpush1.msra.mxu0 0.0
    %1239 = vmatprep.subr.mxu0 0.0
    %1240 = vmatpush1.msra.mxu0 0.0
    %1241 = vmatprep.subr.mxu0 0.0
    %1242 = vmatpush1.msra.mxu0 0.0
    %1243 = vmatprep.subr.mxu0 0.0
    %1244 = vmatpush1.msra.mxu0 0.0
    %1245 = vmatprep.subr.mxu0 0.0
    %1246 = vmatpush1.msra.mxu0 0.0
    %1247 = vmatprep.subr.mxu0 0.0
    %1248 = vmatpush1.msra.mxu0 0.0
    %1249 = vmatprep.subr.mxu0 0.0
    %1250 = vmatpush1.msra.mxu0 0.0
    %1251 = vmatprep.subr.mxu0 0.0
    %1252 = vmatpush1.msra.mxu0 0.0
    %1253 = vmatprep.subr.mxu0 0.0
    %1254 = vmatpush1.msra.mxu0 0.0
    %1255 = vmatprep.subr.mxu0 0.0
    %1256 = vmatpush1.msra.mxu0 0.0
    %1257 = vmatprep.subr.mxu0 0.0
    %1258 = vmatpush1.msra.mxu0 0.0
    %1259 = vmatprep.subr.mxu0 0.0
    %1260 = vmatpush1.msra.mxu0 0.0
    %1261 = vmatprep.subr.mxu0 0.0
    %1262 = vmatpush1.msra.mxu0 0.0
    %1263 = vmatprep.subr.mxu0 0.0
    %1264 = vmatpush1.msra.mxu0 0.0
    %1265 = vmatprep.subr.mxu0 0.0
    %1266 = vmatpush1.msra.mxu0 0.0
    %1267 = vmatprep.subr.mxu0 0.0
    %1268 = vmatpush1.msra.mxu0 0.0
    %1269 = vmatprep.mubr.f32.mxu0 0.0
    %1270 = vmatmul.mubr.f32.gmra.mrb[0].mxu0 %v1186
    %v1271 = vpop.f32.mrb[0].mxu0
    %v1272 = vadd.f32 0.0, %v1271
    %v1273 = vpop.f32.mrb[0].mxu0
    %1274 = vdwg.mxu0
    %v1275 = vmul.f32 %v1272, %v1272
    %1277 = vrot.lane.b32.xlu0 %v1275, 16
    %v1278 = vpop.permute.xlu0 %1277
    %v1280 = vsub.f32 %v1272, %v1278
    %v1281 = vmax.f32 %v1280, 0.0
    %v1282 = vadd.f32 %v1281, 1e-05
    %v1283 = vrsqrt.pop %v1282
    %1285 = vrot.lane.b32.xlu0 %v1283, 112
    %v1286 = vpop.permute.xlu0 %1285
    %v1288 = vmul.f32 %v1272, %v1286
    %1290 = vrot.lane.b32.xlu0 %v1288, 16
    %v1291 = vpop.permute.xlu0 %1290
    %vm1293 = vcmask 130048
    %v1294 = vsel %vm1293, %v1286, %v1291
    %v1295 = vld [vmem:[%s13] sm:$0xff]
    %v1296 = vld [vmem:[%s13 + $0x8] sm:$0xff]
    %v1297 = vld [vmem:[%s13 + $0x10] sm:$0xff]
    %v1298 = vld [vmem:[%s13 + $0x18] sm:$0xff]
    %vm1299 = vcmask 261120
    %v1301 = vsel %vm1299, %v1294, 0
    %1303 = vmatprep.subr.mxu0 0.0
    %1304 = vmatpush1.msra.mxu0 %v1295
    %1305 = vmatprep.subr.mxu0 0.0
    %1306 = vmatpush1.msra.mxu0 %v1296
    %1307 = vmatprep.subr.mxu0 0.0
    %1308 = vmatpush1.msra.mxu0 %v1297
    %1309 = vmatprep.subr.mxu0 0.0
    %1310 = vmatpush1.msra.mxu0 %v1298
    %1311 = vmatprep.subr.mxu0 0.0
    %1312 = vmatpush1.msra.mxu0 0.0
    %1313 = vmatprep.subr.mxu0 0.0
    %1314 = vmatpush1.msra.mxu0 0.0
    %1315 = vmatprep.subr.mxu0 0.0
    %1316 = vmatpush1.msra.mxu0 0.0
    %1317 = vmatprep.subr.mxu0 0.0
    %1318 = vmatpush1.msra.mxu0 0.0
    %1319 = vmatprep.subr.mxu0 0.0
    %1320 = vmatpush1.msra.mxu0 0.0
    %1321 = vmatprep.subr.mxu0 0.0
    %1322 = vmatpush1.msra.mxu0 0.0
    %1323 = vmatprep.subr.mxu0 0.0
    %1324 = vmatpush1.msra.mxu0 0.0
    %1325 = vmatprep.subr.mxu0 0.0
    %1326 = vmatpush1.msra.mxu0 0.0
    %1327 = vmatprep.subr.mxu0 0.0
    %1328 = vmatpush1.msra.mxu0 0.0
    %1329 = vmatprep.subr.mxu0 0.0
    %1330 = vmatpush1.msra.mxu0 0.0
    %1331 = vmatprep.subr.mxu0 0.0
    %1332 = vmatpush1.msra.mxu0 0.0
    %1333 = vmatprep.subr.mxu0 0.0
    %1334 = vmatpush1.msra.mxu0 0.0
    %1335 = vmatprep.subr.mxu0 0.0
    %1336 = vmatpush1.msra.mxu0 0.0
    %1337 = vmatprep.subr.mxu0 0.0
    %1338 = vmatpush1.msra.mxu0 0.0
    %1339 = vmatprep.subr.mxu0 0.0
    %1340 = vmatpush1.msra.mxu0 0.0
    %1341 = vmatprep.subr.mxu0 0.0
    %1342 = vmatpush1.msra.mxu0 0.0
    %1343 = vmatprep.subr.mxu0 0.0
    %1344 = vmatpush1.msra.mxu0 0.0
    %1345 = vmatprep.subr.mxu0 0.0
    %1346 = vmatpush1.msra.mxu0 0.0
    %1347 = vmatprep.subr.mxu0 0.0
    %1348 = vmatpush1.msra.mxu0 0.0
    %1349 = vmatprep.subr.mxu0 0.0
    %1350 = vmatpush1.msra.mxu0 0.0
    %1351 = vmatprep.subr.mxu0 0.0
    %1352 = vmatpush1.msra.mxu0 0.0
    %1353 = vmatprep.subr.mxu0 0.0
    %1354 = vmatpush1.msra.mxu0 0.0
    %1355 = vmatprep.subr.mxu0 0.0
    %1356 = vmatpush1.msra.mxu0 0.0
    %1357 = vmatprep.subr.mxu0 0.0
    %1358 = vmatpush1.msra.mxu0 0.0
    %1359 = vmatprep.subr.mxu0 0.0
    %1360 = vmatpush1.msra.mxu0 0.0
    %1361 = vmatprep.subr.mxu0 0.0
    %1362 = vmatpush1.msra.mxu0 0.0
    %1363 = vmatprep.subr.mxu0 0.0
    %1364 = vmatpush1.msra.mxu0 0.0
    %1365 = vmatprep.subr.mxu0 0.0
    %1366 = vmatpush1.msra.mxu0 0.0
    %1367 = vmatprep.mubr.f32.mxu0 0.0
    %1368 = vmatmul.mubr.f32.gmra.mrb[0].mxu0 %v1301
    %v1369 = vpop.f32.mrb[0].mxu0
    %v1370 = vadd.f32 0.0, %v1369
    %v1371 = vpop.f32.mrb[0].mxu0
    %1372 = vdwg.mxu0
    %v1373 = vld [vmem:[%s9 + $0x1] sm:$0x1]
    %v1374 = vld [vmem:[%s9 + $0x3] sm:$0x1]
    %v1375 = vlaneseq
    %v1376 = vshrl.u32 %v1375, 7
    %v1377 = vsub.s32 0, %v1376
    %v1378 = vrot.slane %v1374, %v1377
    %v1379 = vmul.f32 %v1378, %v1370
    %v1380 = vlaneseq
    %v1381 = vshrl.u32 %v1380, 7
    %v1382 = vsub.s32 0, %v1381
    %v1383 = vrot.slane %v1373, %v1382
    %v1384 = vadd.f32 %v1383, %v1379
    %v1385 = vld [vmem:[%s9 + $0x2] sm:$0x1]
    %1387 = vrot.lane.b32.xlu0 %v1370, 64
    %v1388 = vpop.permute.xlu0 %1387
    %v1390 = vmul.f32 %v1378, %v1388
    %v1391 = vlaneseq
    %v1392 = vshrl.u32 %v1391, 7
    %v1393 = vsub.s32 0, %v1392
    %v1394 = vrot.slane %v1385, %v1393
    %v1395 = vsub.f32 %v1394, %v1390
    %v1396 = vld [vmem:[%s11] sm:$0xff]
    %1398 = vrot.lane.b32.xlu0 %v1395, 64
    %v1399 = vpop.permute.xlu0 %1398
    %v1401 = vsel %vm164, %v1384, %v1399
    %v1403 = vsel %vm321, %v1396, 0
    %v1406 = vsel %vm325, %v1401, 0
    %1408 = vmatprep.subr.mxu0 0.0
    %1409 = vmatpush1.msra.mxu0 %v1406
    %1410 = vmatprep.subr.mxu0 0.0
    %1411 = vmatpush1.msra.mxu0 0.0
    %1412 = vmatprep.subr.mxu0 0.0
    %1413 = vmatpush1.msra.mxu0 0.0
    %1414 = vmatprep.subr.mxu0 0.0
    %1415 = vmatpush1.msra.mxu0 0.0
    %1416 = vmatprep.subr.mxu0 0.0
    %1417 = vmatpush1.msra.mxu0 0.0
    %1418 = vmatprep.subr.mxu0 0.0
    %1419 = vmatpush1.msra.mxu0 0.0
    %1420 = vmatprep.subr.mxu0 0.0
    %1421 = vmatpush1.msra.mxu0 0.0
    %1422 = vmatprep.subr.mxu0 0.0
    %1423 = vmatpush1.msra.mxu0 0.0
    %1424 = vmatprep.subr.mxu0 0.0
    %1425 = vmatpush1.msra.mxu0 0.0
    %1426 = vmatprep.subr.mxu0 0.0
    %1427 = vmatpush1.msra.mxu0 0.0
    %1428 = vmatprep.subr.mxu0 0.0
    %1429 = vmatpush1.msra.mxu0 0.0
    %1430 = vmatprep.subr.mxu0 0.0
    %1431 = vmatpush1.msra.mxu0 0.0
    %1432 = vmatprep.subr.mxu0 0.0
    %1433 = vmatpush1.msra.mxu0 0.0
    %1434 = vmatprep.subr.mxu0 0.0
    %1435 = vmatpush1.msra.mxu0 0.0
    %1436 = vmatprep.subr.mxu0 0.0
    %1437 = vmatpush1.msra.mxu0 0.0
    %1438 = vmatprep.subr.mxu0 0.0
    %1439 = vmatpush1.msra.mxu0 0.0
    %1440 = vmatprep.subr.mxu0 0.0
    %1441 = vmatpush1.msra.mxu0 0.0
    %1442 = vmatprep.subr.mxu0 0.0
    %1443 = vmatpush1.msra.mxu0 0.0
    %1444 = vmatprep.subr.mxu0 0.0
    %1445 = vmatpush1.msra.mxu0 0.0
    %1446 = vmatprep.subr.mxu0 0.0
    %1447 = vmatpush1.msra.mxu0 0.0
    %1448 = vmatprep.subr.mxu0 0.0
    %1449 = vmatpush1.msra.mxu0 0.0
    %1450 = vmatprep.subr.mxu0 0.0
    %1451 = vmatpush1.msra.mxu0 0.0
    %1452 = vmatprep.subr.mxu0 0.0
    %1453 = vmatpush1.msra.mxu0 0.0
    %1454 = vmatprep.subr.mxu0 0.0
    %1455 = vmatpush1.msra.mxu0 0.0
    %1456 = vmatprep.subr.mxu0 0.0
    %1457 = vmatpush1.msra.mxu0 0.0
    %1458 = vmatprep.subr.mxu0 0.0
    %1459 = vmatpush1.msra.mxu0 0.0
    %1460 = vmatprep.subr.mxu0 0.0
    %1461 = vmatpush1.msra.mxu0 0.0
    %1462 = vmatprep.subr.mxu0 0.0
    %1463 = vmatpush1.msra.mxu0 0.0
    %1464 = vmatprep.subr.mxu0 0.0
    %1465 = vmatpush1.msra.mxu0 0.0
    %1466 = vmatprep.subr.mxu0 0.0
    %1467 = vmatpush1.msra.mxu0 0.0
    %1468 = vmatprep.subr.mxu0 0.0
    %1469 = vmatpush1.msra.mxu0 0.0
    %1470 = vmatprep.subr.mxu0 0.0
    %1471 = vmatpush1.msra.mxu0 0.0
    %1472 = vmatprep.mubr.f32.mxu0 0.0
    %1473 = vmatmul.mubr.f32.gmra.mrb[0].mxu0 %v1403
    %v1474 = vpop.f32.mrb[0].mxu0
    %v1475 = vadd.f32 0.0, %v1474
    %v1476 = vpop.f32.mrb[0].mxu0
    %1477 = vdwg.mxu0
    %v1478 = vmul.f32 %v1104, %v1475
    %1480 = vrot.lane.b32.xlu0 %v1475, 64
    %v1481 = vpop.permute.xlu0 %1480
    %v1483 = vadd.f32 %v1478, %v1481
    %v1484 = vmax.f32 %v1483, 0.0
    %v1485 = vld [vmem:[%s14] sm:$0xf]
    %v1486 = vld [vmem:[%s14 + $0x4] sm:$0xf]
    %v1487 = vpack.c.bf16 %v1484, %v1484
    %v1490 = vunpack.c.l.b16 %v1485
    %v1491 = vunpack.c.l.b16 %v1486
    %v1492 = vpack.c.b16 %v1491, %v1490
    %v1494 = vsel %vm240, %v1492, 0
    %v1497 = vsel %vm82, %v1487, 0
    %1499 = vmatprep.subr.bf16.mxu0 0
    %1500 = vmatpush1.bf16.msra.mxu0 %v1497
    %1501 = vmatprep.subr.bf16.mxu0 0
    %1502 = vmatpush1.bf16.msra.mxu0 0
    %1503 = vmatprep.subr.bf16.mxu0 0
    %1504 = vmatpush1.bf16.msra.mxu0 0
    %1505 = vmatprep.subr.bf16.mxu0 0
    %1506 = vmatpush1.bf16.msra.mxu0 0
    %1507 = vmatprep.subr.bf16.mxu0 0
    %1508 = vmatpush1.bf16.msra.mxu0 0
    %1509 = vmatprep.subr.bf16.mxu0 0
    %1510 = vmatpush1.bf16.msra.mxu0 0
    %1511 = vmatprep.subr.bf16.mxu0 0
    %1512 = vmatpush1.bf16.msra.mxu0 0
    %1513 = vmatprep.subr.bf16.mxu0 0
    %1514 = vmatpush1.bf16.msra.mxu0 0
    %1515 = vmatprep.subr.bf16.mxu0 0
    %1516 = vmatpush1.bf16.msra.mxu0 0
    %1517 = vmatprep.subr.bf16.mxu0 0
    %1518 = vmatpush1.bf16.msra.mxu0 0
    %1519 = vmatprep.subr.bf16.mxu0 0
    %1520 = vmatpush1.bf16.msra.mxu0 0
    %1521 = vmatprep.subr.bf16.mxu0 0
    %1522 = vmatpush1.bf16.msra.mxu0 0
    %1523 = vmatprep.subr.bf16.mxu0 0
    %1524 = vmatpush1.bf16.msra.mxu0 0
    %1525 = vmatprep.subr.bf16.mxu0 0
    %1526 = vmatpush1.bf16.msra.mxu0 0
    %1527 = vmatprep.subr.bf16.mxu0 0
    %1528 = vmatpush1.bf16.msra.mxu0 0
    %1529 = vmatprep.subr.bf16.mxu0 0
    %1530 = vmatpush1.bf16.msra.mxu0 0
    %1531 = vmatprep.mubr.bf16.mxu0 0
    %1532 = vmatmul.mubr.bf16.gmra.mrb[0].mxu0 %v1494
    %v1533 = vpop.f32.mrb[0].mxu0
    %v1534 = vadd.f32 0.0, %v1533
    %v1535 = vpop.f32.mrb[0].mxu0
    %v1536 = vpop.f32.mrb[0].mxu0
    %v1537 = vadd.f32 0.0, %v1536
    %v1538 = vpop.f32.mrb[0].mxu0
    %1539 = vdwg.mxu0
    %v1540 = vpack.c.bf16 %v1537, %v1534
    %v1541 = vld [vmem:[%s15] sm:$0xf]
    %v1542 = vld [vmem:[%s15 + $0x4] sm:$0xf]
    %v1543 = vld [vmem:[%s15 + $0x8] sm:$0xf]
    %v1544 = vld [vmem:[%s15 + $0xc] sm:$0xf]
    %v1545 = vld [vmem:[%s15 + $0x10] sm:$0xf]
    %v1546 = vld [vmem:[%s15 + $0x14] sm:$0xf]
    %v1547 = vld [vmem:[%s15 + $0x18] sm:$0xf]
    %v1548 = vld [vmem:[%s15 + $0x1c] sm:$0xf]
    %v1557 = vunpack.c.l.b16 %v1541
    %v1558 = vunpack.c.l.b16 %v1542
    %v1559 = vunpack.c.l.b16 %v1543
    %v1560 = vunpack.c.l.b16 %v1544
    %v1561 = vunpack.c.l.b16 %v1545
    %v1562 = vunpack.c.l.b16 %v1546
    %v1563 = vunpack.c.l.b16 %v1547
    %v1564 = vunpack.c.l.b16 %v1548
    %v1565 = vpack.c.b16 %v1558, %v1557
    %v1566 = vpack.c.b16 %v1560, %v1559
    %v1567 = vpack.c.b16 %v1562, %v1561
    %v1568 = vpack.c.b16 %v1564, %v1563
    %v1574 = vsel %vm164, %v1540, 0
    %1576 = vmatprep.subr.bf16.mxu0 0
    %1577 = vmatpush1.bf16.msra.mxu0 %v1565
    %1578 = vmatprep.subr.bf16.mxu0 0
    %1579 = vmatpush1.bf16.msra.mxu0 %v1566
    %1580 = vmatprep.subr.bf16.mxu0 0
    %1581 = vmatpush1.bf16.msra.mxu0 %v1567
    %1582 = vmatprep.subr.bf16.mxu0 0
    %1583 = vmatpush1.bf16.msra.mxu0 %v1568
    %1584 = vmatprep.subr.bf16.mxu0 0
    %1585 = vmatpush1.bf16.msra.mxu0 0
    %1586 = vmatprep.subr.bf16.mxu0 0
    %1587 = vmatpush1.bf16.msra.mxu0 0
    %1588 = vmatprep.subr.bf16.mxu0 0
    %1589 = vmatpush1.bf16.msra.mxu0 0
    %1590 = vmatprep.subr.bf16.mxu0 0
    %1591 = vmatpush1.bf16.msra.mxu0 0
    %1592 = vmatprep.subr.bf16.mxu0 0
    %1593 = vmatpush1.bf16.msra.mxu0 0
    %1594 = vmatprep.subr.bf16.mxu0 0
    %1595 = vmatpush1.bf16.msra.mxu0 0
    %1596 = vmatprep.subr.bf16.mxu0 0
    %1597 = vmatpush1.bf16.msra.mxu0 0
    %1598 = vmatprep.subr.bf16.mxu0 0
    %1599 = vmatpush1.bf16.msra.mxu0 0
    %1600 = vmatprep.subr.bf16.mxu0 0
    %1601 = vmatpush1.bf16.msra.mxu0 0
    %1602 = vmatprep.subr.bf16.mxu0 0
    %1603 = vmatpush1.bf16.msra.mxu0 0
    %1604 = vmatprep.subr.bf16.mxu0 0
    %1605 = vmatpush1.bf16.msra.mxu0 0
    %1606 = vmatprep.subr.bf16.mxu0 0
    %1607 = vmatpush1.bf16.msra.mxu0 0
    %1608 = vmatprep.mubr.bf16.mxu0 0
    %1609 = vmatmul.mubr.bf16.gmra.mrb[0].mxu0 %v1574
    %v1610 = vpop.f32.mrb[0].mxu0
    %v1611 = vadd.f32 0.0, %v1610
    %v1612 = vpop.f32.mrb[0].mxu0
    %v1613 = vpop.f32.mrb[0].mxu0
    %v1614 = vadd.f32 0.0, %v1613
    %v1615 = vpop.f32.mrb[0].mxu0
    %1616 = vdwg.mxu0
    %v1617 = vpack.c.bf16 %v1614, %v1611
    %v1619 = vrot.slane %v1617, 7
    %v1621 = vsel %vm527, 0, %v1619
    %v1623 = vsel %vm527, %v1619, 0
    %v1625 = vld [vmem:[%s16] sm:$0xf]
    %v1626 = vld [vmem:[%s16 + $0x4] sm:$0xf]
    %1628 = vset.pattern.permute.xlu0 0
    %1629 = vperm.xlu0 %1628, %v1625
    %v1630 = vpop.permute.xlu0 %1629
    %v1633 = vunpack.c.l.s4 839922192
    %v1634 = vunpack.c.0.s8 %v1633
    %v1635 = vlaneseq
    %v1636 = vshrl.u32 %v1635, 7
    %v1637 = vsub.s32 %v1634, %v1636
    %v1638 = vrot.slane %v1630, %v1637
    %1640 = vset.pattern.permute.xlu0 0
    %1641 = vperm.xlu0 %1640, %v1626
    %v1642 = vpop.permute.xlu0 %1641
    %v1645 = vunpack.c.l.s4 839922192
    %v1646 = vunpack.c.0.s8 %v1645
    %v1647 = vlaneseq
    %v1648 = vshrl.u32 %v1647, 7
    %v1649 = vsub.s32 %v1646, %v1648
    %v1650 = vrot.slane %v1642, %v1649
    %v1653 = vunpack.c.l.b16 %v1638
    %v1654 = vunpack.c.l.b16 %v1650
    %v1655 = vpack.c.b16 %v1654, %v1653
    %v1657 = vmul.bf16 %v1621, %v1655
    %s1658 = scalar_lea.vmem %s16, 8
    %v1659 = vld [vmem:[%s1658] sm:$0xf]
    %v1660 = vld [vmem:[%s1658 + $0x4] sm:$0xf]
    %1662 = vset.pattern.permute.xlu0 0
    %1663 = vperm.xlu0 %1662, %v1659
    %v1664 = vpop.permute.xlu0 %1663
    %v1667 = vunpack.c.l.s4 839922192
    %v1668 = vunpack.c.0.s8 %v1667
    %v1669 = vlaneseq
    %v1670 = vshrl.u32 %v1669, 7
    %v1671 = vsub.s32 %v1668, %v1670
    %v1672 = vrot.slane %v1664, %v1671
    %1674 = vset.pattern.permute.xlu0 0
    %1675 = vperm.xlu0 %1674, %v1660
    %v1676 = vpop.permute.xlu0 %1675
    %v1679 = vunpack.c.l.s4 839922192
    %v1680 = vunpack.c.0.s8 %v1679
    %v1681 = vlaneseq
    %v1682 = vshrl.u32 %v1681, 7
    %v1683 = vsub.s32 %v1680, %v1682
    %v1684 = vrot.slane %v1676, %v1683
    %v1687 = vunpack.c.l.b16 %v1672
    %v1688 = vunpack.c.l.b16 %v1684
    %v1689 = vpack.c.b16 %v1688, %v1687
    %v1691 = vshrl.u32 %v1689, 16
    %v1693 = vrot.slane %v1691, 7
    %v1694 = vshll.u32 %v1689, 16
    %v1696 = vor.u32 %v1693, %v1694
    %v1699 = vmul.bf16 %v1621, %v1696
    %v1700 = vmul.bf16 %v1623, %v1693
    %s1701 = scalar_lea.vmem %s16, 16
    %v1702 = vld [vmem:[%s1701] sm:$0xf]
    %v1703 = vld [vmem:[%s1701 + $0x4] sm:$0xf]
    %1705 = vset.pattern.permute.xlu0 0
    %1706 = vperm.xlu0 %1705, %v1702
    %v1707 = vpop.permute.xlu0 %1706
    %v1710 = vunpack.c.l.s4 839922192
    %v1711 = vunpack.c.0.s8 %v1710
    %v1712 = vlaneseq
    %v1713 = vshrl.u32 %v1712, 7
    %v1714 = vsub.s32 %v1711, %v1713
    %v1715 = vrot.slane %v1707, %v1714
    %1717 = vset.pattern.permute.xlu0 0
    %1718 = vperm.xlu0 %1717, %v1703
    %v1719 = vpop.permute.xlu0 %1718
    %v1722 = vunpack.c.l.s4 839922192
    %v1723 = vunpack.c.0.s8 %v1722
    %v1724 = vlaneseq
    %v1725 = vshrl.u32 %v1724, 7
    %v1726 = vsub.s32 %v1723, %v1725
    %v1727 = vrot.slane %v1719, %v1726
    %v1730 = vunpack.c.l.b16 %v1715
    %v1731 = vunpack.c.l.b16 %v1727
    %v1732 = vpack.c.b16 %v1731, %v1730
    %v1733 = vrot.slane %v1732, 7
    %v1735 = vmul.bf16 %v1621, %v1733
    %v1736 = vmul.bf16 %v1623, %v1733
    %s1737 = scalar_lea.vmem %s16, 24
    %v1738 = vld [vmem:[%s1737] sm:$0xf]
    %v1739 = vld [vmem:[%s1737 + $0x4] sm:$0xf]
    %1741 = vset.pattern.permute.xlu0 0
    %1742 = vperm.xlu0 %1741, %v1738
    %v1743 = vpop.permute.xlu0 %1742
    %v1746 = vunpack.c.l.s4 839922192
    %v1747 = vunpack.c.0.s8 %v1746
    %v1748 = vlaneseq
    %v1749 = vshrl.u32 %v1748, 7
    %v1750 = vsub.s32 %v1747, %v1749
    %v1751 = vrot.slane %v1743, %v1750
    %1753 = vset.pattern.permute.xlu0 0
    %1754 = vperm.xlu0 %1753, %v1739
    %v1755 = vpop.permute.xlu0 %1754
    %v1758 = vunpack.c.l.s4 839922192
    %v1759 = vunpack.c.0.s8 %v1758
    %v1760 = vlaneseq
    %v1761 = vshrl.u32 %v1760, 7
    %v1762 = vsub.s32 %v1759, %v1761
    %v1763 = vrot.slane %v1755, %v1762
    %v1766 = vunpack.c.l.b16 %v1751
    %v1767 = vunpack.c.l.b16 %v1763
    %v1768 = vpack.c.b16 %v1767, %v1766
    %v1770 = vshrl.u32 %v1768, 16
    %v1772 = vrot.slane %v1770, 6
    %v1773 = vshll.u32 %v1768, 16
    %v1775 = vrot.slane %v1773, 7
    %v1776 = vor.u32 %v1772, %v1775
    %v1778 = vmul.bf16 %v1621, %v1776
    %v1779 = vmul.bf16 %v1623, %v1776
    %s1780 = scalar_lea.vmem %s16, 32
    %v1781 = vld [vmem:[%s1780] sm:$0xf]
    %v1782 = vld [vmem:[%s1780 + $0x4] sm:$0xf]
    %1784 = vset.pattern.permute.xlu0 0
    %1785 = vperm.xlu0 %1784, %v1781
    %v1786 = vpop.permute.xlu0 %1785
    %v1789 = vunpack.c.l.s4 839922192
    %v1790 = vunpack.c.0.s8 %v1789
    %v1791 = vlaneseq
    %v1792 = vshrl.u32 %v1791, 7
    %v1793 = vsub.s32 %v1790, %v1792
    %v1794 = vrot.slane %v1786, %v1793
    %1796 = vset.pattern.permute.xlu0 0
    %1797 = vperm.xlu0 %1796, %v1782
    %v1798 = vpop.permute.xlu0 %1797
    %v1801 = vunpack.c.l.s4 839922192
    %v1802 = vunpack.c.0.s8 %v1801
    %v1803 = vlaneseq
    %v1804 = vshrl.u32 %v1803, 7
    %v1805 = vsub.s32 %v1802, %v1804
    %v1806 = vrot.slane %v1798, %v1805
    %v1809 = vunpack.c.l.b16 %v1794
    %v1810 = vunpack.c.l.b16 %v1806
    %v1811 = vpack.c.b16 %v1810, %v1809
    %v1812 = vrot.slane %v1811, 6
    %v1814 = vmul.bf16 %v1621, %v1812
    %v1815 = vmul.bf16 %v1623, %v1812
    %vm1816 = vsmask.f32 7424
    %v1818 = vshrl.u32 %v1699, 16
    %v1820 = vshll.u32 %v1699, 16
    %v1822 = vrot.slane %v1820, 1
    %v1823 = vor.u32 %v1818, %v1822
    %v1825 = vshll.u32 %v1700, 16
    %v1827 = vrot.slane %v1825, 1
    %v1828 = vsel %vm1816, %v1823, %v1827
    %vm1832 = vcmask 1046528
    %v1833 = vrot.slane %v1735, 1
    %v1834 = vrot.slane %v1736, 1
    %v1835 = vsel %vm1832, %v1833, %v1834
    %vm1837 = vsmask.f32 6400
    %v1839 = vshrl.u32 %v1778, 16
    %v1841 = vrot.slane %v1839, 1
    %v1842 = vshll.u32 %v1778, 16
    %v1844 = vrot.slane %v1842, 2
    %v1845 = vor.u32 %v1841, %v1844
    %v1847 = vshrl.u32 %v1779, 16
    %v1849 = vrot.slane %v1847, 1
    %v1850 = vshll.u32 %v1779, 16
    %v1852 = vrot.slane %v1850, 2
    %v1853 = vor.u32 %v1849, %v1852
    %v1854 = vsel %vm1837, %v1845, %v1853
    %vm1858 = vcmask 1045504
    %v1859 = vrot.slane %v1814, 2
    %v1860 = vrot.slane %v1815, 2
    %v1861 = vsel %vm1858, %v1859, %v1860
    %v1863 = vld [vmem:[%s17] sm:$0xf]
    %v1864 = vld [vmem:[%s17 + $0x4] sm:$0xf]
    %v1865 = vld [vmem:[%s17 + $0x8] sm:$0xf]
    %v1866 = vld [vmem:[%s17 + $0xc] sm:$0xf]
    %v1867 = vld [vmem:[%s17 + $0x10] sm:$0xf]
    %v1868 = vld [vmem:[%s17 + $0x14] sm:$0xf]
    %v1869 = vld [vmem:[%s17 + $0x18] sm:$0xf]
    %v1870 = vld [vmem:[%s17 + $0x1c] sm:$0xf]
    %v1871 = vld [vmem:[%s17 + $0x20] sm:$0xf]
    %v1872 = vld [vmem:[%s17 + $0x24] sm:$0xf]
    %v1873 = vld [vmem:[%s17 + $0x28] sm:$0xf]
    %v1874 = vld [vmem:[%s17 + $0x2c] sm:$0xf]
    %v1875 = vld [vmem:[%s17 + $0x30] sm:$0xf]
    %v1876 = vld [vmem:[%s17 + $0x34] sm:$0xf]
    %v1877 = vld [vmem:[%s17 + $0x38] sm:$0xf]
    %v1878 = vld [vmem:[%s17 + $0x3c] sm:$0xf]
    %v1879 = vld [vmem:[%s17 + $0x40] sm:$0xf]
    %v1880 = vld [vmem:[%s17 + $0x44] sm:$0xf]
    %v1881 = vld [vmem:[%s17 + $0x48] sm:$0xf]
    %v1882 = vld [vmem:[%s17 + $0x4c] sm:$0xf]
    %v1883 = vld [vmem:[%s17 + $0x50] sm:$0xf]
    %v1884 = vld [vmem:[%s17 + $0x54] sm:$0xf]
    %v1885 = vld [vmem:[%s17 + $0x58] sm:$0xf]
    %v1886 = vld [vmem:[%s17 + $0x5c] sm:$0xf]
    %v1887 = vld [vmem:[%s17 + $0x60] sm:$0xf]
    %v1888 = vld [vmem:[%s17 + $0x64] sm:$0xf]
    %v1889 = vld [vmem:[%s17 + $0x68] sm:$0xf]
    %v1890 = vld [vmem:[%s17 + $0x6c] sm:$0xf]
    %v1891 = vld [vmem:[%s17 + $0x70] sm:$0xf]
    %v1892 = vld [vmem:[%s17 + $0x74] sm:$0xf]
    %v1893 = vld [vmem:[%s17 + $0x78] sm:$0xf]
    %v1894 = vld [vmem:[%s17 + $0x7c] sm:$0xf]
    %v1895 = vld [vmem:[%s17 + $0x80] sm:$0xf]
    %v1896 = vld [vmem:[%s17 + $0x84] sm:$0xf]
    %v1897 = vld [vmem:[%s17 + $0x88] sm:$0xf]
    %v1898 = vld [vmem:[%s17 + $0x8c] sm:$0xf]
    %v1899 = vld [vmem:[%s17 + $0x90] sm:$0xf]
    %v1900 = vld [vmem:[%s17 + $0x94] sm:$0xf]
    %v1901 = vld [vmem:[%s17 + $0x98] sm:$0xf]
    %v1902 = vld [vmem:[%s17 + $0x9c] sm:$0xf]
    %v1903 = vld [vmem:[%s17 + $0xa0] sm:$0xf]
    %v1904 = vld [vmem:[%s17 + $0xa4] sm:$0xf]
    %v1905 = vld [vmem:[%s17 + $0xa8] sm:$0xf]
    %v1906 = vld [vmem:[%s17 + $0xac] sm:$0xf]
    %v1907 = vld [vmem:[%s17 + $0xb0] sm:$0xf]
    %v1908 = vld [vmem:[%s17 + $0xb4] sm:$0xf]
    %v1909 = vld [vmem:[%s17 + $0xb8] sm:$0xf]
    %v1910 = vld [vmem:[%s17 + $0xbc] sm:$0xf]
    %v1911 = vld [vmem:[%s17 + $0xc0] sm:$0xf]
    %v1912 = vld [vmem:[%s17 + $0xc4] sm:$0xf]
    %v1913 = vld [vmem:[%s17 + $0xc8] sm:$0xf]
    %v1914 = vld [vmem:[%s17 + $0xcc] sm:$0xf]
    %v1915 = vld [vmem:[%s17 + $0xd0] sm:$0xf]
    %v1916 = vld [vmem:[%s17 + $0xd4] sm:$0xf]
    %v1917 = vld [vmem:[%s17 + $0xd8] sm:$0xf]
    %v1918 = vld [vmem:[%s17 + $0xdc] sm:$0xf]
    %v1919 = vld [vmem:[%s17 + $0xe0] sm:$0xf]
    %v1920 = vld [vmem:[%s17 + $0xe4] sm:$0xf]
    %v1921 = vld [vmem:[%s17 + $0xe8] sm:$0xf]
    %v1922 = vld [vmem:[%s17 + $0xec] sm:$0xf]
    %v1923 = vld [vmem:[%s17 + $0xf0] sm:$0xf]
    %v1924 = vld [vmem:[%s17 + $0xf4] sm:$0xf]
    %v1925 = vld [vmem:[%s17 + $0xf8] sm:$0xf]
    %v1926 = vld [vmem:[%s17 + $0xfc] sm:$0xf]
    %v1927 = vld [vmem:[%s17 + $0x100] sm:$0xf]
    %v1928 = vld [vmem:[%s17 + $0x104] sm:$0xf]
    %v1929 = vld [vmem:[%s17 + $0x108] sm:$0xf]
    %v1930 = vld [vmem:[%s17 + $0x10c] sm:$0xf]
    %v1931 = vld [vmem:[%s17 + $0x110] sm:$0xf]
    %v1932 = vld [vmem:[%s17 + $0x114] sm:$0xf]
    %v1933 = vld [vmem:[%s17 + $0x118] sm:$0xf]
    %v1934 = vld [vmem:[%s17 + $0x11c] sm:$0xf]
    %v1935 = vld [vmem:[%s17 + $0x120] sm:$0xf]
    %v1936 = vld [vmem:[%s17 + $0x124] sm:$0xf]
    %v1937 = vld [vmem:[%s17 + $0x128] sm:$0xf]
    %v1938 = vld [vmem:[%s17 + $0x12c] sm:$0xf]
    %v1939 = vld [vmem:[%s17 + $0x130] sm:$0xf]
    %v1940 = vld [vmem:[%s17 + $0x134] sm:$0xf]
    %v1941 = vld [vmem:[%s17 + $0x138] sm:$0xf]
    %v1942 = vld [vmem:[%s17 + $0x13c] sm:$0xf]
    %v1943 = vld [vmem:[%s18] sm:$0x1]
    %v1944 = vlaneseq
    %v1945 = vshrl.u32 %v1944, 7
    %v1946 = vsub.s32 0, %v1945
    %v1947 = vrot.slane %v1943, %v1946
    %v2028 = vunpack.c.l.b16 %v1863
    %v2029 = vunpack.c.l.b16 %v1864
    %v2030 = vunpack.c.l.b16 %v1865
    %v2031 = vunpack.c.l.b16 %v1866
    %v2032 = vunpack.c.l.b16 %v1867
    %v2033 = vunpack.c.l.b16 %v1868
    %v2034 = vunpack.c.l.b16 %v1869
    %v2035 = vunpack.c.l.b16 %v1870
    %v2036 = vunpack.c.l.b16 %v1871
    %v2037 = vunpack.c.l.b16 %v1872
    %v2038 = vunpack.c.l.b16 %v1873
    %v2039 = vunpack.c.l.b16 %v1874
    %v2040 = vunpack.c.l.b16 %v1875
    %v2041 = vunpack.c.l.b16 %v1876
    %v2042 = vunpack.c.l.b16 %v1877
    %v2043 = vunpack.c.l.b16 %v1878
    %v2044 = vunpack.c.l.b16 %v1879
    %v2045 = vunpack.c.l.b16 %v1880
    %v2046 = vunpack.c.l.b16 %v1881
    %v2047 = vunpack.c.l.b16 %v1882
    %v2048 = vunpack.c.l.b16 %v1883
    %v2049 = vunpack.c.l.b16 %v1884
    %v2050 = vunpack.c.l.b16 %v1885
    %v2051 = vunpack.c.l.b16 %v1886
    %v2052 = vunpack.c.l.b16 %v1887
    %v2053 = vunpack.c.l.b16 %v1888
    %v2054 = vunpack.c.l.b16 %v1889
    %v2055 = vunpack.c.l.b16 %v1890
    %v2056 = vunpack.c.l.b16 %v1891
    %v2057 = vunpack.c.l.b16 %v1892
    %v2058 = vunpack.c.l.b16 %v1893
    %v2059 = vunpack.c.l.b16 %v1894
    %v2060 = vunpack.c.l.b16 %v1895
    %v2061 = vunpack.c.l.b16 %v1896
    %v2062 = vunpack.c.l.b16 %v1897
    %v2063 = vunpack.c.l.b16 %v1898
    %v2064 = vunpack.c.l.b16 %v1899
    %v2065 = vunpack.c.l.b16 %v1900
    %v2066 = vunpack.c.l.b16 %v1901
    %v2067 = vunpack.c.l.b16 %v1902
    %v2068 = vunpack.c.l.b16 %v1903
    %v2069 = vunpack.c.l.b16 %v1904
    %v2070 = vunpack.c.l.b16 %v1905
    %v2071 = vunpack.c.l.b16 %v1906
    %v2072 = vunpack.c.l.b16 %v1907
    %v2073 = vunpack.c.l.b16 %v1908
    %v2074 = vunpack.c.l.b16 %v1909
    %v2075 = vunpack.c.l.b16 %v1910
    %v2076 = vunpack.c.l.b16 %v1911
    %v2077 = vunpack.c.l.b16 %v1912
    %v2078 = vunpack.c.l.b16 %v1913
    %v2079 = vunpack.c.l.b16 %v1914
    %v2080 = vunpack.c.l.b16 %v1915
    %v2081 = vunpack.c.l.b16 %v1916
    %v2082 = vunpack.c.l.b16 %v1917
    %v2083 = vunpack.c.l.b16 %v1918
    %v2084 = vunpack.c.l.b16 %v1919
    %v2085 = vunpack.c.l.b16 %v1920
    %v2086 = vunpack.c.l.b16 %v1921
    %v2087 = vunpack.c.l.b16 %v1922
    %v2088 = vunpack.c.l.b16 %v1923
    %v2089 = vunpack.c.l.b16 %v1924
    %v2090 = vunpack.c.l.b16 %v1925
    %v2091 = vunpack.c.l.b16 %v1926
    %v2092 = vunpack.c.l.b16 %v1927
    %v2093 = vunpack.c.l.b16 %v1928
    %v2094 = vunpack.c.l.b16 %v1929
    %v2095 = vunpack.c.l.b16 %v1930
    %v2096 = vunpack.c.l.b16 %v1931
    %v2097 = vunpack.c.l.b16 %v1932
    %v2098 = vunpack.c.l.b16 %v1933
    %v2099 = vunpack.c.l.b16 %v1934
    %v2100 = vunpack.c.l.b16 %v1935
    %v2101 = vunpack.c.l.b16 %v1936
    %v2102 = vunpack.c.l.b16 %v1937
    %v2103 = vunpack.c.l.b16 %v1938
    %v2104 = vunpack.c.l.b16 %v1939
    %v2105 = vunpack.c.l.b16 %v1940
    %v2106 = vunpack.c.l.b16 %v1941
    %v2107 = vunpack.c.l.b16 %v1942
    %v2108 = vpack.c.b16 %v2029, %v2028
    %v2109 = vpack.c.b16 %v2031, %v2030
    %v2110 = vpack.c.b16 %v2033, %v2032
    %v2111 = vpack.c.b16 %v2035, %v2034
    %v2112 = vpack.c.b16 %v2037, %v2036
    %v2113 = vpack.c.b16 %v2039, %v2038
    %v2114 = vpack.c.b16 %v2041, %v2040
    %v2115 = vpack.c.b16 %v2043, %v2042
    %v2116 = vpack.c.b16 %v2045, %v2044
    %v2117 = vpack.c.b16 %v2047, %v2046
    %v2118 = vpack.c.b16 %v2049, %v2048
    %v2119 = vpack.c.b16 %v2051, %v2050
    %v2120 = vpack.c.b16 %v2053, %v2052
    %v2121 = vpack.c.b16 %v2055, %v2054
    %v2122 = vpack.c.b16 %v2057, %v2056
    %v2123 = vpack.c.b16 %v2059, %v2058
    %v2124 = vpack.c.b16 %v2061, %v2060
    %v2125 = vpack.c.b16 %v2063, %v2062
    %v2126 = vpack.c.b16 %v2065, %v2064
    %v2127 = vpack.c.b16 %v2067, %v2066
    %v2128 = vpack.c.b16 %v2069, %v2068
    %v2129 = vpack.c.b16 %v2071, %v2070
    %v2130 = vpack.c.b16 %v2073, %v2072
    %v2131 = vpack.c.b16 %v2075, %v2074
    %v2132 = vpack.c.b16 %v2077, %v2076
    %v2133 = vpack.c.b16 %v2079, %v2078
    %v2134 = vpack.c.b16 %v2081, %v2080
    %v2135 = vpack.c.b16 %v2083, %v2082
    %v2136 = vpack.c.b16 %v2085, %v2084
    %v2137 = vpack.c.b16 %v2087, %v2086
    %v2138 = vpack.c.b16 %v2089, %v2088
    %v2139 = vpack.c.b16 %v2091, %v2090
    %v2140 = vpack.c.b16 %v2093, %v2092
    %v2141 = vpack.c.b16 %v2095, %v2094
    %v2142 = vpack.c.b16 %v2097, %v2096
    %v2143 = vpack.c.b16 %v2099, %v2098
    %v2144 = vpack.c.b16 %v2101, %v2100
    %v2145 = vpack.c.b16 %v2103, %v2102
    %v2146 = vpack.c.b16 %v2105, %v2104
    %v2147 = vpack.c.b16 %v2107, %v2106
    %2188 = vmatprep.subr.bf16.mxu0 0
    %2189 = vmatpush1.bf16.msra.mxu0 %v2108
    %2190 = vmatprep.subr.bf16.mxu0 0
    %2191 = vmatpush1.bf16.msra.mxu0 %v2109
    %2192 = vmatprep.subr.bf16.mxu0 0
    %2193 = vmatpush1.bf16.msra.mxu0 %v2110
    %2194 = vmatprep.subr.bf16.mxu0 0
    %2195 = vmatpush1.bf16.msra.mxu0 %v2111
    %2196 = vmatprep.subr.bf16.mxu0 0
    %2197 = vmatpush1.bf16.msra.mxu0 %v2112
    %2198 = vmatprep.subr.bf16.mxu0 0
    %2199 = vmatpush1.bf16.msra.mxu0 %v2113
    %2200 = vmatprep.subr.bf16.mxu0 0
    %2201 = vmatpush1.bf16.msra.mxu0 %v2114
    %2202 = vmatprep.subr.bf16.mxu0 0
    %2203 = vmatpush1.bf16.msra.mxu0 %v2115
    %2204 = vmatprep.subr.bf16.mxu0 0
    %2205 = vmatpush1.bf16.msra.mxu0 %v2116
    %2206 = vmatprep.subr.bf16.mxu0 0
    %2207 = vmatpush1.bf16.msra.mxu0 %v2117
    %2208 = vmatprep.subr.bf16.mxu0 0
    %2209 = vmatpush1.bf16.msra.mxu0 %v2118
    %2210 = vmatprep.subr.bf16.mxu0 0
    %2211 = vmatpush1.bf16.msra.mxu0 %v2119
    %2212 = vmatprep.subr.bf16.mxu0 0
    %2213 = vmatpush1.bf16.msra.mxu0 %v2120
    %2214 = vmatprep.subr.bf16.mxu0 0
    %2215 = vmatpush1.bf16.msra.mxu0 %v2121
    %2216 = vmatprep.subr.bf16.mxu0 0
    %2217 = vmatpush1.bf16.msra.mxu0 %v2122
    %2218 = vmatprep.subr.bf16.mxu0 0
    %2219 = vmatpush1.bf16.msra.mxu0 %v2123
    %2220 = vmatprep.mubr.bf16.mxu0 %v1828
    %2221 = vmatmul.mubr.bf16.gmra.mrb[0].mxu0 %v1657
    %v2222 = vpop.f32.mrb[0].mxu0
    %v2223 = vadd.f32 %v1947, %v2222
    %v2224 = vpop.f32.mrb[0].mxu0
    %v2225 = vpop.f32.mrb[0].mxu0
    %v2226 = vadd.f32 %v1947, %v2225
    %v2227 = vpop.f32.mrb[0].mxu0
    %2228 = vdwg.mxu0
    %2229 = vmatprep.subr.bf16.mxu0 0
    %2230 = vmatpush1.bf16.msra.mxu0 %v2124
    %2231 = vmatprep.subr.bf16.mxu0 0
    %2232 = vmatpush1.bf16.msra.mxu0 %v2125
    %2233 = vmatprep.subr.bf16.mxu0 0
    %2234 = vmatpush1.bf16.msra.mxu0 %v2126
    %2235 = vmatprep.subr.bf16.mxu0 0
    %2236 = vmatpush1.bf16.msra.mxu0 %v2127
    %2237 = vmatprep.subr.bf16.mxu0 0
    %2238 = vmatpush1.bf16.msra.mxu0 %v2128
    %2239 = vmatprep.subr.bf16.mxu0 0
    %2240 = vmatpush1.bf16.msra.mxu0 %v2129
    %2241 = vmatprep.subr.bf16.mxu0 0
    %2242 = vmatpush1.bf16.msra.mxu0 %v2130
    %2243 = vmatprep.subr.bf16.mxu0 0
    %2244 = vmatpush1.bf16.msra.mxu0 %v2131
    %2245 = vmatprep.subr.bf16.mxu0 0
    %2246 = vmatpush1.bf16.msra.mxu0 %v2132
    %2247 = vmatprep.subr.bf16.mxu0 0
    %2248 = vmatpush1.bf16.msra.mxu0 %v2133
    %2249 = vmatprep.subr.bf16.mxu0 0
    %2250 = vmatpush1.bf16.msra.mxu0 %v2134
    %2251 = vmatprep.subr.bf16.mxu0 0
    %2252 = vmatpush1.bf16.msra.mxu0 %v2135
    %2253 = vmatprep.subr.bf16.mxu0 0
    %2254 = vmatpush1.bf16.msra.mxu0 %v2136
    %2255 = vmatprep.subr.bf16.mxu0 0
    %2256 = vmatpush1.bf16.msra.mxu0 %v2137
    %2257 = vmatprep.subr.bf16.mxu0 0
    %2258 = vmatpush1.bf16.msra.mxu0 %v2138
    %2259 = vmatprep.subr.bf16.mxu0 0
    %2260 = vmatpush1.bf16.msra.mxu0 %v2139
    %2261 = vmatprep.mubr.bf16.mxu0 %v1854
    %2262 = vmatmul.mubr.bf16.gmra.mrb[0].mxu0 %v1835
    %v2263 = vpop.f32.mrb[0].mxu0
    %v2264 = vadd.f32 %v2223, %v2263
    %v2265 = vpop.f32.mrb[0].mxu0
    %v2266 = vpop.f32.mrb[0].mxu0
    %v2267 = vadd.f32 %v2226, %v2266
    %v2268 = vpop.f32.mrb[0].mxu0
    %2269 = vdwg.mxu0
    %2270 = vmatprep.subr.bf16.mxu0 0
    %2271 = vmatpush1.bf16.msra.mxu0 %v2140
    %2272 = vmatprep.subr.bf16.mxu0 0
    %2273 = vmatpush1.bf16.msra.mxu0 %v2141
    %2274 = vmatprep.subr.bf16.mxu0 0
    %2275 = vmatpush1.bf16.msra.mxu0 %v2142
    %2276 = vmatprep.subr.bf16.mxu0 0
    %2277 = vmatpush1.bf16.msra.mxu0 %v2143
    %2278 = vmatprep.subr.bf16.mxu0 0
    %2279 = vmatpush1.bf16.msra.mxu0 %v2144
    %2280 = vmatprep.subr.bf16.mxu0 0
    %2281 = vmatpush1.bf16.msra.mxu0 %v2145
    %2282 = vmatprep.subr.bf16.mxu0 0
    %2283 = vmatpush1.bf16.msra.mxu0 %v2146
    %2284 = vmatprep.subr.bf16.mxu0 0
    %2285 = vmatpush1.bf16.msra.mxu0 %v2147
    %2286 = vmatprep.subr.bf16.mxu0 0
    %2287 = vmatpush1.bf16.msra.mxu0 0
    %2288 = vmatprep.subr.bf16.mxu0 0
    %2289 = vmatpush1.bf16.msra.mxu0 0
    %2290 = vmatprep.subr.bf16.mxu0 0
    %2291 = vmatpush1.bf16.msra.mxu0 0
    %2292 = vmatprep.subr.bf16.mxu0 0
    %2293 = vmatpush1.bf16.msra.mxu0 0
    %2294 = vmatprep.subr.bf16.mxu0 0
    %2295 = vmatpush1.bf16.msra.mxu0 0
    %2296 = vmatprep.subr.bf16.mxu0 0
    %2297 = vmatpush1.bf16.msra.mxu0 0
    %2298 = vmatprep.subr.bf16.mxu0 0
    %2299 = vmatpush1.bf16.msra.mxu0 0
    %2300 = vmatprep.subr.bf16.mxu0 0
    %2301 = vmatpush1.bf16.msra.mxu0 0
    %2302 = vmatprep.mubr.bf16.mxu0 0
    %2303 = vmatmul.mubr.bf16.gmra.mrb[0].mxu0 %v1861
    %v2304 = vpop.f32.mrb[0].mxu0
    %v2305 = vadd.f32 %v2264, %v2304
    %v2306 = vpop.f32.mrb[0].mxu0
    %v2307 = vpop.f32.mrb[0].mxu0
    %v2308 = vadd.f32 %v2267, %v2307
    %v2309 = vpop.f32.mrb[0].mxu0
    %2310 = vdwg.mxu0
    %v2311 = vmul.f32 %v2305, %v2305
    %v2312 = vmul.f32 %v2308, %v2308
    %v2313 = vld [vmem:[%s19] sm:$0x3]
    %v2315 = vsel %vm1293, %v2313, 0
    %2317 = vmatprep.subr.mxu0 %v2311
    %2318 = vmatpush1.msra.mxu0 %v2305
    %2319 = vmatprep.subr.mxu0 %v2312
    %2320 = vmatpush1.msra.mxu0 %v2308
    %2321 = vmatprep.subr.mxu0 0.0
    %2322 = vmatpush1.msra.mxu0 0.0
    %2323 = vmatprep.subr.mxu0 0.0
    %2324 = vmatpush1.msra.mxu0 0.0
    %2325 = vmatprep.subr.mxu0 0.0
    %2326 = vmatpush1.msra.mxu0 0.0
    %2327 = vmatprep.subr.mxu0 0.0
    %2328 = vmatpush1.msra.mxu0 0.0
    %2329 = vmatprep.subr.mxu0 0.0
    %2330 = vmatpush1.msra.mxu0 0.0
    %2331 = vmatprep.subr.mxu0 0.0
    %2332 = vmatpush1.msra.mxu0 0.0
    %2333 = vmatprep.subr.mxu0 0.0
    %2334 = vmatpush1.msra.mxu0 0.0
    %2335 = vmatprep.subr.mxu0 0.0
    %2336 = vmatpush1.msra.mxu0 0.0
    %2337 = vmatprep.subr.mxu0 0.0
    %2338 = vmatpush1.msra.mxu0 0.0
    %2339 = vmatprep.subr.mxu0 0.0
    %2340 = vmatpush1.msra.mxu0 0.0
    %2341 = vmatprep.subr.mxu0 0.0
    %2342 = vmatpush1.msra.mxu0 0.0
    %2343 = vmatprep.subr.mxu0 0.0
    %2344 = vmatpush1.msra.mxu0 0.0
    %2345 = vmatprep.subr.mxu0 0.0
    %2346 = vmatpush1.msra.mxu0 0.0
    %2347 = vmatprep.subr.mxu0 0.0
    %2348 = vmatpush1.msra.mxu0 0.0
    %2349 = vmatprep.subr.mxu0 0.0
    %2350 = vmatpush1.msra.mxu0 0.0
    %2351 = vmatprep.subr.mxu0 0.0
    %2352 = vmatpush1.msra.mxu0 0.0
    %2353 = vmatprep.subr.mxu0 0.0
    %2354 = vmatpush1.msra.mxu0 0.0
    %2355 = vmatprep.subr.mxu0 0.0
    %2356 = vmatpush1.msra.mxu0 0.0
    %2357 = vmatprep.subr.mxu0 0.0
    %2358 = vmatpush1.msra.mxu0 0.0
    %2359 = vmatprep.subr.mxu0 0.0
    %2360 = vmatpush1.msra.mxu0 0.0
    %2361 = vmatprep.subr.mxu0 0.0
    %2362 = vmatpush1.msra.mxu0 0.0
    %2363 = vmatprep.subr.mxu0 0.0
    %2364 = vmatpush1.msra.mxu0 0.0
    %2365 = vmatprep.subr.mxu0 0.0
    %2366 = vmatpush1.msra.mxu0 0.0
    %2367 = vmatprep.subr.mxu0 0.0
    %2368 = vmatpush1.msra.mxu0 0.0
    %2369 = vmatprep.subr.mxu0 0.0
    %2370 = vmatpush1.msra.mxu0 0.0
    %2371 = vmatprep.subr.mxu0 0.0
    %2372 = vmatpush1.msra.mxu0 0.0
    %2373 = vmatprep.subr.mxu0 0.0
    %2374 = vmatpush1.msra.mxu0 0.0
    %2375 = vmatprep.subr.mxu0 0.0
    %2376 = vmatpush1.msra.mxu0 0.0
    %2377 = vmatprep.subr.mxu0 0.0
    %2378 = vmatpush1.msra.mxu0 0.0
    %2379 = vmatprep.subr.mxu0 0.0
    %2380 = vmatpush1.msra.mxu0 0.0
    %2381 = vmatprep.mubr.f32.mxu0 0.0
    %2382 = vmatmul.mubr.f32.gmra.mrb[0].mxu0 %v2315
    %v2383 = vpop.f32.mrb[0].mxu0
    %v2384 = vadd.f32 0.0, %v2383
    %v2385 = vpop.f32.mrb[0].mxu0
    %v2386 = vadd.f32 0.0, %v2385
    %2387 = vdwg.mxu0
    %v2388 = vld [vmem:[%s21] sm:$0xff]
    %v2389 = vld [vmem:[%s21 + $0x8] sm:$0xff]
    %v2390 = vld [vmem:[%s21 + $0x10] sm:$0xff]
    %v2391 = vld [vmem:[%s21 + $0x18] sm:$0xff]
    %v2392 = vld [vmem:[%s21 + $0x20] sm:$0xff]
    %v2393 = vld [vmem:[%s21 + $0x28] sm:$0xff]
    %v2394 = vld [vmem:[%s21 + $0x30] sm:$0xff]
    %v2395 = vld [vmem:[%s21 + $0x38] sm:$0xff]
    %v2396 = vld [vmem:[%s21 + $0x40] sm:$0xff]
    %v2397 = vld [vmem:[%s21 + $0x48] sm:$0xff]
    %v2398 = vld [vmem:[%s21 + $0x50] sm:$0xff]
    %v2399 = vld [vmem:[%s21 + $0x58] sm:$0xff]
    %v2400 = vld [vmem:[%s21 + $0x60] sm:$0xff]
    %v2401 = vld [vmem:[%s21 + $0x68] sm:$0xff]
    %v2402 = vld [vmem:[%s21 + $0x70] sm:$0xff]
    %v2403 = vld [vmem:[%s21 + $0x78] sm:$0xff]
    %v2404 = vld [vmem:[%s21 + $0x80] sm:$0xff]
    %v2405 = vld [vmem:[%s21 + $0x88] sm:$0xff]
    %v2406 = vld [vmem:[%s21 + $0x90] sm:$0xff]
    %v2407 = vld [vmem:[%s21 + $0x98] sm:$0xff]
    %v2408 = vld [vmem:[%s21 + $0xa0] sm:$0xff]
    %v2409 = vld [vmem:[%s21 + $0xa8] sm:$0xff]
    %v2410 = vld [vmem:[%s21 + $0xb0] sm:$0xff]
    %v2411 = vld [vmem:[%s21 + $0xb8] sm:$0xff]
    %v2412 = vld [vmem:[%s21 + $0xc0] sm:$0xff]
    %v2413 = vld [vmem:[%s21 + $0xc8] sm:$0xff]
    %v2414 = vld [vmem:[%s21 + $0xd0] sm:$0xff]
    %v2415 = vld [vmem:[%s21 + $0xd8] sm:$0xff]
    %v2416 = vld [vmem:[%s21 + $0xe0] sm:$0xff]
    %v2417 = vld [vmem:[%s21 + $0xe8] sm:$0xff]
    %v2418 = vld [vmem:[%s21 + $0xf0] sm:$0xff]
    %v2419 = vld [vmem:[%s21 + $0xf8] sm:$0xff]
    %2420 = vmatprep.subr.mxu0 0.0
    %2421 = vmatpush1.msra.mxu0 %v2388
    %2422 = vmatprep.subr.mxu0 0.0
    %2423 = vmatpush1.msra.mxu0 %v2389
    %2424 = vmatprep.subr.mxu0 0.0
    %2425 = vmatpush1.msra.mxu0 %v2390
    %2426 = vmatprep.subr.mxu0 0.0
    %2427 = vmatpush1.msra.mxu0 %v2391
    %2428 = vmatprep.subr.mxu0 0.0
    %2429 = vmatpush1.msra.mxu0 %v2392
    %2430 = vmatprep.subr.mxu0 0.0
    %2431 = vmatpush1.msra.mxu0 %v2393
    %2432 = vmatprep.subr.mxu0 0.0
    %2433 = vmatpush1.msra.mxu0 %v2394
    %2434 = vmatprep.subr.mxu0 0.0
    %2435 = vmatpush1.msra.mxu0 %v2395
    %2436 = vmatprep.subr.mxu0 0.0
    %2437 = vmatpush1.msra.mxu0 %v2396
    %2438 = vmatprep.subr.mxu0 0.0
    %2439 = vmatpush1.msra.mxu0 %v2397
    %2440 = vmatprep.subr.mxu0 0.0
    %2441 = vmatpush1.msra.mxu0 %v2398
    %2442 = vmatprep.subr.mxu0 0.0
    %2443 = vmatpush1.msra.mxu0 %v2399
    %2444 = vmatprep.subr.mxu0 0.0
    %2445 = vmatpush1.msra.mxu0 %v2400
    %2446 = vmatprep.subr.mxu0 0.0
    %2447 = vmatpush1.msra.mxu0 %v2401
    %2448 = vmatprep.subr.mxu0 0.0
    %2449 = vmatpush1.msra.mxu0 %v2402
    %2450 = vmatprep.subr.mxu0 0.0
    %2451 = vmatpush1.msra.mxu0 %v2403
    %2452 = vmatprep.subr.mxu0 0.0
    %2453 = vmatpush1.msra.mxu0 %v2404
    %2454 = vmatprep.subr.mxu0 0.0
    %2455 = vmatpush1.msra.mxu0 %v2405
    %2456 = vmatprep.subr.mxu0 0.0
    %2457 = vmatpush1.msra.mxu0 %v2406
    %2458 = vmatprep.subr.mxu0 0.0
    %2459 = vmatpush1.msra.mxu0 %v2407
    %2460 = vmatprep.subr.mxu0 0.0
    %2461 = vmatpush1.msra.mxu0 %v2408
    %2462 = vmatprep.subr.mxu0 0.0
    %2463 = vmatpush1.msra.mxu0 %v2409
    %2464 = vmatprep.subr.mxu0 0.0
    %2465 = vmatpush1.msra.mxu0 %v2410
    %2466 = vmatprep.subr.mxu0 0.0
    %2467 = vmatpush1.msra.mxu0 %v2411
    %2468 = vmatprep.subr.mxu0 0.0
    %2469 = vmatpush1.msra.mxu0 %v2412
    %2470 = vmatprep.subr.mxu0 0.0
    %2471 = vmatpush1.msra.mxu0 %v2413
    %2472 = vmatprep.subr.mxu0 0.0
    %2473 = vmatpush1.msra.mxu0 %v2414
    %2474 = vmatprep.subr.mxu0 0.0
    %2475 = vmatpush1.msra.mxu0 %v2415
    %2476 = vmatprep.subr.mxu0 0.0
    %2477 = vmatpush1.msra.mxu0 %v2416
    %2478 = vmatprep.subr.mxu0 0.0
    %2479 = vmatpush1.msra.mxu0 %v2417
    %2480 = vmatprep.subr.mxu0 0.0
    %2481 = vmatpush1.msra.mxu0 %v2418
    %2482 = vmatprep.subr.mxu0 0.0
    %2483 = vmatpush1.msra.mxu0 %v2419
    %2484 = vmatprep.mubr.f32.mxu0 %v2386
    %2485 = vmatmul.mubr.f32.gmra.mrb[0].mxu0 %v2384
    %v2486 = vpop.f32.mrb[0].mxu0
    %v2487 = vadd.f32 0.0, %v2486
    %v2488 = vpop.f32.mrb[0].mxu0
    %2489 = vdwg.mxu0
    %v2490 = vmul.f32 %v2487, %v2487
    %2492 = vrot.lane.b32.xlu0 %v2490, 16
    %v2493 = vpop.permute.xlu0 %2492
    %v2495 = vsub.f32 %v2487, %v2493
    %v2496 = vmax.f32 %v2495, 0.0
    %v2497 = vadd.f32 %v2496, 1e-05
    %v2498 = vrsqrt.pop %v2497
    %2500 = vrot.lane.b32.xlu0 %v2498, 112
    %v2501 = vpop.permute.xlu0 %2500
    %v2503 = vmul.f32 %v2487, %v2501
    %2505 = vrot.lane.b32.xlu0 %v2503, 16
    %v2506 = vpop.permute.xlu0 %2505
    %v2508 = vsel %vm1293, %v2501, %v2506
    %v2509 = vld [vmem:[%s22] sm:$0xff]
    %v2510 = vld [vmem:[%s22 + $0x8] sm:$0xff]
    %v2511 = vld [vmem:[%s22 + $0x10] sm:$0xff]
    %v2512 = vld [vmem:[%s22 + $0x18] sm:$0xff]
    %v2513 = vld [vmem:[%s22 + $0x20] sm:$0xff]
    %v2514 = vld [vmem:[%s22 + $0x28] sm:$0xff]
    %v2515 = vld [vmem:[%s22 + $0x30] sm:$0xff]
    %v2516 = vld [vmem:[%s22 + $0x38] sm:$0xff]
    %v2518 = vsel %vm1299, %v2508, 0
    %2520 = vmatprep.subr.mxu0 %v2510
    %2521 = vmatpush1.msra.mxu0 %v2509
    %2522 = vmatprep.subr.mxu0 %v2512
    %2523 = vmatpush1.msra.mxu0 %v2511
    %2524 = vmatprep.subr.mxu0 %v2514
    %2525 = vmatpush1.msra.mxu0 %v2513
    %2526 = vmatprep.subr.mxu0 %v2516
    %2527 = vmatpush1.msra.mxu0 %v2515
    %2528 = vmatprep.subr.mxu0 0.0
    %2529 = vmatpush1.msra.mxu0 0.0
    %2530 = vmatprep.subr.mxu0 0.0
    %2531 = vmatpush1.msra.mxu0 0.0
    %2532 = vmatprep.subr.mxu0 0.0
    %2533 = vmatpush1.msra.mxu0 0.0
    %2534 = vmatprep.subr.mxu0 0.0
    %2535 = vmatpush1.msra.mxu0 0.0
    %2536 = vmatprep.subr.mxu0 0.0
    %2537 = vmatpush1.msra.mxu0 0.0
    %2538 = vmatprep.subr.mxu0 0.0
    %2539 = vmatpush1.msra.mxu0 0.0
    %2540 = vmatprep.subr.mxu0 0.0
    %2541 = vmatpush1.msra.mxu0 0.0
    %2542 = vmatprep.subr.mxu0 0.0
    %2543 = vmatpush1.msra.mxu0 0.0
    %2544 = vmatprep.subr.mxu0 0.0
    %2545 = vmatpush1.msra.mxu0 0.0
    %2546 = vmatprep.subr.mxu0 0.0
    %2547 = vmatpush1.msra.mxu0 0.0
    %2548 = vmatprep.subr.mxu0 0.0
    %2549 = vmatpush1.msra.mxu0 0.0
    %2550 = vmatprep.subr.mxu0 0.0
    %2551 = vmatpush1.msra.mxu0 0.0
    %2552 = vmatprep.subr.mxu0 0.0
    %2553 = vmatpush1.msra.mxu0 0.0
    %2554 = vmatprep.subr.mxu0 0.0
    %2555 = vmatpush1.msra.mxu0 0.0
    %2556 = vmatprep.subr.mxu0 0.0
    %2557 = vmatpush1.msra.mxu0 0.0
    %2558 = vmatprep.subr.mxu0 0.0
    %2559 = vmatpush1.msra.mxu0 0.0
    %2560 = vmatprep.subr.mxu0 0.0
    %2561 = vmatpush1.msra.mxu0 0.0
    %2562 = vmatprep.subr.mxu0 0.0
    %2563 = vmatpush1.msra.mxu0 0.0
    %2564 = vmatprep.subr.mxu0 0.0
    %2565 = vmatpush1.msra.mxu0 0.0
    %2566 = vmatprep.subr.mxu0 0.0
    %2567 = vmatpush1.msra.mxu0 0.0
    %2568 = vmatprep.subr.mxu0 0.0
    %2569 = vmatpush1.msra.mxu0 0.0
    %2570 = vmatprep.subr.mxu0 0.0
    %2571 = vmatpush1.msra.mxu0 0.0
    %2572 = vmatprep.subr.mxu0 0.0
    %2573 = vmatpush1.msra.mxu0 0.0
    %2574 = vmatprep.subr.mxu0 0.0
    %2575 = vmatpush1.msra.mxu0 0.0
    %2576 = vmatprep.subr.mxu0 0.0
    %2577 = vmatpush1.msra.mxu0 0.0
    %2578 = vmatprep.subr.mxu0 0.0
    %2579 = vmatpush1.msra.mxu0 0.0
    %2580 = vmatprep.subr.mxu0 0.0
    %2581 = vmatpush1.msra.mxu0 0.0
    %2582 = vmatprep.subr.mxu0 0.0
    %2583 = vmatpush1.msra.mxu0 0.0
    %2584 = vmatprep.mubr.f32.mxu0 0.0
    %2585 = vmatmul.mubr.f32.gmra.mrb[0].mxu0 %v2518
    %v2586 = vpop.f32.mrb[0].mxu0
    %v2587 = vadd.f32 0.0, %v2586
    %v2588 = vpop.f32.mrb[0].mxu0
    %v2589 = vadd.f32 0.0, %v2588
    %2590 = vdwg.mxu0
    %v2591 = vld [vmem:[%s18 + $0x1] sm:$0x1]
    %v2592 = vld [vmem:[%s18 + $0x3] sm:$0x1]
    %v2593 = vlaneseq
    %v2594 = vshrl.u32 %v2593, 7
    %v2595 = vsub.s32 0, %v2594
    %v2596 = vrot.slane %v2592, %v2595
    %v2597 = vmul.f32 %v2596, %v2587
    %v2598 = vlaneseq
    %v2599 = vshrl.u32 %v2598, 7
    %v2600 = vsub.s32 0, %v2599
    %v2601 = vrot.slane %v2591, %v2600
    %v2602 = vadd.f32 %v2601, %v2597
    %v2603 = vld [vmem:[%s18 + $0x2] sm:$0x1]
    %v2604 = vmul.f32 %v2596, %v2589
    %v2605 = vlaneseq
    %v2606 = vshrl.u32 %v2605, 7
    %v2607 = vsub.s32 0, %v2606
    %v2608 = vrot.slane %v2603, %v2607
    %v2609 = vsub.f32 %v2608, %v2604
    %v2610 = vld [vmem:[%s20] sm:$0xff]
    %v2611 = vld [vmem:[%s20 + $0x8] sm:$0xff]
    %v2613 = vsel %vm321, %v2610, 0
    %v2616 = vsel %vm321, %v2611, 0
    %v2619 = vsel %vm325, %v2602, 0
    %v2622 = vsel %vm325, %v2609, 0
    %2624 = vmatprep.subr.mxu0 %v2622
    %2625 = vmatpush1.msra.mxu0 %v2619
    %2626 = vmatprep.subr.mxu0 0.0
    %2627 = vmatpush1.msra.mxu0 0.0
    %2628 = vmatprep.subr.mxu0 0.0
    %2629 = vmatpush1.msra.mxu0 0.0
    %2630 = vmatprep.subr.mxu0 0.0
    %2631 = vmatpush1.msra.mxu0 0.0
    %2632 = vmatprep.subr.mxu0 0.0
    %2633 = vmatpush1.msra.mxu0 0.0
    %2634 = vmatprep.subr.mxu0 0.0
    %2635 = vmatpush1.msra.mxu0 0.0
    %2636 = vmatprep.subr.mxu0 0.0
    %2637 = vmatpush1.msra.mxu0 0.0
    %2638 = vmatprep.subr.mxu0 0.0
    %2639 = vmatpush1.msra.mxu0 0.0
    %2640 = vmatprep.subr.mxu0 0.0
    %2641 = vmatpush1.msra.mxu0 0.0
    %2642 = vmatprep.subr.mxu0 0.0
    %2643 = vmatpush1.msra.mxu0 0.0
    %2644 = vmatprep.subr.mxu0 0.0
    %2645 = vmatpush1.msra.mxu0 0.0
    %2646 = vmatprep.subr.mxu0 0.0
    %2647 = vmatpush1.msra.mxu0 0.0
    %2648 = vmatprep.subr.mxu0 0.0
    %2649 = vmatpush1.msra.mxu0 0.0
    %2650 = vmatprep.subr.mxu0 0.0
    %2651 = vmatpush1.msra.mxu0 0.0
    %2652 = vmatprep.subr.mxu0 0.0
    %2653 = vmatpush1.msra.mxu0 0.0
    %2654 = vmatprep.subr.mxu0 0.0
    %2655 = vmatpush1.msra.mxu0 0.0
    %2656 = vmatprep.subr.mxu0 0.0
    %2657 = vmatpush1.msra.mxu0 0.0
    %2658 = vmatprep.subr.mxu0 0.0
    %2659 = vmatpush1.msra.mxu0 0.0
    %2660 = vmatprep.subr.mxu0 0.0
    %2661 = vmatpush1.msra.mxu0 0.0
    %2662 = vmatprep.subr.mxu0 0.0
    %2663 = vmatpush1.msra.mxu0 0.0
    %2664 = vmatprep.subr.mxu0 0.0
    %2665 = vmatpush1.msra.mxu0 0.0
    %2666 = vmatprep.subr.mxu0 0.0
    %2667 = vmatpush1.msra.mxu0 0.0
    %2668 = vmatprep.subr.mxu0 0.0
    %2669 = vmatpush1.msra.mxu0 0.0
    %2670 = vmatprep.subr.mxu0 0.0
    %2671 = vmatpush1.msra.mxu0 0.0
    %2672 = vmatprep.subr.mxu0 0.0
    %2673 = vmatpush1.msra.mxu0 0.0
    %2674 = vmatprep.subr.mxu0 0.0
    %2675 = vmatpush1.msra.mxu0 0.0
    %2676 = vmatprep.subr.mxu0 0.0
    %2677 = vmatpush1.msra.mxu0 0.0
    %2678 = vmatprep.subr.mxu0 0.0
    %2679 = vmatpush1.msra.mxu0 0.0
    %2680 = vmatprep.subr.mxu0 0.0
    %2681 = vmatpush1.msra.mxu0 0.0
    %2682 = vmatprep.subr.mxu0 0.0
    %2683 = vmatpush1.msra.mxu0 0.0
    %2684 = vmatprep.subr.mxu0 0.0
    %2685 = vmatpush1.msra.mxu0 0.0
    %2686 = vmatprep.subr.mxu0 0.0
    %2687 = vmatpush1.msra.mxu0 0.0
    %2688 = vmatprep.mubr.f32.mxu0 0.0
    %2689 = vmatmul.mubr.f32.gmra.mrb[0].mxu0 %v2613
    %v2690 = vpop.f32.mrb[0].mxu0
    %v2691 = vadd.f32 0.0, %v2690
    %v2692 = vpop.f32.mrb[0].mxu0
    %v2693 = vadd.f32 0.0, %v2692
    %2694 = vmatprep.mubr.f32.mxu0 0.0
    %2695 = vmatmul.mubr.f32.gmra.mrb[0].mxu0 %v2616
    %v2696 = vpop.f32.mrb[0].mxu0
    %v2697 = vadd.f32 0.0, %v2696
    %v2698 = vpop.f32.mrb[0].mxu0
    %v2699 = vadd.f32 0.0, %v2698
    %2700 = vdwg.mxu0
    %v2701 = vmul.f32 %v2305, %v2691
    %v2702 = vmul.f32 %v2308, %v2697
    %v2703 = vadd.f32 %v2701, %v2693
    %v2704 = vadd.f32 %v2702, %v2699
    %v2705 = vmax.f32 %v2703, 0.0
    %v2706 = vmax.f32 %v2704, 0.0
    %2707 = vst [vmem:[#allocation2] sm:$0xff] %v2705
    %2708 = vst [vmem:[#allocation2 + $0x8] sm:$0xff] %v2706
    // Predicated region
    $region94: #{tpu_custom_call.1} parent=1 // pred_check
      _
    $region95: #{tpu_custom_call.1} parent=1 // pred_check_branch
      %2710 = sbr.rel (0) target = $region97
    $region96: #{tpu_custom_call.1} parent=1 // pred_region
      %s2712 = ssub.s32 256, 256
      %2713 = vsyncadd [#allocation3], %s2712
      %s2714 = sshll.u32 [#allocation2], 4
      %s2715 = int_to_ptr.vmem [resolvable:$true] %s2714
      %2720 = dma.vmem_to_hbm [thread:$0]  %s2715, 256, %s23, [#allocation3], 128, 128, 8
    $region97: #{tpu_custom_call.1} parent=1 // pred_fallthru
      _
    // Predicated region
    $region98: #{tpu_custom_call.1} parent=1 // pred_check
      _
    $region99: #{tpu_custom_call.1} parent=1 // pred_check_branch
      %2722 = sbr.rel (0) target = $region101
    $region100: #{tpu_custom_call.1} parent=1 // pred_region
      %2723 = dma.done [#allocation3], 256
    $region101: #{tpu_custom_call.1} parent=1 // pred_fallthru
      _
    %2724 = vsyncpa [#allocation3], 1

</llo_original>
